<compile_context>
chip_gen: v6e
topology: v6e:2x2x1
jax: 0.10.0
libtpu: 0.0.40
codegen_flags: <defaults>
</compile_context>

<pallas_src>
import math
import numpy as np
import jax
import jax.numpy as jnp
from jax.experimental import pallas as pl
from jax.experimental.pallas import tpu as pltpu


# ----------------------------------------------------------------------------
# Fused whole-network Pallas kernel
# ----------------------------------------------------------------------------

def _make_net_kernel(N, C, H, W):
    HW = H * W
    L = N * HW
    c0 = C // 3
    c1 = C - 2 * c0

    def kernel(x_ref, masks_ref, c1w_ref, c1b_ref, c0w_ref, c0b_ref,
               m05_ref, b05_ref, m1_ref, b1_ref,
               f2w_ref, f2b_ref, c2w_ref, c2b_ref, o_ref):
        masks = masks_ref[...]                                   # (9, L) f32

        def conv3x3(x, w, b):
            # x: (Cin, L), w: (Cout, 9*Cin) tap-major/cin-minor, b: (Cout, 1)
            taps = []
            t = 0
            for dh in (-1, 0, 1):
                for dw in (-1, 0, 1):
                    d = dh * W + dw
                    if d == 0:
                        taps.append(x)                           # center tap: mask == 1
                    else:
                        shifted = pltpu.roll(x, shift=(-d) % L, axis=1)
                        taps.append(shifted * masks[t:t + 1, :])
                    t += 1
            patch = jnp.concatenate(taps, axis=0)                # (9*Cin, L)
            return jnp.dot(w, patch, preferred_element_type=jnp.float32) + b

        def to_sample_rows(a, ch0, nch):
            # (nch channels of a (C, L) act.) -> (N, nch*HW): one row per sample
            rows = []
            for n in range(N):
                parts = [a[ch0 + c:ch0 + c + 1, n * HW:(n + 1) * HW]
                         for c in range(nch)]
                rows.append(parts[0] if nch == 1 else jnp.concatenate(parts, axis=1))
            return rows[0] if N == 1 else jnp.concatenate(rows, axis=0)

        def to_channel_rows(s, nch):
            # (N, nch*HW) -> (nch, N*HW): back to the channel-major lane layout
            rows = []
            for c in range(nch):
                parts = [s[n:n + 1, c * HW:(c + 1) * HW] for n in range(N)]
                rows.append(parts[0] if N == 1 else jnp.concatenate(parts, axis=1))
            return rows[0] if nch == 1 else jnp.concatenate(rows, axis=0)

        x = x_ref[...]                                           # (C, L)
        a1 = conv3x3(x, c1w_ref[...], c1b_ref[...])              # Net.conv1

        # ---- FRFT block ----
        # branch a=0: plain 3x3 conv on the first c0 channels
        y0 = conv3x3(a1[0:c0, :], c0w_ref[...], c0b_ref[...])    # (c0, L)

        # branch a=0.5: precomposed (FRFT2D -> 1x1 conv -> IFRFT2D) operator + |.|
        xf = to_sample_rows(a1, c0, c1)                          # (N, c1*HW)
        fv = jnp.dot(xf, m05_ref[...],
                     preferred_element_type=jnp.float32) + b05_ref[...]   # (N, 2*c1*HW)
        re = fv[:, :c1 * HW]
        im = fv[:, c1 * HW:]
        y05 = to_channel_rows(jnp.sqrt(re * re + im * im), c1)   # (c1, L)

        # branch a=1: precomposed (rfft2 -> 1x1 conv -> irfft2) operator
        x1 = to_sample_rows(a1, c0 + c1, c0)                     # (N, c0*HW)
        bv = jnp.dot(x1, m1_ref[...],
                     preferred_element_type=jnp.float32) + b1_ref[...]    # (N, c0*HW)
        y1 = to_channel_rows(bv, c0)                             # (c0, L)

        cat = jnp.concatenate([y0, y05, y1], axis=0)             # (C, L)
        a2 = conv3x3(cat, f2w_ref[...], f2b_ref[...])            # FRFT.conv2
        o_ref[...] = conv3x3(a2, c2w_ref[...], c2b_ref[...])     # Net.conv2

    return kernel


def net_forward(x, p):
    """Forward pass of Net, NCHW in / NCHW out, one fused pallas_call."""
    N, C, H, W = x.shape
    L = N * H * W
    x_cl = jnp.transpose(x, (1, 0, 2, 3)).reshape(C, L)          # (C, N*H*W) lane-dense
    kernel = _make_net_kernel(N, C, H, W)
    vmem = pl.BlockSpec(memory_space=pltpu.MemorySpace.VMEM)
    out = pl.pallas_call(
        kernel,
        out_shape=jax.ShapeDtypeStruct((C, L), jnp.float32),
        in_specs=[vmem] * 14,
        out_specs=vmem,
    )(x_cl, p["masks"],
      p["conv1_w"], p["conv1_b"],
      p["frft_conv0_w"], p["frft_conv0_b"],
      p["m05"], p["b05_img"],
      p["m1"], p["b1_img"],
      p["frft_conv2_w"], p["frft_conv2_b"],
      p["conv2_w"], p["conv2_b"])
    return out.reshape(C, N, H, W).transpose(1, 0, 2, 3)


# ----------------------------------------------------------------------------
# Host-side (one-time) parameter setup: DFRFT / DFT operator composition
# ----------------------------------------------------------------------------

def _cconvm(N, s):
    M = np.zeros((N, N))
    dum = np.array(s, dtype=np.float64)
    for i in range(N):
        M[:, i] = dum
        dum = np.roll(dum, 1)
    return M


def _dis_s(N, app_ord=2):
    # TODO(synk): eigendecomposition (torch.linalg.eig) has no Pallas equivalent;
    # deterministic parameter setup done once on host with numpy.
    app_ord = int(app_ord / 2)
    s = np.concatenate((np.array([0.0, 1.0]),
                        np.zeros(N - 1 - 2 * app_ord),
                        np.array([1.0])))
    S = _cconvm(N, s) + np.diag(np.fft.fft(s).real)
    p = N
    r = math.floor(N / 2)
    P = np.zeros((p, p))
    P[0, 0] = 1.0
    even = 1 - p % 2
    for i in range(1, r - even + 1):
        P[i, i] = 1 / np.sqrt(2)
        P[i, p - i] = 1 / np.sqrt(2)
    if even:
        P[r, r] = 1.0
    for i in range(r + 1, p):
        P[i, i] = -1 / np.sqrt(2)
        P[i, p - i] = 1 / np.sqrt(2)
    CS = P @ S @ P.T
    n2 = math.floor(N / 2 + 1)
    C2 = CS[:n2, :n2]
    S2 = CS[n2:N, n2:N]
    ec, vc = np.linalg.eig(C2)
    es, vs = np.linalg.eig(S2)
    ec, vc = ec.real, vc.real
    es, vs = es.real, vs.real
    qvc = np.vstack((vc, np.zeros((math.ceil(N / 2 - 1), n2))))
    SC2 = P @ qvc
    qvs = np.vstack((np.zeros((n2, math.ceil(N / 2 - 1))), vs))
    SS2 = P @ qvs
    SC2 = SC2[:, np.argsort(-ec)]
    SS2 = SS2[:, np.argsort(-es)]
    if N % 2 == 0:
        S2C2 = np.zeros((N, N + 1))
        SS2 = np.hstack([SS2, np.zeros((SS2.shape[0], 1))])
        S2C2[:, list(range(0, N + 1, 2))] = SC2
        S2C2[:, list(range(1, N, 2))] = SS2
        S2C2 = S2C2[:, np.arange(N + 1) != N - 1]
    else:
        S2C2 = np.zeros((N, N))
        S2C2[:, list(range(0, N + 1, 2))] = SC2
        S2C2[:, list(range(1, N, 2))] = SS2
    return S2C2


def dfrt_matrix(N, a):
    """sqrt(N) * Evec @ diag(exp(-i*pi/2*a*l)) @ Evec.T  (torch dfrtmtrx)."""
    Evec = _dis_s(N, 2)
    even = 1 - N % 2
    l = np.array(list(range(0, N - 1)) + [N - 1 + even], dtype=np.float64)
    phases = np.exp(-1j * np.pi / 2 * a * l)
    return np.sqrt(N) * (Evec @ np.diag(phases) @ Evec.T)


def _fftshift_perm(L):
    # S @ v == np.fft.fftshift(v)
    S = np.zeros((L, L))
    S[np.arange(L), np.fft.fftshift(np.arange(L))] = 1.0
    return S


def build_frft_branch_operator(H, W, order, w05, b05):
    """Compose fftshift->DFRFT2D->(1x1 conv on Re/Im)->IFRFT2D->(1/(HW) scale)
    into a single real matrix M (c1*HW, 2*c1*HW) and bias image (1, 2*c1*HW):
      [Re(V)|Im(V)]_flat = x_flat @ M + bias    (per sample, row-major flatten).
    """
    HW = H * W
    c1 = w05.shape[0] // 2
    Fh, Fw = dfrt_matrix(H, order), dfrt_matrix(W, order)
    Fih, Fiw = dfrt_matrix(H, -order), dfrt_matrix(W, -order)
    Sh, Sw = _fftshift_perm(H), _fftshift_perm(W)
    Fh_eff = Sh @ Fh @ Sh
    Fw_eff = Sw.T @ Fw @ Sw.T
    Fih_eff = Sh @ Fih @ Sh
    Fiw_eff = Sw.T @ Fiw @ Sw.T
    # Y = A X B (row-major flat): y = x @ kron(A.T, B)
    Kf = np.kron(Fh_eff.T, Fw_eff)                    # forward FRFT2D
    Ki = np.kron(Fih_eff.T, Fiw_eff) / float(H * W)   # inverse with 1/(HW) folded in
    Kf_re, Kf_im = Kf.real, Kf.imag
    Ki_re, Ki_im = Ki.real, Ki.imag
    M = np.zeros((c1 * HW, 2 * c1 * HW))
    bias = np.zeros((1, 2 * c1 * HW))
    for c in range(c1):                               # output channel
        for cp in range(c1):                          # input channel
            P = w05[c, cp] * Kf_re + w05[c, c1 + cp] * Kf_im            # -> Re1_c
            Q = w05[c1 + c, cp] * Kf_re + w05[c1 + c, c1 + cp] * Kf_im  # -> Im1_c
            M[cp * HW:(cp + 1) * HW, c * HW:(c + 1) * HW] = P @ Ki_re - Q @ Ki_im
            M[cp * HW:(cp + 1) * HW, (c1 + c) * HW:(c1 + c + 1) * HW] = (
                P @ Ki_im + Q @ Ki_re)
        bias[0, c * HW:(c + 1) * HW] = (
            b05[c] * Ki_re.sum(0) - b05[c1 + c] * Ki_im.sum(0))
        bias[0, (c1 + c) * HW:(c1 + c + 1) * HW] = (
            b05[c] * Ki_im.sum(0) + b05[c1 + c] * Ki_re.sum(0))
    return M.astype(np.float32), bias.astype(np.float32)


def build_rfft_branch_operator(H, W, w1, b1):
    """Compose rfft2 -> (1x1 conv on Re/Im) -> irfft2 ('backward' norm) into a
    single real matrix M (c0*HW, c0*HW) and bias image (1, c0*HW)."""
    HW = H * W
    Wf = W // 2 + 1
    c0 = w1.shape[0] // 2
    h = np.arange(H)
    cidx = np.arange(W)
    wf = np.arange(Wf)
    FhD = np.exp(-2j * np.pi * np.outer(h, h) / H)            # (H, H)
    GwD = np.exp(-2j * np.pi * np.outer(cidx, wf) / W)        # (W, Wf)
    Kr = np.kron(FhD.T, GwD)                                  # (HW, H*Wf) forward
    Mih = np.conj(FhD) / H                                    # ifft along H
    ang = 2 * np.pi * np.outer(wf, cidx) / W
    alpha = np.full(Wf, 2.0)
    beta = np.full(Wf, 2.0)
    alpha[0] = 1.0
    beta[0] = 0.0
    if W % 2 == 0:                                            # Nyquist bin
        alpha[-1] = 1.0
        beta[-1] = 0.0
    Aw = (alpha[:, None] / W) * np.cos(ang)                   # acts on Re(T)
    Bw = -(beta[:, None] / W) * np.sin(ang)                   # acts on Im(T)
    Kir = np.kron(Mih.real.T, Aw) + np.kron(Mih.imag.T, Bw)   # (H*Wf, HW)
    Kii = np.kron(Mih.real.T, Bw) - np.kron(Mih.imag.T, Aw)
    Kr_re, Kr_im = Kr.real, Kr.imag
    M = np.zeros((c0 * HW, c0 * HW))
    bias = np.zeros((1, c0 * HW))
    for c in range(c0):
        for cp in range(c0):
            P = w1[c, cp] * Kr_re + w1[c, c0 + cp] * Kr_im            # -> Re spectrum
            Q = w1[c0 + c, cp] * Kr_re + w1[c0 + c, c0 + cp] * Kr_im  # -> Im spectrum
            M[cp * HW:(cp + 1) * HW, c * HW:(c + 1) * HW] = P @ Kir + Q @ Kii
        bias[0, c * HW:(c + 1) * HW] = b1[c] * Kir.sum(0) + b1[c0 + c] * Kii.sum(0)
    return M.astype(np.float32), bias.astype(np.float32)


def make_conv3x3_masks(N, H, W):
    """(9, N*H*W) zero-padding masks for the roll-based im2col (tap order kh,kw)."""
    HW = H * W
    i = np.arange(HW) // W
    j = np.arange(HW) % W
    masks = np.zeros((9, HW), np.float32)
    t = 0
    for dh in (-1, 0, 1):
        for dw in (-1, 0, 1):
            valid = ((i + dh >= 0) & (i + dh < H) &
                     (j + dw >= 0) & (j + dw < W))
            masks[t] = valid.astype(np.float32)
            t += 1
    return np.tile(masks, (1, N))


# ----------------------------------------------------------------------------
# Deterministic parameter init (weights pre-laid-out for the fused kernel)
# ----------------------------------------------------------------------------

def init_params(key, N, C, H, W):
    c0 = C // 3
    c1 = C - 2 * c0
    ks = jax.random.split(key, 7)

    def conv_init(k, cout, cin, kh, kw):
        fan_in = cin * kh * kw
        bound = 1.0 / math.sqrt(fan_in)
        kw_, kb_ = jax.random.split(k)
        w = jax.random.uniform(kw_, (cout, cin, kh, kw), jnp.float32, -bound, bound)
        b = jax.random.uniform(kb_, (cout,), jnp.float32, -bound, bound)
        return w, b

    def prep3x3(w, b):
        cout, cin = w.shape[0], w.shape[1]
        # (Cout, Cin, 3, 3) -> (Cout, 3, 3, Cin) -> (Cout, 9*Cin): tap-major, cin-minor
        w2 = jnp.transpose(w, (0, 2, 3, 1)).reshape(cout, 9 * cin)
        return w2.astype(jnp.float32), b.reshape(cout, 1)

    p = {}
    w, b = conv_init(ks[0], C, C, 3, 3)
    p["conv1_w"], p["conv1_b"] = prep3x3(w, b)
    w, b = conv_init(ks[1], C, C, 3, 3)
    p["conv2_w"], p["conv2_b"] = prep3x3(w, b)
    w, b = conv_init(ks[2], c0, c0, 3, 3)
    p["frft_conv0_w"], p["frft_conv0_b"] = prep3x3(w, b)
    w05, b05 = conv_init(ks[3], 2 * c1, 2 * c1, 1, 1)
    w1, b1 = conv_init(ks[4], 2 * c0, 2 * c0, 1, 1)
    w, b = conv_init(ks[5], C, C, 3, 3)
    p["frft_conv2_w"], p["frft_conv2_b"] = prep3x3(w, b)

    # self.order = nn.Parameter(torch.randn(1)); forward-only port: frozen at init
    # and folded (with fftshifts, 1/(HW) scale and the 1x1 mixing convs) into the
    # precomposed spectral operators below.
    order = float(jax.random.normal(ks[6], ()))
    p["order"] = order

    m05, b05img = build_frft_branch_operator(
        H, W, order,
        np.asarray(w05, dtype=np.float64).reshape(2 * c1, 2 * c1),
        np.asarray(b05, dtype=np.float64))
    p["m05"] = jnp.asarray(m05)
    p["b05_img"] = jnp.asarray(b05img)

    m1, b1img = build_rfft_branch_operator(
        H, W,
        np.asarray(w1, dtype=np.float64).reshape(2 * c0, 2 * c0),
        np.asarray(b1, dtype=np.float64))
    p["m1"] = jnp.asarray(m1)
    p["b1_img"] = jnp.asarray(b1img)

    p["masks"] = jnp.asarray(make_conv3x3_masks(N, H, W))
    return p


if __name__ == "__main__":
    N, C, H, W = 2, 6, 16, 16   # C0 (Net channel count) = 6
    key = jax.random.PRNGKey(0)
    kx, kp = jax.random.split(key)
    x = jax.random.normal(kx, (N, C, H, W), jnp.float32)
    params = init_params(kp, N, C, H, W)

    fwd = jax.jit(net_forward)
    out = jax.block_until_ready(fwd(x, params))
    assert out.shape == (N, C, H, W)
    assert bool(jnp.all(jnp.isfinite(out)))
    print("KERNEL_OK")
</pallas_src>

<mosaic_0001>
module attributes {stable_mosaic.version = 11 : i64} {
  func.func @kernel(%arg0: memref<6x512xf32, #tpu.memory_space<vmem>>, %arg1: memref<9x512xf32, #tpu.memory_space<vmem>>, %arg2: memref<6x54xf32, #tpu.memory_space<vmem>>, %arg3: memref<6x1xf32, #tpu.memory_space<vmem>>, %arg4: memref<2x18xf32, #tpu.memory_space<vmem>>, %arg5: memref<2x1xf32, #tpu.memory_space<vmem>>, %arg6: memref<512x1024xf32, #tpu.memory_space<vmem>>, %arg7: memref<1x1024xf32, #tpu.memory_space<vmem>>, %arg8: memref<512x512xf32, #tpu.memory_space<vmem>>, %arg9: memref<1x512xf32, #tpu.memory_space<vmem>>, %arg10: memref<6x54xf32, #tpu.memory_space<vmem>>, %arg11: memref<6x1xf32, #tpu.memory_space<vmem>>, %arg12: memref<6x54xf32, #tpu.memory_space<vmem>>, %arg13: memref<6x1xf32, #tpu.memory_space<vmem>>, %arg14: memref<6x512xf32, #tpu.memory_space<vmem>>) attributes {dimension_semantics = [], scalar_prefetch = 0 : i64, scratch_operands = 0 : i64, tpu.core_type = #tpu.core_type<tc>} {
    %c0 = arith.constant 0 : index
    %c0_0 = arith.constant 0 : index
    %0 = vector.load %arg1[%c0, %c0_0] : memref<9x512xf32, #tpu.memory_space<vmem>>, vector<9x512xf32>
    %c0_1 = arith.constant 0 : index
    %c0_2 = arith.constant 0 : index
    %1 = vector.load %arg0[%c0_1, %c0_2] : memref<6x512xf32, #tpu.memory_space<vmem>>, vector<6x512xf32>
    %c0_3 = arith.constant 0 : index
    %c0_4 = arith.constant 0 : index
    %2 = vector.load %arg2[%c0_3, %c0_4] : memref<6x54xf32, #tpu.memory_space<vmem>>, vector<6x54xf32>
    %c0_5 = arith.constant 0 : index
    %c0_6 = arith.constant 0 : index
    %3 = vector.load %arg3[%c0_5, %c0_6] : memref<6x1xf32, #tpu.memory_space<vmem>>, vector<6x1xf32>
    %c17_i32 = arith.constant 17 : i32
    %4 = tpu.dynamic_rotate %1 by %c17_i32 dim 1 : vector<6x512xf32>, i32 -> vector<6x512xf32>
    %5 = vector.extract_strided_slice %0 {offsets = [0, 0], sizes = [1, 512], strides = [1, 1]} : vector<9x512xf32> to vector<1x512xf32>
    %6 = vector.broadcast %5 : vector<1x512xf32> to vector<6x512xf32>
    %7 = arith.mulf %4, %6 : vector<6x512xf32>
    %c16_i32 = arith.constant 16 : i32
    %8 = tpu.dynamic_rotate %1 by %c16_i32 dim 1 : vector<6x512xf32>, i32 -> vector<6x512xf32>
    %9 = vector.extract_strided_slice %0 {offsets = [1, 0], sizes = [1, 512], strides = [1, 1]} : vector<9x512xf32> to vector<1x512xf32>
    %10 = vector.broadcast %9 : vector<1x512xf32> to vector<6x512xf32>
    %11 = arith.mulf %8, %10 : vector<6x512xf32>
    %c15_i32 = arith.constant 15 : i32
    %12 = tpu.dynamic_rotate %1 by %c15_i32 dim 1 : vector<6x512xf32>, i32 -> vector<6x512xf32>
    %13 = vector.extract_strided_slice %0 {offsets = [2, 0], sizes = [1, 512], strides = [1, 1]} : vector<9x512xf32> to vector<1x512xf32>
    %14 = vector.broadcast %13 : vector<1x512xf32> to vector<6x512xf32>
    %15 = arith.mulf %12, %14 : vector<6x512xf32>
    %c1_i32 = arith.constant 1 : i32
    %16 = tpu.dynamic_rotate %1 by %c1_i32 dim 1 : vector<6x512xf32>, i32 -> vector<6x512xf32>
    %17 = vector.extract_strided_slice %0 {offsets = [3, 0], sizes = [1, 512], strides = [1, 1]} : vector<9x512xf32> to vector<1x512xf32>
    %18 = vector.broadcast %17 : vector<1x512xf32> to vector<6x512xf32>
    %19 = arith.mulf %16, %18 : vector<6x512xf32>
    %c511_i32 = arith.constant 511 : i32
    %20 = tpu.dynamic_rotate %1 by %c511_i32 dim 1 : vector<6x512xf32>, i32 -> vector<6x512xf32>
    %21 = vector.extract_strided_slice %0 {offsets = [5, 0], sizes = [1, 512], strides = [1, 1]} : vector<9x512xf32> to vector<1x512xf32>
    %22 = vector.broadcast %21 : vector<1x512xf32> to vector<6x512xf32>
    %23 = arith.mulf %20, %22 : vector<6x512xf32>
    %c497_i32 = arith.constant 497 : i32
    %24 = tpu.dynamic_rotate %1 by %c497_i32 dim 1 : vector<6x512xf32>, i32 -> vector<6x512xf32>
    %25 = vector.extract_strided_slice %0 {offsets = [6, 0], sizes = [1, 512], strides = [1, 1]} : vector<9x512xf32> to vector<1x512xf32>
    %26 = vector.broadcast %25 : vector<1x512xf32> to vector<6x512xf32>
    %27 = arith.mulf %24, %26 : vector<6x512xf32>
    %c496_i32 = arith.constant 496 : i32
    %28 = tpu.dynamic_rotate %1 by %c496_i32 dim 1 : vector<6x512xf32>, i32 -> vector<6x512xf32>
    %29 = vector.extract_strided_slice %0 {offsets = [7, 0], sizes = [1, 512], strides = [1, 1]} : vector<9x512xf32> to vector<1x512xf32>
    %30 = vector.broadcast %29 : vector<1x512xf32> to vector<6x512xf32>
    %31 = arith.mulf %28, %30 : vector<6x512xf32>
    %c495_i32 = arith.constant 495 : i32
    %32 = tpu.dynamic_rotate %1 by %c495_i32 dim 1 : vector<6x512xf32>, i32 -> vector<6x512xf32>
    %33 = vector.extract_strided_slice %0 {offsets = [8, 0], sizes = [1, 512], strides = [1, 1]} : vector<9x512xf32> to vector<1x512xf32>
    %34 = vector.broadcast %33 : vector<1x512xf32> to vector<6x512xf32>
    %35 = arith.mulf %32, %34 : vector<6x512xf32>
    %36 = tpu.concatenate %7, %11, %15, %19, %1, %23, %27, %31, %35 in 0 : vector<6x512xf32>, vector<6x512xf32>, vector<6x512xf32>, vector<6x512xf32>, vector<6x512xf32>, vector<6x512xf32>, vector<6x512xf32>, vector<6x512xf32>, vector<6x512xf32> -> vector<54x512xf32>
    %cst = arith.constant dense<0.000000e+00> : vector<6x512xf32>
    %37 = tpu.matmul %2, %36, %cst {dimension_numbers = #tpu.dot_dimension_numbers<[1], [0], [0], [1], [0, 0, 1, 1], [], []>} : vector<6x54xf32>, vector<54x512xf32>, vector<6x512xf32> -> vector<6x512xf32>
    %38 = vector.broadcast %3 : vector<6x1xf32> to vector<6x512xf32>
    %39 = arith.addf %37, %38 : vector<6x512xf32>
    %40 = vector.extract_strided_slice %39 {offsets = [0, 0], sizes = [2, 512], strides = [1, 1]} : vector<6x512xf32> to vector<2x512xf32>
    %c0_7 = arith.constant 0 : index
    %c0_8 = arith.constant 0 : index
    %41 = vector.load %arg4[%c0_7, %c0_8] : memref<2x18xf32, #tpu.memory_space<vmem>>, vector<2x18xf32>
    %c0_9 = arith.constant 0 : index
    %c0_10 = arith.constant 0 : index
    %42 = vector.load %arg5[%c0_9, %c0_10] : memref<2x1xf32, #tpu.memory_space<vmem>>, vector<2x1xf32>
    %c17_i32_11 = arith.constant 17 : i32
    %43 = tpu.dynamic_rotate %40 by %c17_i32_11 dim 1 : vector<2x512xf32>, i32 -> vector<2x512xf32>
    %44 = vector.extract_strided_slice %0 {offsets = [0, 0], sizes = [1, 512], strides = [1, 1]} : vector<9x512xf32> to vector<1x512xf32>
    %45 = vector.broadcast %44 : vector<1x512xf32> to vector<2x512xf32>
    %46 = arith.mulf %43, %45 : vector<2x512xf32>
    %c16_i32_12 = arith.constant 16 : i32
    %47 = tpu.dynamic_rotate %40 by %c16_i32_12 dim 1 : vector<2x512xf32>, i32 -> vector<2x512xf32>
    %48 = vector.extract_strided_slice %0 {offsets = [1, 0], sizes = [1, 512], strides = [1, 1]} : vector<9x512xf32> to vector<1x512xf32>
    %49 = vector.broadcast %48 : vector<1x512xf32> to vector<2x512xf32>
    %50 = arith.mulf %47, %49 : vector<2x512xf32>
    %c15_i32_13 = arith.constant 15 : i32
    %51 = tpu.dynamic_rotate %40 by %c15_i32_13 dim 1 : vector<2x512xf32>, i32 -> vector<2x512xf32>
    %52 = vector.extract_strided_slice %0 {offsets = [2, 0], sizes = [1, 512], strides = [1, 1]} : vector<9x512xf32> to vector<1x512xf32>
    %53 = vector.broadcast %52 : vector<1x512xf32> to vector<2x512xf32>
    %54 = arith.mulf %51, %53 : vector<2x512xf32>
    %c1_i32_14 = arith.constant 1 : i32
    %55 = tpu.dynamic_rotate %40 by %c1_i32_14 dim 1 : vector<2x512xf32>, i32 -> vector<2x512xf32>
    %56 = vector.extract_strided_slice %0 {offsets = [3, 0], sizes = [1, 512], strides = [1, 1]} : vector<9x512xf32> to vector<1x512xf32>
    %57 = vector.broadcast %56 : vector<1x512xf32> to vector<2x512xf32>
    %58 = arith.mulf %55, %57 : vector<2x512xf32>
    %c511_i32_15 = arith.constant 511 : i32
    %59 = tpu.dynamic_rotate %40 by %c511_i32_15 dim 1 : vector<2x512xf32>, i32 -> vector<2x512xf32>
    %60 = vector.extract_strided_slice %0 {offsets = [5, 0], sizes = [1, 512], strides = [1, 1]} : vector<9x512xf32> to vector<1x512xf32>
    %61 = vector.broadcast %60 : vector<1x512xf32> to vector<2x512xf32>
    %62 = arith.mulf %59, %61 : vector<2x512xf32>
    %c497_i32_16 = arith.constant 497 : i32
    %63 = tpu.dynamic_rotate %40 by %c497_i32_16 dim 1 : vector<2x512xf32>, i32 -> vector<2x512xf32>
    %64 = vector.extract_strided_slice %0 {offsets = [6, 0], sizes = [1, 512], strides = [1, 1]} : vector<9x512xf32> to vector<1x512xf32>
    %65 = vector.broadcast %64 : vector<1x512xf32> to vector<2x512xf32>
    %66 = arith.mulf %63, %65 : vector<2x512xf32>
    %c496_i32_17 = arith.constant 496 : i32
    %67 = tpu.dynamic_rotate %40 by %c496_i32_17 dim 1 : vector<2x512xf32>, i32 -> vector<2x512xf32>
    %68 = vector.extract_strided_slice %0 {offsets = [7, 0], sizes = [1, 512], strides = [1, 1]} : vector<9x512xf32> to vector<1x512xf32>
    %69 = vector.broadcast %68 : vector<1x512xf32> to vector<2x512xf32>
    %70 = arith.mulf %67, %69 : vector<2x512xf32>
    %c495_i32_18 = arith.constant 495 : i32
    %71 = tpu.dynamic_rotate %40 by %c495_i32_18 dim 1 : vector<2x512xf32>, i32 -> vector<2x512xf32>
    %72 = vector.extract_strided_slice %0 {offsets = [8, 0], sizes = [1, 512], strides = [1, 1]} : vector<9x512xf32> to vector<1x512xf32>
    %73 = vector.broadcast %72 : vector<1x512xf32> to vector<2x512xf32>
    %74 = arith.mulf %71, %73 : vector<2x512xf32>
    %75 = tpu.concatenate %46, %50, %54, %58, %40, %62, %66, %70, %74 in 0 : vector<2x512xf32>, vector<2x512xf32>, vector<2x512xf32>, vector<2x512xf32>, vector<2x512xf32>, vector<2x512xf32>, vector<2x512xf32>, vector<2x512xf32>, vector<2x512xf32> -> vector<18x512xf32>
    %cst_19 = arith.constant dense<0.000000e+00> : vector<2x512xf32>
    %76 = tpu.matmul %41, %75, %cst_19 {dimension_numbers = #tpu.dot_dimension_numbers<[1], [0], [0], [1], [0, 0, 1, 1], [], []>} : vector<2x18xf32>, vector<18x512xf32>, vector<2x512xf32> -> vector<2x512xf32>
    %77 = vector.broadcast %42 : vector<2x1xf32> to vector<2x512xf32>
    %78 = arith.addf %76, %77 : vector<2x512xf32>
    %79 = vector.extract_strided_slice %39 {offsets = [2, 0], sizes = [1, 256], strides = [1, 1]} : vector<6x512xf32> to vector<1x256xf32>
    %80 = vector.extract_strided_slice %39 {offsets = [3, 0], sizes = [1, 256], strides = [1, 1]} : vector<6x512xf32> to vector<1x256xf32>
    %81 = tpu.concatenate %79, %80 in 1 : vector<1x256xf32>, vector<1x256xf32> -> vector<1x512xf32>
    %82 = vector.extract_strided_slice %39 {offsets = [2, 256], sizes = [1, 256], strides = [1, 1]} : vector<6x512xf32> to vector<1x256xf32>
    %83 = vector.extract_strided_slice %39 {offsets = [3, 256], sizes = [1, 256], strides = [1, 1]} : vector<6x512xf32> to vector<1x256xf32>
    %84 = tpu.concatenate %82, %83 in 1 : vector<1x256xf32>, vector<1x256xf32> -> vector<1x512xf32>
    %85 = tpu.concatenate %81, %84 in 0 : vector<1x512xf32>, vector<1x512xf32> -> vector<2x512xf32>
    %c0_20 = arith.constant 0 : index
    %c0_21 = arith.constant 0 : index
    %86 = vector.load %arg6[%c0_20, %c0_21] : memref<512x1024xf32, #tpu.memory_space<vmem>>, vector<512x1024xf32>
    %cst_22 = arith.constant dense<0.000000e+00> : vector<2x1024xf32>
    %87 = tpu.matmul %85, %86, %cst_22 {dimension_numbers = #tpu.dot_dimension_numbers<[1], [0], [0], [1], [0, 0, 1, 1], [], []>} : vector<2x512xf32>, vector<512x1024xf32>, vector<2x1024xf32> -> vector<2x1024xf32>
    %c0_23 = arith.constant 0 : index
    %c0_24 = arith.constant 0 : index
    %88 = vector.load %arg7[%c0_23, %c0_24] : memref<1x1024xf32, #tpu.memory_space<vmem>>, vector<1x1024xf32>
    %89 = vector.broadcast %88 : vector<1x1024xf32> to vector<2x1024xf32>
    %90 = arith.addf %87, %89 : vector<2x1024xf32>
    %91 = vector.extract_strided_slice %90 {offsets = [0, 0], sizes = [2, 512], strides = [1, 1]} : vector<2x1024xf32> to vector<2x512xf32>
    %92 = vector.extract_strided_slice %90 {offsets = [0, 512], sizes = [2, 512], strides = [1, 1]} : vector<2x1024xf32> to vector<2x512xf32>
    %93 = arith.mulf %91, %91 : vector<2x512xf32>
    %94 = arith.mulf %92, %92 : vector<2x512xf32>
    %95 = arith.addf %93, %94 : vector<2x512xf32>
    %96 = math.sqrt %95 : vector<2x512xf32>
    %97 = vector.extract_strided_slice %96 {offsets = [0, 0], sizes = [1, 256], strides = [1, 1]} : vector<2x512xf32> to vector<1x256xf32>
    %98 = vector.extract_strided_slice %96 {offsets = [1, 0], sizes = [1, 256], strides = [1, 1]} : vector<2x512xf32> to vector<1x256xf32>
    %99 = tpu.concatenate %97, %98 in 1 : vector<1x256xf32>, vector<1x256xf32> -> vector<1x512xf32>
    %100 = vector.extract_strided_slice %96 {offsets = [0, 256], sizes = [1, 256], strides = [1, 1]} : vector<2x512xf32> to vector<1x256xf32>
    %101 = vector.extract_strided_slice %96 {offsets = [1, 256], sizes = [1, 256], strides = [1, 1]} : vector<2x512xf32> to vector<1x256xf32>
    %102 = tpu.concatenate %100, %101 in 1 : vector<1x256xf32>, vector<1x256xf32> -> vector<1x512xf32>
    %103 = tpu.concatenate %99, %102 in 0 : vector<1x512xf32>, vector<1x512xf32> -> vector<2x512xf32>
    %104 = vector.extract_strided_slice %39 {offsets = [4, 0], sizes = [1, 256], strides = [1, 1]} : vector<6x512xf32> to vector<1x256xf32>
    %105 = vector.extract_strided_slice %39 {offsets = [5, 0], sizes = [1, 256], strides = [1, 1]} : vector<6x512xf32> to vector<1x256xf32>
    %106 = tpu.concatenate %104, %105 in 1 : vector<1x256xf32>, vector<1x256xf32> -> vector<1x512xf32>
    %107 = vector.extract_strided_slice %39 {offsets = [4, 256], sizes = [1, 256], strides = [1, 1]} : vector<6x512xf32> to vector<1x256xf32>
    %108 = vector.extract_strided_slice %39 {offsets = [5, 256], sizes = [1, 256], strides = [1, 1]} : vector<6x512xf32> to vector<1x256xf32>
    %109 = tpu.concatenate %107, %108 in 1 : vector<1x256xf32>, vector<1x256xf32> -> vector<1x512xf32>
    %110 = tpu.concatenate %106, %109 in 0 : vector<1x512xf32>, vector<1x512xf32> -> vector<2x512xf32>
    %c0_25 = arith.constant 0 : index
    %c0_26 = arith.constant 0 : index
    %111 = vector.load %arg8[%c0_25, %c0_26] : memref<512x512xf32, #tpu.memory_space<vmem>>, vector<512x512xf32>
    %cst_27 = arith.constant dense<0.000000e+00> : vector<2x512xf32>
    %112 = tpu.matmul %110, %111, %cst_27 {dimension_numbers = #tpu.dot_dimension_numbers<[1], [0], [0], [1], [0, 0, 1, 1], [], []>} : vector<2x512xf32>, vector<512x512xf32>, vector<2x512xf32> -> vector<2x512xf32>
    %c0_28 = arith.constant 0 : index
    %c0_29 = arith.constant 0 : index
    %113 = vector.load %arg9[%c0_28, %c0_29] : memref<1x512xf32, #tpu.memory_space<vmem>>, vector<1x512xf32>
    %114 = vector.broadcast %113 : vector<1x512xf32> to vector<2x512xf32>
    %115 = arith.addf %112, %114 : vector<2x512xf32>
    %116 = vector.extract_strided_slice %115 {offsets = [0, 0], sizes = [1, 256], strides = [1, 1]} : vector<2x512xf32> to vector<1x256xf32>
    %117 = vector.extract_strided_slice %115 {offsets = [1, 0], sizes = [1, 256], strides = [1, 1]} : vector<2x512xf32> to vector<1x256xf32>
    %118 = tpu.concatenate %116, %117 in 1 : vector<1x256xf32>, vector<1x256xf32> -> vector<1x512xf32>
    %119 = vector.extract_strided_slice %115 {offsets = [0, 256], sizes = [1, 256], strides = [1, 1]} : vector<2x512xf32> to vector<1x256xf32>
    %120 = vector.extract_strided_slice %115 {offsets = [1, 256], sizes = [1, 256], strides = [1, 1]} : vector<2x512xf32> to vector<1x256xf32>
    %121 = tpu.concatenate %119, %120 in 1 : vector<1x256xf32>, vector<1x256xf32> -> vector<1x512xf32>
    %122 = tpu.concatenate %118, %121 in 0 : vector<1x512xf32>, vector<1x512xf32> -> vector<2x512xf32>
    %123 = tpu.concatenate %78, %103, %122 in 0 : vector<2x512xf32>, vector<2x512xf32>, vector<2x512xf32> -> vector<6x512xf32>
    %c0_30 = arith.constant 0 : index
    %c0_31 = arith.constant 0 : index
    %124 = vector.load %arg10[%c0_30, %c0_31] : memref<6x54xf32, #tpu.memory_space<vmem>>, vector<6x54xf32>
    %c0_32 = arith.constant 0 : index
    %c0_33 = arith.constant 0 : index
    %125 = vector.load %arg11[%c0_32, %c0_33] : memref<6x1xf32, #tpu.memory_space<vmem>>, vector<6x1xf32>
    %c17_i32_34 = arith.constant 17 : i32
    %126 = tpu.dynamic_rotate %123 by %c17_i32_34 dim 1 : vector<6x512xf32>, i32 -> vector<6x512xf32>
    %127 = vector.extract_strided_slice %0 {offsets = [0, 0], sizes = [1, 512], strides = [1, 1]} : vector<9x512xf32> to vector<1x512xf32>
    %128 = vector.broadcast %127 : vector<1x512xf32> to vector<6x512xf32>
    %129 = arith.mulf %126, %128 : vector<6x512xf32>
    %c16_i32_35 = arith.constant 16 : i32
    %130 = tpu.dynamic_rotate %123 by %c16_i32_35 dim 1 : vector<6x512xf32>, i32 -> vector<6x512xf32>
    %131 = vector.extract_strided_slice %0 {offsets = [1, 0], sizes = [1, 512], strides = [1, 1]} : vector<9x512xf32> to vector<1x512xf32>
    %132 = vector.broadcast %131 : vector<1x512xf32> to vector<6x512xf32>
    %133 = arith.mulf %130, %132 : vector<6x512xf32>
    %c15_i32_36 = arith.constant 15 : i32
    %134 = tpu.dynamic_rotate %123 by %c15_i32_36 dim 1 : vector<6x512xf32>, i32 -> vector<6x512xf32>
    %135 = vector.extract_strided_slice %0 {offsets = [2, 0], sizes = [1, 512], strides = [1, 1]} : vector<9x512xf32> to vector<1x512xf32>
    %136 = vector.broadcast %135 : vector<1x512xf32> to vector<6x512xf32>
    %137 = arith.mulf %134, %136 : vector<6x512xf32>
    %c1_i32_37 = arith.constant 1 : i32
    %138 = tpu.dynamic_rotate %123 by %c1_i32_37 dim 1 : vector<6x512xf32>, i32 -> vector<6x512xf32>
    %139 = vector.extract_strided_slice %0 {offsets = [3, 0], sizes = [1, 512], strides = [1, 1]} : vector<9x512xf32> to vector<1x512xf32>
    %140 = vector.broadcast %139 : vector<1x512xf32> to vector<6x512xf32>
    %141 = arith.mulf %138, %140 : vector<6x512xf32>
    %c511_i32_38 = arith.constant 511 : i32
    %142 = tpu.dynamic_rotate %123 by %c511_i32_38 dim 1 : vector<6x512xf32>, i32 -> vector<6x512xf32>
    %143 = vector.extract_strided_slice %0 {offsets = [5, 0], sizes = [1, 512], strides = [1, 1]} : vector<9x512xf32> to vector<1x512xf32>
    %144 = vector.broadcast %143 : vector<1x512xf32> to vector<6x512xf32>
    %145 = arith.mulf %142, %144 : vector<6x512xf32>
    %c497_i32_39 = arith.constant 497 : i32
    %146 = tpu.dynamic_rotate %123 by %c497_i32_39 dim 1 : vector<6x512xf32>, i32 -> vector<6x512xf32>
    %147 = vector.extract_strided_slice %0 {offsets = [6, 0], sizes = [1, 512], strides = [1, 1]} : vector<9x512xf32> to vector<1x512xf32>
    %148 = vector.broadcast %147 : vector<1x512xf32> to vector<6x512xf32>
    %149 = arith.mulf %146, %148 : vector<6x512xf32>
    %c496_i32_40 = arith.constant 496 : i32
    %150 = tpu.dynamic_rotate %123 by %c496_i32_40 dim 1 : vector<6x512xf32>, i32 -> vector<6x512xf32>
    %151 = vector.extract_strided_slice %0 {offsets = [7, 0], sizes = [1, 512], strides = [1, 1]} : vector<9x512xf32> to vector<1x512xf32>
    %152 = vector.broadcast %151 : vector<1x512xf32> to vector<6x512xf32>
    %153 = arith.mulf %150, %152 : vector<6x512xf32>
    %c495_i32_41 = arith.constant 495 : i32
    %154 = tpu.dynamic_rotate %123 by %c495_i32_41 dim 1 : vector<6x512xf32>, i32 -> vector<6x512xf32>
    %155 = vector.extract_strided_slice %0 {offsets = [8, 0], sizes = [1, 512], strides = [1, 1]} : vector<9x512xf32> to vector<1x512xf32>
    %156 = vector.broadcast %155 : vector<1x512xf32> to vector<6x512xf32>
    %157 = arith.mulf %154, %156 : vector<6x512xf32>
    %158 = tpu.concatenate %129, %133, %137, %141, %123, %145, %149, %153, %157 in 0 : vector<6x512xf32>, vector<6x512xf32>, vector<6x512xf32>, vector<6x512xf32>, vector<6x512xf32>, vector<6x512xf32>, vector<6x512xf32>, vector<6x512xf32>, vector<6x512xf32> -> vector<54x512xf32>
    %cst_42 = arith.constant dense<0.000000e+00> : vector<6x512xf32>
    %159 = tpu.matmul %124, %158, %cst_42 {dimension_numbers = #tpu.dot_dimension_numbers<[1], [0], [0], [1], [0, 0, 1, 1], [], []>} : vector<6x54xf32>, vector<54x512xf32>, vector<6x512xf32> -> vector<6x512xf32>
    %160 = vector.broadcast %125 : vector<6x1xf32> to vector<6x512xf32>
    %161 = arith.addf %159, %160 : vector<6x512xf32>
    %c0_43 = arith.constant 0 : index
    %c0_44 = arith.constant 0 : index
    %162 = vector.load %arg12[%c0_43, %c0_44] : memref<6x54xf32, #tpu.memory_space<vmem>>, vector<6x54xf32>
    %c0_45 = arith.constant 0 : index
    %c0_46 = arith.constant 0 : index
    %163 = vector.load %arg13[%c0_45, %c0_46] : memref<6x1xf32, #tpu.memory_space<vmem>>, vector<6x1xf32>
    %c17_i32_47 = arith.constant 17 : i32
    %164 = tpu.dynamic_rotate %161 by %c17_i32_47 dim 1 : vector<6x512xf32>, i32 -> vector<6x512xf32>
    %165 = vector.extract_strided_slice %0 {offsets = [0, 0], sizes = [1, 512], strides = [1, 1]} : vector<9x512xf32> to vector<1x512xf32>
    %166 = vector.broadcast %165 : vector<1x512xf32> to vector<6x512xf32>
    %167 = arith.mulf %164, %166 : vector<6x512xf32>
    %c16_i32_48 = arith.constant 16 : i32
    %168 = tpu.dynamic_rotate %161 by %c16_i32_48 dim 1 : vector<6x512xf32>, i32 -> vector<6x512xf32>
    %169 = vector.extract_strided_slice %0 {offsets = [1, 0], sizes = [1, 512], strides = [1, 1]} : vector<9x512xf32> to vector<1x512xf32>
    %170 = vector.broadcast %169 : vector<1x512xf32> to vector<6x512xf32>
    %171 = arith.mulf %168, %170 : vector<6x512xf32>
    %c15_i32_49 = arith.constant 15 : i32
    %172 = tpu.dynamic_rotate %161 by %c15_i32_49 dim 1 : vector<6x512xf32>, i32 -> vector<6x512xf32>
    %173 = vector.extract_strided_slice %0 {offsets = [2, 0], sizes = [1, 512], strides = [1, 1]} : vector<9x512xf32> to vector<1x512xf32>
    %174 = vector.broadcast %173 : vector<1x512xf32> to vector<6x512xf32>
    %175 = arith.mulf %172, %174 : vector<6x512xf32>
    %c1_i32_50 = arith.constant 1 : i32
    %176 = tpu.dynamic_rotate %161 by %c1_i32_50 dim 1 : vector<6x512xf32>, i32 -> vector<6x512xf32>
    %177 = vector.extract_strided_slice %0 {offsets = [3, 0], sizes = [1, 512], strides = [1, 1]} : vector<9x512xf32> to vector<1x512xf32>
    %178 = vector.broadcast %177 : vector<1x512xf32> to vector<6x512xf32>
    %179 = arith.mulf %176, %178 : vector<6x512xf32>
    %c511_i32_51 = arith.constant 511 : i32
    %180 = tpu.dynamic_rotate %161 by %c511_i32_51 dim 1 : vector<6x512xf32>, i32 -> vector<6x512xf32>
    %181 = vector.extract_strided_slice %0 {offsets = [5, 0], sizes = [1, 512], strides = [1, 1]} : vector<9x512xf32> to vector<1x512xf32>
    %182 = vector.broadcast %181 : vector<1x512xf32> to vector<6x512xf32>
    %183 = arith.mulf %180, %182 : vector<6x512xf32>
    %c497_i32_52 = arith.constant 497 : i32
    %184 = tpu.dynamic_rotate %161 by %c497_i32_52 dim 1 : vector<6x512xf32>, i32 -> vector<6x512xf32>
    %185 = vector.extract_strided_slice %0 {offsets = [6, 0], sizes = [1, 512], strides = [1, 1]} : vector<9x512xf32> to vector<1x512xf32>
    %186 = vector.broadcast %185 : vector<1x512xf32> to vector<6x512xf32>
    %187 = arith.mulf %184, %186 : vector<6x512xf32>
    %c496_i32_53 = arith.constant 496 : i32
    %188 = tpu.dynamic_rotate %161 by %c496_i32_53 dim 1 : vector<6x512xf32>, i32 -> vector<6x512xf32>
    %189 = vector.extract_strided_slice %0 {offsets = [7, 0], sizes = [1, 512], strides = [1, 1]} : vector<9x512xf32> to vector<1x512xf32>
    %190 = vector.broadcast %189 : vector<1x512xf32> to vector<6x512xf32>
    %191 = arith.mulf %188, %190 : vector<6x512xf32>
    %c495_i32_54 = arith.constant 495 : i32
    %192 = tpu.dynamic_rotate %161 by %c495_i32_54 dim 1 : vector<6x512xf32>, i32 -> vector<6x512xf32>
    %193 = vector.extract_strided_slice %0 {offsets = [8, 0], sizes = [1, 512], strides = [1, 1]} : vector<9x512xf32> to vector<1x512xf32>
    %194 = vector.broadcast %193 : vector<1x512xf32> to vector<6x512xf32>
    %195 = arith.mulf %192, %194 : vector<6x512xf32>
    %196 = tpu.concatenate %167, %171, %175, %179, %161, %183, %187, %191, %195 in 0 : vector<6x512xf32>, vector<6x512xf32>, vector<6x512xf32>, vector<6x512xf32>, vector<6x512xf32>, vector<6x512xf32>, vector<6x512xf32>, vector<6x512xf32>, vector<6x512xf32> -> vector<54x512xf32>
    %cst_55 = arith.constant dense<0.000000e+00> : vector<6x512xf32>
    %197 = tpu.matmul %162, %196, %cst_55 {dimension_numbers = #tpu.dot_dimension_numbers<[1], [0], [0], [1], [0, 0, 1, 1], [], []>} : vector<6x54xf32>, vector<54x512xf32>, vector<6x512xf32> -> vector<6x512xf32>
    %198 = vector.broadcast %163 : vector<6x1xf32> to vector<6x512xf32>
    %199 = arith.addf %197, %198 : vector<6x512xf32>
    %c0_56 = arith.constant 0 : index
    %c0_57 = arith.constant 0 : index
    %200 = vector.load %arg14[%c0_56, %c0_57] : memref<6x512xf32, #tpu.memory_space<vmem>>, vector<6x512xf32>
    tpu.vector_store %arg14[%c0_56, %c0_57], %199 {strides = array<i32>} : memref<6x512xf32, #tpu.memory_space<vmem>>, vector<6x512xf32>,
    return
  }
}

</mosaic_0001>

<llo_original>
// kernel: net_forward.1
$region0: #{net_forward.1}
  #allocation0 [shape = 'u32[]', space=smem, size = 0x4, offset = 0x4, fixed_abs, tag = 'smem constant byte address 0x4 - core index']
  #allocation1 [shape = 'u32[144,128]{1,0:T(1,128)}', space=vmem, size = 0x12000, scoped, tag = 'internal scratch']
  %s0 = inlined_call_operand.vmem [shape: f32[6,512], index: 0, kind: input, shape index: {}]
  %s1 = inlined_call_operand.hbm [shape: f32[9,512], index: 1, kind: input, shape index: {}]
  %s2 = inlined_call_operand.hbm [shape: f32[6,54], index: 2, kind: input, shape index: {}]
  %s3 = inlined_call_operand.vmem [shape: f32[6,1], index: 3, kind: input, shape index: {}]
  %s4 = inlined_call_operand.hbm [shape: f32[2,18], index: 4, kind: input, shape index: {}]
  %s5 = inlined_call_operand.vmem [shape: f32[2,1], index: 5, kind: input, shape index: {}]
  %s6 = inlined_call_operand.hbm [shape: f32[512,1024], index: 6, kind: input, shape index: {}]
  %s7 = inlined_call_operand.hbm [shape: f32[1,1024], index: 7, kind: input, shape index: {}]
  %s8 = inlined_call_operand.hbm [shape: f32[512,512], index: 8, kind: input, shape index: {}]
  %s9 = inlined_call_operand.hbm [shape: f32[1,512], index: 9, kind: input, shape index: {}]
  %s10 = inlined_call_operand.hbm [shape: f32[6,54], index: 10, kind: input, shape index: {}]
  %s11 = inlined_call_operand.vmem [shape: f32[6,1], index: 11, kind: input, shape index: {}]
  %s12 = inlined_call_operand.hbm [shape: f32[6,54], index: 12, kind: input, shape index: {}]
  %s13 = inlined_call_operand.vmem [shape: f32[6,1], index: 13, kind: input, shape index: {}]
  %s14 = inlined_call_operand.vmem [shape: f32[6,512], index: 14, kind: output, shape index: {}]
  %s15 = sld [smem:[#allocation0]]
  $region102: #{net_forward.1} parent=0
    _
  %s17 = ssub.s32 1, %s15
  %s18 = scalar_select 0, %s17, %s15
  $region1: #{net_forward.1} parent=0
    #allocation2 [shape = 'u8[32768]{0}', space=vmem, size = 0x8000, scoped, tag = 'input window, operand 1, single buffered']
    #allocation3 [shape = 's32[1]{0}', space=sflag, size = 0x4, scoped, tag = 'scoped memory for net_forward.1']
    #allocation4 [shape = 'u8[4096]{0}', space=vmem, size = 0x1000, scoped, tag = 'input window, operand 2, single buffered']
    #allocation5 [shape = 's32[1]{0}', space=sflag, size = 0x4, scoped, tag = 'scoped memory for net_forward.1']
    #allocation6 [shape = 'u8[1024]{0}', space=vmem, size = 0x400, scoped, tag = 'input window, operand 4, single buffered']
    #allocation7 [shape = 'u8[2097152]{0}', space=vmem, size = 0x200000, scoped, tag = 'input window, operand 6, single buffered']
    #allocation8 [shape = 's32[1]{0}', space=sflag, size = 0x4, scoped, tag = 'scoped memory for net_forward.1']
    #allocation9 [shape = 'u8[4096]{0}', space=vmem, size = 0x1000, scoped, tag = 'input window, operand 7, single buffered']
    #allocation10 [shape = 'u8[1048576]{0}', space=vmem, size = 0x100000, scoped, tag = 'input window, operand 8, single buffered']
    #allocation11 [shape = 's32[1]{0}', space=sflag, size = 0x4, scoped, tag = 'scoped memory for net_forward.1']
    #allocation12 [shape = 'u8[2048]{0}', space=vmem, size = 0x800, scoped, tag = 'input window, operand 9, single buffered']
    #allocation13 [shape = 'u8[4096]{0}', space=vmem, size = 0x1000, scoped, tag = 'input window, operand 10, single buffered']
    #allocation14 [shape = 's32[1]{0}', space=sflag, size = 0x4, scoped, tag = 'scoped memory for net_forward.1']
    #allocation15 [shape = 'u8[4096]{0}', space=vmem, size = 0x1000, scoped, tag = 'input window, operand 12, single buffered']
    %19 = vsyncpa [#allocation3], 0
    %20 = vsyncpa [#allocation5], 0
    %21 = vsyncpa [#allocation8], 0
    %22 = vsyncpa [#allocation11], 0
    %23 = vsyncpa [#allocation14], 0
    // Predicated region
    $region2: #{net_forward.1} parent=1 // pred_check
      _
    $region3: #{net_forward.1} parent=1 // pred_check_branch
      %25 = sbr.rel (0) target = $region5
    $region4: #{net_forward.1} parent=1 // pred_region
      _
    $region5: #{net_forward.1} parent=1 // pred_fallthru
      _
    // Predicated region
    $region6: #{net_forward.1} parent=1 // pred_check
      _
    $region7: #{net_forward.1} parent=1 // pred_check_branch
      %27 = sbr.rel (0) target = $region9
    $region8: #{net_forward.1} parent=1 // pred_region
      %s29 = ssub.s32 1024, 1024
      %30 = vsyncadd [#allocation3], %s29
      %s31 = sshll.u32 [#allocation2], 4
      %s32 = int_to_ptr.vmem [resolvable:$true] %s31
      %37 = dma.hbm_to_vmem [thread:$0]  %s1, 1024, %s32, [#allocation3], 512, 512, 32
    $region9: #{net_forward.1} parent=1 // pred_fallthru
      _
    // Predicated region
    $region10: #{net_forward.1} parent=1 // pred_check
      _
    $region11: #{net_forward.1} parent=1 // pred_check_branch
      %39 = sbr.rel (0) target = $region13
    $region12: #{net_forward.1} parent=1 // pred_region
      %s41 = ssub.s32 128, 128
      %42 = vsyncadd [#allocation5], %s41
      %s44 = sshll.u32 [#allocation4], 4
      %s45 = int_to_ptr.vmem [resolvable:$true] %s44
      %47 = dma.hbm_to_vmem [thread:$0]  %s2, 128, %s45, [#allocation5]
    $region13: #{net_forward.1} parent=1 // pred_fallthru
      _
    // Predicated region
    $region14: #{net_forward.1} parent=1 // pred_check
      _
    $region15: #{net_forward.1} parent=1 // pred_check_branch
      %49 = sbr.rel (0) target = $region17
    $region16: #{net_forward.1} parent=1 // pred_region
      _
    $region17: #{net_forward.1} parent=1 // pred_fallthru
      _
    // Predicated region
    $region18: #{net_forward.1} parent=1 // pred_check
      _
    $region19: #{net_forward.1} parent=1 // pred_check_branch
      %51 = sbr.rel (0) target = $region21
    $region20: #{net_forward.1} parent=1 // pred_region
      %s53 = ssub.s32 32, 32
      %54 = vsyncadd [#allocation5], %s53
      %s56 = sshll.u32 [#allocation6], 4
      %s57 = int_to_ptr.vmem [resolvable:$true] %s56
      %59 = dma.hbm_to_vmem [thread:$0]  %s4, 32, %s57, [#allocation5]
    $region21: #{net_forward.1} parent=1 // pred_fallthru
      _
    // Predicated region
    $region22: #{net_forward.1} parent=1 // pred_check
      _
    $region23: #{net_forward.1} parent=1 // pred_check_branch
      %61 = sbr.rel (0) target = $region25
    $region24: #{net_forward.1} parent=1 // pred_region
      _
    $region25: #{net_forward.1} parent=1 // pred_fallthru
      _
    // Predicated region
    $region26: #{net_forward.1} parent=1 // pred_check
      _
    $region27: #{net_forward.1} parent=1 // pred_check_branch
      %63 = sbr.rel (0) target = $region29
    $region28: #{net_forward.1} parent=1 // pred_region
      %s65 = ssub.s32 65536, 65536
      %66 = vsyncadd [#allocation8], %s65
      %s67 = sshll.u32 [#allocation7], 4
      %s68 = int_to_ptr.vmem [resolvable:$true] %s67
      %73 = dma.hbm_to_vmem [thread:$0]  %s6, 65536, %s68, [#allocation8], 1024, 1024, 64
    $region29: #{net_forward.1} parent=1 // pred_fallthru
      _
    // Predicated region
    $region30: #{net_forward.1} parent=1 // pred_check
      _
    $region31: #{net_forward.1} parent=1 // pred_check_branch
      %75 = sbr.rel (0) target = $region33
    $region32: #{net_forward.1} parent=1 // pred_region
      %s77 = ssub.s32 128, 128
      %78 = vsyncadd [#allocation8], %s77
      %s80 = sshll.u32 [#allocation9], 4
      %s81 = int_to_ptr.vmem [resolvable:$true] %s80
      %83 = dma.hbm_to_vmem [thread:$0]  %s7, 128, %s81, [#allocation8]
    $region33: #{net_forward.1} parent=1 // pred_fallthru
      _
    // Predicated region
    $region34: #{net_forward.1} parent=1 // pred_check
      _
    $region35: #{net_forward.1} parent=1 // pred_check_branch
      %85 = sbr.rel (0) target = $region37
    $region36: #{net_forward.1} parent=1 // pred_region
      %s87 = ssub.s32 32768, 32768
      %88 = vsyncadd [#allocation11], %s87
      %s89 = sshll.u32 [#allocation10], 4
      %s90 = int_to_ptr.vmem [resolvable:$true] %s89
      %95 = dma.hbm_to_vmem [thread:$0]  %s8, 32768, %s90, [#allocation11], 512, 512, 32
    $region37: #{net_forward.1} parent=1 // pred_fallthru
      _
    // Predicated region
    $region38: #{net_forward.1} parent=1 // pred_check
      _
    $region39: #{net_forward.1} parent=1 // pred_check_branch
      %97 = sbr.rel (0) target = $region41
    $region40: #{net_forward.1} parent=1 // pred_region
      %s99 = ssub.s32 64, 64
      %100 = vsyncadd [#allocation11], %s99
      %s102 = sshll.u32 [#allocation12], 4
      %s103 = int_to_ptr.vmem [resolvable:$true] %s102
      %105 = dma.hbm_to_vmem [thread:$0]  %s9, 64, %s103, [#allocation11]
    $region41: #{net_forward.1} parent=1 // pred_fallthru
      _
    // Predicated region
    $region42: #{net_forward.1} parent=1 // pred_check
      _
    $region43: #{net_forward.1} parent=1 // pred_check_branch
      %107 = sbr.rel (0) target = $region45
    $region44: #{net_forward.1} parent=1 // pred_region
      %s109 = ssub.s32 128, 128
      %110 = vsyncadd [#allocation14], %s109
      %s112 = sshll.u32 [#allocation13], 4
      %s113 = int_to_ptr.vmem [resolvable:$true] %s112
      %115 = dma.hbm_to_vmem [thread:$0]  %s10, 128, %s113, [#allocation14]
    $region45: #{net_forward.1} parent=1 // pred_fallthru
      _
    // Predicated region
    $region46: #{net_forward.1} parent=1 // pred_check
      _
    $region47: #{net_forward.1} parent=1 // pred_check_branch
      %117 = sbr.rel (0) target = $region49
    $region48: #{net_forward.1} parent=1 // pred_region
      _
    $region49: #{net_forward.1} parent=1 // pred_fallthru
      _
    // Predicated region
    $region50: #{net_forward.1} parent=1 // pred_check
      _
    $region51: #{net_forward.1} parent=1 // pred_check_branch
      %119 = sbr.rel (0) target = $region53
    $region52: #{net_forward.1} parent=1 // pred_region
      %s121 = ssub.s32 128, 128
      %122 = vsyncadd [#allocation14], %s121
      %s124 = sshll.u32 [#allocation15], 4
      %s125 = int_to_ptr.vmem [resolvable:$true] %s124
      %127 = dma.hbm_to_vmem [thread:$0]  %s12, 128, %s125, [#allocation14]
    $region53: #{net_forward.1} parent=1 // pred_fallthru
      _
    // Predicated region
    $region54: #{net_forward.1} parent=1 // pred_check
      _
    $region55: #{net_forward.1} parent=1 // pred_check_branch
      %129 = sbr.rel (0) target = $region57
    $region56: #{net_forward.1} parent=1 // pred_region
      _
    $region57: #{net_forward.1} parent=1 // pred_fallthru
      _
    // Predicated region
    $region58: #{net_forward.1} parent=1 // pred_check
      _
    $region59: #{net_forward.1} parent=1 // pred_check_branch
      %131 = sbr.rel (0) target = $region61
    $region60: #{net_forward.1} parent=1 // pred_region
      %132 = dma.done [#allocation3], 1024
    $region61: #{net_forward.1} parent=1 // pred_fallthru
      _
    // Predicated region
    $region62: #{net_forward.1} parent=1 // pred_check
      _
    $region63: #{net_forward.1} parent=1 // pred_check_branch
      %134 = sbr.rel (0) target = $region65
    $region64: #{net_forward.1} parent=1 // pred_region
      %135 = dma.done [#allocation5], 128
    $region65: #{net_forward.1} parent=1 // pred_fallthru
      _
    // Predicated region
    $region66: #{net_forward.1} parent=1 // pred_check
      _
    $region67: #{net_forward.1} parent=1 // pred_check_branch
      %137 = sbr.rel (0) target = $region69
    $region68: #{net_forward.1} parent=1 // pred_region
      %138 = dma.done [#allocation5], 32
    $region69: #{net_forward.1} parent=1 // pred_fallthru
      _
    // Predicated region
    $region70: #{net_forward.1} parent=1 // pred_check
      _
    $region71: #{net_forward.1} parent=1 // pred_check_branch
      %140 = sbr.rel (0) target = $region73
    $region72: #{net_forward.1} parent=1 // pred_region
      %141 = dma.done [#allocation8], 65536
    $region73: #{net_forward.1} parent=1 // pred_fallthru
      _
    // Predicated region
    $region74: #{net_forward.1} parent=1 // pred_check
      _
    $region75: #{net_forward.1} parent=1 // pred_check_branch
      %143 = sbr.rel (0) target = $region77
    $region76: #{net_forward.1} parent=1 // pred_region
      %144 = dma.done [#allocation8], 128
    $region77: #{net_forward.1} parent=1 // pred_fallthru
      _
    // Predicated region
    $region78: #{net_forward.1} parent=1 // pred_check
      _
    $region79: #{net_forward.1} parent=1 // pred_check_branch
      %146 = sbr.rel (0) target = $region81
    $region80: #{net_forward.1} parent=1 // pred_region
      %147 = dma.done [#allocation11], 32768
    $region81: #{net_forward.1} parent=1 // pred_fallthru
      _
    // Predicated region
    $region82: #{net_forward.1} parent=1 // pred_check
      _
    $region83: #{net_forward.1} parent=1 // pred_check_branch
      %149 = sbr.rel (0) target = $region85
    $region84: #{net_forward.1} parent=1 // pred_region
      %150 = dma.done [#allocation11], 64
    $region85: #{net_forward.1} parent=1 // pred_fallthru
      _
    // Predicated region
    $region86: #{net_forward.1} parent=1 // pred_check
      _
    $region87: #{net_forward.1} parent=1 // pred_check_branch
      %152 = sbr.rel (0) target = $region89
    $region88: #{net_forward.1} parent=1 // pred_region
      %153 = dma.done [#allocation14], 128
    $region89: #{net_forward.1} parent=1 // pred_fallthru
      _
    // Predicated region
    $region90: #{net_forward.1} parent=1 // pred_check
      _
    $region91: #{net_forward.1} parent=1 // pred_check_branch
      %155 = sbr.rel (0) target = $region93
    $region92: #{net_forward.1} parent=1 // pred_region
      %156 = dma.done [#allocation14], 128
    $region93: #{net_forward.1} parent=1 // pred_fallthru
      _
    %v157 = vld [vmem:[#allocation2] sm:$0xff]
    %v158 = vld [vmem:[#allocation2 + $0x8] sm:$0xff]
    %v159 = vld [vmem:[#allocation2 + $0x10] sm:$0xff]
    %v160 = vld [vmem:[#allocation2 + $0x18] sm:$0xff]
    %v161 = vld [vmem:[#allocation2 + $0x20] sm:$0x1]
    %v162 = vld [vmem:[#allocation2 + $0x28] sm:$0x1]
    %v163 = vld [vmem:[#allocation2 + $0x30] sm:$0x1]
    %v164 = vld [vmem:[#allocation2 + $0x38] sm:$0x1]
    %v165 = vld [vmem:[%s0] sm:$0x3f]
    %v166 = vld [vmem:[%s0 + $0x8] sm:$0x3f]
    %v167 = vld [vmem:[%s0 + $0x10] sm:$0x3f]
    %v168 = vld [vmem:[%s0 + $0x18] sm:$0x3f]
    %v169 = vld [vmem:[#allocation4] sm:$0x3f]
    %v170 = vld [vmem:[%s3] sm:$0x3f]
    %171 = vrot.lane.b32.xlu0 %v165, 17
    %v172 = vpop.permute.xlu0 %171
    %173 = vrot.lane.b32.xlu0 %v166, 17
    %v174 = vpop.permute.xlu0 %173
    %175 = vrot.lane.b32.xlu0 %v167, 17
    %v176 = vpop.permute.xlu0 %175
    %177 = vrot.lane.b32.xlu0 %v168, 17
    %v178 = vpop.permute.xlu0 %177
    %v179 = vlaneseq
    %v180 = vand.u32 %v179, 127
    %vm181 = vcmp.lt.s32.totalorder %v180, 17
    %v182 = vsel %vm181, %v176, %v178
    %v183 = vsel %vm181, %v174, %v176
    %v184 = vsel %vm181, %v172, %v174
    %v185 = vsel %vm181, %v178, %v172
    %v186 = vlaneseq
    %v187 = vshrl.u32 %v186, 7
    %v188 = vsub.s32 0, %v187
    %v189 = vrot.slane %v157, %v188
    %v190 = vlaneseq
    %v191 = vshrl.u32 %v190, 7
    %v192 = vsub.s32 0, %v191
    %v193 = vrot.slane %v158, %v192
    %v194 = vlaneseq
    %v195 = vshrl.u32 %v194, 7
    %v196 = vsub.s32 0, %v195
    %v197 = vrot.slane %v159, %v196
    %v198 = vlaneseq
    %v199 = vshrl.u32 %v198, 7
    %v200 = vsub.s32 0, %v199
    %v201 = vrot.slane %v160, %v200
    %v202 = vmul.f32 %v185, %v189
    %v203 = vmul.f32 %v184, %v193
    %v204 = vmul.f32 %v183, %v197
    %v205 = vmul.f32 %v182, %v201
    %206 = vrot.lane.b32.xlu0 %v165, 16
    %v207 = vpop.permute.xlu0 %206
    %208 = vrot.lane.b32.xlu0 %v166, 16
    %v209 = vpop.permute.xlu0 %208
    %210 = vrot.lane.b32.xlu0 %v167, 16
    %v211 = vpop.permute.xlu0 %210
    %212 = vrot.lane.b32.xlu0 %v168, 16
    %v213 = vpop.permute.xlu0 %212
    %vm214 = vcmp.lt.s32.totalorder %v180, 16
    %v215 = vsel %vm214, %v211, %v213
    %v216 = vsel %vm214, %v209, %v211
    %v217 = vsel %vm214, %v207, %v209
    %v218 = vsel %vm214, %v213, %v207
    %v219 = vlaneseq
    %v220 = vshrl.u32 %v219, 7
    %v221 = vsub.s32 1, %v220
    %v222 = vrot.slane %v157, %v221
    %v223 = vlaneseq
    %v224 = vshrl.u32 %v223, 7
    %v225 = vsub.s32 1, %v224
    %v226 = vrot.slane %v158, %v225
    %v227 = vlaneseq
    %v228 = vshrl.u32 %v227, 7
    %v229 = vsub.s32 1, %v228
    %v230 = vrot.slane %v159, %v229
    %v231 = vlaneseq
    %v232 = vshrl.u32 %v231, 7
    %v233 = vsub.s32 1, %v232
    %v234 = vrot.slane %v160, %v233
    %v235 = vmul.f32 %v218, %v222
    %v236 = vmul.f32 %v217, %v226
    %v237 = vmul.f32 %v216, %v230
    %v238 = vmul.f32 %v215, %v234
    %239 = vrot.lane.b32.xlu0 %v165, 15
    %v240 = vpop.permute.xlu0 %239
    %241 = vrot.lane.b32.xlu0 %v166, 15
    %v242 = vpop.permute.xlu0 %241
    %243 = vrot.lane.b32.xlu0 %v167, 15
    %v244 = vpop.permute.xlu0 %243
    %245 = vrot.lane.b32.xlu0 %v168, 15
    %v246 = vpop.permute.xlu0 %245
    %vm247 = vcmp.lt.s32.totalorder %v180, 15
    %v248 = vsel %vm247, %v244, %v246
    %v249 = vsel %vm247, %v242, %v244
    %v250 = vsel %vm247, %v240, %v242
    %v251 = vsel %vm247, %v246, %v240
    %v252 = vlaneseq
    %v253 = vshrl.u32 %v252, 7
    %v254 = vsub.s32 2, %v253
    %v255 = vrot.slane %v157, %v254
    %v256 = vlaneseq
    %v257 = vshrl.u32 %v256, 7
    %v258 = vsub.s32 2, %v257
    %v259 = vrot.slane %v158, %v258
    %v260 = vlaneseq
    %v261 = vshrl.u32 %v260, 7
    %v262 = vsub.s32 2, %v261
    %v263 = vrot.slane %v159, %v262
    %v264 = vlaneseq
    %v265 = vshrl.u32 %v264, 7
    %v266 = vsub.s32 2, %v265
    %v267 = vrot.slane %v160, %v266
    %v268 = vmul.f32 %v251, %v255
    %v269 = vmul.f32 %v250, %v259
    %v270 = vmul.f32 %v249, %v263
    %v271 = vmul.f32 %v248, %v267
    %272 = vrot.lane.b32.xlu0 %v165, 1
    %v273 = vpop.permute.xlu0 %272
    %274 = vrot.lane.b32.xlu0 %v166, 1
    %v275 = vpop.permute.xlu0 %274
    %276 = vrot.lane.b32.xlu0 %v167, 1
    %v277 = vpop.permute.xlu0 %276
    %278 = vrot.lane.b32.xlu0 %v168, 1
    %v279 = vpop.permute.xlu0 %278
    %vm280 = vcmp.lt.s32.totalorder %v180, 1
    %v281 = vsel %vm280, %v277, %v279
    %v282 = vsel %vm280, %v275, %v277
    %v283 = vsel %vm280, %v273, %v275
    %v284 = vsel %vm280, %v279, %v273
    %v285 = vlaneseq
    %v286 = vshrl.u32 %v285, 7
    %v287 = vsub.s32 3, %v286
    %v288 = vrot.slane %v157, %v287
    %v289 = vlaneseq
    %v290 = vshrl.u32 %v289, 7
    %v291 = vsub.s32 3, %v290
    %v292 = vrot.slane %v158, %v291
    %v293 = vlaneseq
    %v294 = vshrl.u32 %v293, 7
    %v295 = vsub.s32 3, %v294
    %v296 = vrot.slane %v159, %v295
    %v297 = vlaneseq
    %v298 = vshrl.u32 %v297, 7
    %v299 = vsub.s32 3, %v298
    %v300 = vrot.slane %v160, %v299
    %v301 = vmul.f32 %v284, %v288
    %v302 = vmul.f32 %v283, %v292
    %v303 = vmul.f32 %v282, %v296
    %v304 = vmul.f32 %v281, %v300
    %305 = vrot.lane.b32.xlu0 %v165, 127
    %v306 = vpop.permute.xlu0 %305
    %307 = vrot.lane.b32.xlu0 %v166, 127
    %v308 = vpop.permute.xlu0 %307
    %309 = vrot.lane.b32.xlu0 %v167, 127
    %v310 = vpop.permute.xlu0 %309
    %311 = vrot.lane.b32.xlu0 %v168, 127
    %v312 = vpop.permute.xlu0 %311
    %vm313 = vcmp.lt.s32.totalorder %v180, 127
    %v314 = vsel %vm313, %v310, %v312
    %v315 = vsel %vm313, %v308, %v310
    %v316 = vsel %vm313, %v306, %v308
    %v317 = vsel %vm313, %v312, %v306
    %v318 = vlaneseq
    %v319 = vshrl.u32 %v318, 7
    %v320 = vsub.s32 5, %v319
    %v321 = vrot.slane %v157, %v320
    %v322 = vlaneseq
    %v323 = vshrl.u32 %v322, 7
    %v324 = vsub.s32 5, %v323
    %v325 = vrot.slane %v158, %v324
    %v326 = vlaneseq
    %v327 = vshrl.u32 %v326, 7
    %v328 = vsub.s32 5, %v327
    %v329 = vrot.slane %v159, %v328
    %v330 = vlaneseq
    %v331 = vshrl.u32 %v330, 7
    %v332 = vsub.s32 5, %v331
    %v333 = vrot.slane %v160, %v332
    %v334 = vmul.f32 %v316, %v321
    %v335 = vmul.f32 %v315, %v325
    %v336 = vmul.f32 %v314, %v329
    %v337 = vmul.f32 %v317, %v333
    %338 = vrot.lane.b32.xlu0 %v165, 113
    %v339 = vpop.permute.xlu0 %338
    %340 = vrot.lane.b32.xlu0 %v166, 113
    %v341 = vpop.permute.xlu0 %340
    %342 = vrot.lane.b32.xlu0 %v167, 113
    %v343 = vpop.permute.xlu0 %342
    %344 = vrot.lane.b32.xlu0 %v168, 113
    %v345 = vpop.permute.xlu0 %344
    %vm346 = vcmp.lt.s32.totalorder %v180, 113
    %v347 = vsel %vm346, %v343, %v345
    %v348 = vsel %vm346, %v341, %v343
    %v349 = vsel %vm346, %v339, %v341
    %v350 = vsel %vm346, %v345, %v339
    %v351 = vlaneseq
    %v352 = vshrl.u32 %v351, 7
    %v353 = vsub.s32 6, %v352
    %v354 = vrot.slane %v157, %v353
    %v355 = vlaneseq
    %v356 = vshrl.u32 %v355, 7
    %v357 = vsub.s32 6, %v356
    %v358 = vrot.slane %v158, %v357
    %v359 = vlaneseq
    %v360 = vshrl.u32 %v359, 7
    %v361 = vsub.s32 6, %v360
    %v362 = vrot.slane %v159, %v361
    %v363 = vlaneseq
    %v364 = vshrl.u32 %v363, 7
    %v365 = vsub.s32 6, %v364
    %v366 = vrot.slane %v160, %v365
    %v367 = vmul.f32 %v349, %v354
    %v368 = vmul.f32 %v348, %v358
    %v369 = vmul.f32 %v347, %v362
    %v370 = vmul.f32 %v350, %v366
    %371 = vrot.lane.b32.xlu0 %v165, 112
    %v372 = vpop.permute.xlu0 %371
    %373 = vrot.lane.b32.xlu0 %v166, 112
    %v374 = vpop.permute.xlu0 %373
    %375 = vrot.lane.b32.xlu0 %v167, 112
    %v376 = vpop.permute.xlu0 %375
    %377 = vrot.lane.b32.xlu0 %v168, 112
    %v378 = vpop.permute.xlu0 %377
    %vm379 = vcmp.lt.s32.totalorder %v180, 112
    %v380 = vsel %vm379, %v376, %v378
    %v381 = vsel %vm379, %v374, %v376
    %v382 = vsel %vm379, %v372, %v374
    %v383 = vsel %vm379, %v378, %v372
    %v384 = vlaneseq
    %v385 = vshrl.u32 %v384, 7
    %v386 = vsub.s32 7, %v385
    %v387 = vrot.slane %v157, %v386
    %v388 = vlaneseq
    %v389 = vshrl.u32 %v388, 7
    %v390 = vsub.s32 7, %v389
    %v391 = vrot.slane %v158, %v390
    %v392 = vlaneseq
    %v393 = vshrl.u32 %v392, 7
    %v394 = vsub.s32 7, %v393
    %v395 = vrot.slane %v159, %v394
    %v396 = vlaneseq
    %v397 = vshrl.u32 %v396, 7
    %v398 = vsub.s32 7, %v397
    %v399 = vrot.slane %v160, %v398
    %v400 = vmul.f32 %v382, %v387
    %v401 = vmul.f32 %v381, %v391
    %v402 = vmul.f32 %v380, %v395
    %v403 = vmul.f32 %v383, %v399
    %404 = vrot.lane.b32.xlu0 %v165, 111
    %v405 = vpop.permute.xlu0 %404
    %406 = vrot.lane.b32.xlu0 %v166, 111
    %v407 = vpop.permute.xlu0 %406
    %408 = vrot.lane.b32.xlu0 %v167, 111
    %v409 = vpop.permute.xlu0 %408
    %410 = vrot.lane.b32.xlu0 %v168, 111
    %v411 = vpop.permute.xlu0 %410
    %vm412 = vcmp.lt.s32.totalorder %v180, 111
    %v413 = vsel %vm412, %v409, %v411
    %v414 = vsel %vm412, %v407, %v409
    %v415 = vsel %vm412, %v405, %v407
    %v416 = vsel %vm412, %v411, %v405
    %v417 = vlaneseq
    %v418 = vshrl.u32 %v417, 7
    %v419 = vsub.s32 0, %v418
    %v420 = vrot.slane %v161, %v419
    %v421 = vlaneseq
    %v422 = vshrl.u32 %v421, 7
    %v423 = vsub.s32 0, %v422
    %v424 = vrot.slane %v162, %v423
    %v425 = vlaneseq
    %v426 = vshrl.u32 %v425, 7
    %v427 = vsub.s32 0, %v426
    %v428 = vrot.slane %v163, %v427
    %v429 = vlaneseq
    %v430 = vshrl.u32 %v429, 7
    %v431 = vsub.s32 0, %v430
    %v432 = vrot.slane %v164, %v431
    %v433 = vmul.f32 %v415, %v420
    %v434 = vmul.f32 %v414, %v424
    %v435 = vmul.f32 %v413, %v428
    %v436 = vmul.f32 %v416, %v432
    %v441 = vrot.slane %v235, 2
    %v442 = vrot.slane %v236, 2
    %v443 = vrot.slane %v237, 2
    %v444 = vrot.slane %v238, 2
    %v453 = vrot.slane %v268, 4
    %v454 = vrot.slane %v269, 4
    %v455 = vrot.slane %v270, 4
    %v456 = vrot.slane %v271, 4
    %v465 = vrot.slane %v301, 6
    %v466 = vrot.slane %v302, 6
    %v467 = vrot.slane %v303, 6
    %v468 = vrot.slane %v304, 6
    %v477 = vrot.slane %v334, 2
    %v478 = vrot.slane %v335, 2
    %v479 = vrot.slane %v336, 2
    %v480 = vrot.slane %v337, 2
    %v489 = vrot.slane %v367, 4
    %v490 = vrot.slane %v368, 4
    %v491 = vrot.slane %v369, 4
    %v492 = vrot.slane %v370, 4
    %v501 = vrot.slane %v400, 6
    %v502 = vrot.slane %v401, 6
    %v503 = vrot.slane %v402, 6
    %v504 = vrot.slane %v403, 6
    %vm509 = vcmask 1045504
    %v510 = vsel %vm509, %v202, %v441
    %v511 = vsel %vm509, %v203, %v442
    %v512 = vsel %vm509, %v204, %v443
    %v513 = vsel %vm509, %v205, %v444
    %vm514 = vcmask 1043456
    %v515 = vsel %vm514, %v441, %v453
    %v516 = vsel %vm514, %v442, %v454
    %v517 = vsel %vm514, %v443, %v455
    %v518 = vsel %vm514, %v444, %v456
    %vm519 = vcmask 1041408
    %v520 = vsel %vm519, %v453, %v465
    %v521 = vsel %vm519, %v454, %v466
    %v522 = vsel %vm519, %v455, %v467
    %v523 = vsel %vm519, %v456, %v468
    %v524 = vsel %vm509, %v165, %v477
    %v525 = vsel %vm509, %v166, %v478
    %v526 = vsel %vm509, %v167, %v479
    %v527 = vsel %vm509, %v168, %v480
    %v528 = vsel %vm514, %v477, %v489
    %v529 = vsel %vm514, %v478, %v490
    %v530 = vsel %vm514, %v479, %v491
    %v531 = vsel %vm514, %v480, %v492
    %v532 = vsel %vm519, %v489, %v501
    %v533 = vsel %vm519, %v490, %v502
    %v534 = vsel %vm519, %v491, %v503
    %v535 = vsel %vm519, %v492, %v504
    %537 = vset.pattern.permute.xlu0 0
    %538 = vperm.xlu0 %537, %v170
    %v539 = vpop.permute.xlu0 %538
    %vm541 = vcmask 441344
    %v543 = vsel %vm541, %v169, 0
    %v546 = vsel %vm509, %v433, 0
    %v549 = vsel %vm509, %v434, 0
    %v552 = vsel %vm509, %v435, 0
    %v555 = vsel %vm509, %v436, 0
    %557 = vmatprep.subr.mxu0 0.0
    %558 = vmatpush1.msra.mxu0 0.0
    %559 = vmatprep.subr.mxu0 0.0
    %560 = vmatpush1.msra.mxu0 0.0
    %561 = vmatprep.subr.mxu0 0.0
    %562 = vmatpush1.msra.mxu0 0.0
    %563 = vmatprep.subr.mxu0 0.0
    %564 = vmatpush1.msra.mxu0 0.0
    %565 = vmatprep.subr.mxu0 0.0
    %566 = vmatpush1.msra.mxu0 0.0
    %567 = vmatprep.subr.mxu0 0.0
    %568 = vmatpush1.msra.mxu0 0.0
    %569 = vmatprep.subr.mxu0 0.0
    %570 = vmatpush1.msra.mxu0 0.0
    %571 = vmatprep.subr.mxu0 0.0
    %572 = vmatpush1.msra.mxu0 0.0
    %573 = vmatprep.subr.mxu0 0.0
    %574 = vmatpush1.msra.mxu0 0.0
    %575 = vmatprep.subr.mxu0 %v549
    %576 = vmatpush1.msra.mxu0 %v546
    %577 = vmatprep.subr.mxu0 %v533
    %578 = vmatpush1.msra.mxu0 %v532
    %579 = vmatprep.subr.mxu0 %v529
    %580 = vmatpush1.msra.mxu0 %v528
    %581 = vmatprep.subr.mxu0 %v525
    %582 = vmatpush1.msra.mxu0 %v524
    %583 = vmatprep.subr.mxu0 %v521
    %584 = vmatpush1.msra.mxu0 %v520
    %585 = vmatprep.subr.mxu0 %v516
    %586 = vmatpush1.msra.mxu0 %v515
    %587 = vmatprep.subr.mxu0 %v511
    %588 = vmatpush1.msra.mxu0 %v510
    %589 = vmatprep.subr.mxu0 0.0
    %590 = vmatpush2.msra.mxu0 0.0
    %591 = vmatprep.subr.mxu0 0.0
    %592 = vmatpush2.msra.mxu0 0.0
    %593 = vmatprep.subr.mxu0 0.0
    %594 = vmatpush2.msra.mxu0 0.0
    %595 = vmatprep.subr.mxu0 0.0
    %596 = vmatpush2.msra.mxu0 0.0
    %597 = vmatprep.subr.mxu0 0.0
    %598 = vmatpush2.msra.mxu0 0.0
    %599 = vmatprep.subr.mxu0 0.0
    %600 = vmatpush2.msra.mxu0 0.0
    %601 = vmatprep.subr.mxu0 0.0
    %602 = vmatpush2.msra.mxu0 0.0
    %603 = vmatprep.subr.mxu0 0.0
    %604 = vmatpush2.msra.mxu0 0.0
    %605 = vmatprep.subr.mxu0 0.0
    %606 = vmatpush2.msra.mxu0 0.0
    %607 = vmatprep.subr.mxu0 0.0
    %608 = vmatpush2.msra.mxu0 0.0
    %609 = vmatprep.subr.mxu0 0.0
    %610 = vmatpush2.msra.mxu0 0.0
    %611 = vmatprep.subr.mxu0 0.0
    %612 = vmatpush2.msra.mxu0 0.0
    %613 = vmatprep.subr.mxu0 0.0
    %614 = vmatpush2.msra.mxu0 0.0
    %615 = vmatprep.subr.mxu0 0.0
    %616 = vmatpush2.msra.mxu0 0.0
    %617 = vmatprep.subr.mxu0 0.0
    %618 = vmatpush2.msra.mxu0 0.0
    %619 = vmatprep.subr.mxu0 0.0
    %620 = vmatpush2.msra.mxu0 0.0
    %621 = vmatprep.mubr.f32.mxu0 0.0
    %622 = vmatmul.mubr.f32.gmra.mxu0 %v543
    %v623 = vpop.f32.mrf.mxu0
    %v624 = vadd.f32 %v539, %v623
    %v625 = vpop.f32.mrf.mxu0
    %v626 = vadd.f32 %v539, %v625
    %627 = vdwg.mxu0
    %628 = vmatprep.subr.mxu0 0.0
    %629 = vmatpush1.msra.mxu0 0.0
    %630 = vmatprep.subr.mxu0 0.0
    %631 = vmatpush1.msra.mxu0 0.0
    %632 = vmatprep.subr.mxu0 0.0
    %633 = vmatpush1.msra.mxu0 0.0
    %634 = vmatprep.subr.mxu0 0.0
    %635 = vmatpush1.msra.mxu0 0.0
    %636 = vmatprep.subr.mxu0 0.0
    %637 = vmatpush1.msra.mxu0 0.0
    %638 = vmatprep.subr.mxu0 0.0
    %639 = vmatpush1.msra.mxu0 0.0
    %640 = vmatprep.subr.mxu0 0.0
    %641 = vmatpush1.msra.mxu0 0.0
    %642 = vmatprep.subr.mxu0 0.0
    %643 = vmatpush1.msra.mxu0 0.0
    %644 = vmatprep.subr.mxu0 0.0
    %645 = vmatpush1.msra.mxu0 0.0
    %646 = vmatprep.subr.mxu0 %v555
    %647 = vmatpush1.msra.mxu0 %v552
    %648 = vmatprep.subr.mxu0 %v535
    %649 = vmatpush1.msra.mxu0 %v534
    %650 = vmatprep.subr.mxu0 %v531
    %651 = vmatpush1.msra.mxu0 %v530
    %652 = vmatprep.subr.mxu0 %v527
    %653 = vmatpush1.msra.mxu0 %v526
    %654 = vmatprep.subr.mxu0 %v523
    %655 = vmatpush1.msra.mxu0 %v522
    %656 = vmatprep.subr.mxu0 %v518
    %657 = vmatpush1.msra.mxu0 %v517
    %658 = vmatprep.subr.mxu0 %v513
    %659 = vmatpush1.msra.mxu0 %v512
    %660 = vmatprep.subr.mxu0 0.0
    %661 = vmatpush2.msra.mxu0 0.0
    %662 = vmatprep.subr.mxu0 0.0
    %663 = vmatpush2.msra.mxu0 0.0
    %664 = vmatprep.subr.mxu0 0.0
    %665 = vmatpush2.msra.mxu0 0.0
    %666 = vmatprep.subr.mxu0 0.0
    %667 = vmatpush2.msra.mxu0 0.0
    %668 = vmatprep.subr.mxu0 0.0
    %669 = vmatpush2.msra.mxu0 0.0
    %670 = vmatprep.subr.mxu0 0.0
    %671 = vmatpush2.msra.mxu0 0.0
    %672 = vmatprep.subr.mxu0 0.0
    %673 = vmatpush2.msra.mxu0 0.0
    %674 = vmatprep.subr.mxu0 0.0
    %675 = vmatpush2.msra.mxu0 0.0
    %676 = vmatprep.subr.mxu0 0.0
    %677 = vmatpush2.msra.mxu0 0.0
    %678 = vmatprep.subr.mxu0 0.0
    %679 = vmatpush2.msra.mxu0 0.0
    %680 = vmatprep.subr.mxu0 0.0
    %681 = vmatpush2.msra.mxu0 0.0
    %682 = vmatprep.subr.mxu0 0.0
    %683 = vmatpush2.msra.mxu0 0.0
    %684 = vmatprep.subr.mxu0 0.0
    %685 = vmatpush2.msra.mxu0 0.0
    %686 = vmatprep.subr.mxu0 0.0
    %687 = vmatpush2.msra.mxu0 0.0
    %688 = vmatprep.subr.mxu0 0.0
    %689 = vmatpush2.msra.mxu0 0.0
    %690 = vmatprep.subr.mxu0 0.0
    %691 = vmatpush2.msra.mxu0 0.0
    %692 = vmatprep.mubr.f32.mxu0 0.0
    %693 = vmatmul.mubr.f32.gmra.mxu0 %v543
    %v694 = vpop.f32.mrf.mxu0
    %v695 = vadd.f32 %v539, %v694
    %v696 = vpop.f32.mrf.mxu0
    %v697 = vadd.f32 %v539, %v696
    %698 = vdwg.mxu0
    %v699 = vld [vmem:[#allocation6] sm:$0x3]
    %v700 = vld [vmem:[%s5] sm:$0x3]
    %701 = vrot.lane.b32.xlu0 %v624, 17
    %v702 = vpop.permute.xlu0 %701
    %703 = vrot.lane.b32.xlu0 %v626, 17
    %v704 = vpop.permute.xlu0 %703
    %705 = vrot.lane.b32.xlu0 %v695, 17
    %v706 = vpop.permute.xlu0 %705
    %707 = vrot.lane.b32.xlu0 %v697, 17
    %v708 = vpop.permute.xlu0 %707
    %v709 = vsel %vm181, %v706, %v708
    %v710 = vsel %vm181, %v704, %v706
    %v711 = vsel %vm181, %v702, %v704
    %v712 = vsel %vm181, %v708, %v702
    %v713 = vmul.f32 %v712, %v189
    %v714 = vmul.f32 %v711, %v193
    %v715 = vmul.f32 %v710, %v197
    %v716 = vmul.f32 %v709, %v201
    %717 = vrot.lane.b32.xlu0 %v624, 16
    %v718 = vpop.permute.xlu0 %717
    %719 = vrot.lane.b32.xlu0 %v626, 16
    %v720 = vpop.permute.xlu0 %719
    %721 = vrot.lane.b32.xlu0 %v695, 16
    %v722 = vpop.permute.xlu0 %721
    %723 = vrot.lane.b32.xlu0 %v697, 16
    %v724 = vpop.permute.xlu0 %723
    %v725 = vsel %vm214, %v722, %v724
    %v726 = vsel %vm214, %v720, %v722
    %v727 = vsel %vm214, %v718, %v720
    %v728 = vsel %vm214, %v724, %v718
    %v729 = vmul.f32 %v728, %v222
    %v730 = vmul.f32 %v727, %v226
    %v731 = vmul.f32 %v726, %v230
    %v732 = vmul.f32 %v725, %v234
    %733 = vrot.lane.b32.xlu0 %v624, 15
    %v734 = vpop.permute.xlu0 %733
    %735 = vrot.lane.b32.xlu0 %v626, 15
    %v736 = vpop.permute.xlu0 %735
    %737 = vrot.lane.b32.xlu0 %v695, 15
    %v738 = vpop.permute.xlu0 %737
    %739 = vrot.lane.b32.xlu0 %v697, 15
    %v740 = vpop.permute.xlu0 %739
    %v741 = vsel %vm247, %v738, %v740
    %v742 = vsel %vm247, %v736, %v738
    %v743 = vsel %vm247, %v734, %v736
    %v744 = vsel %vm247, %v740, %v734
    %v745 = vmul.f32 %v744, %v255
    %v746 = vmul.f32 %v743, %v259
    %v747 = vmul.f32 %v742, %v263
    %v748 = vmul.f32 %v741, %v267
    %749 = vrot.lane.b32.xlu0 %v624, 1
    %v750 = vpop.permute.xlu0 %749
    %751 = vrot.lane.b32.xlu0 %v626, 1
    %v752 = vpop.permute.xlu0 %751
    %753 = vrot.lane.b32.xlu0 %v695, 1
    %v754 = vpop.permute.xlu0 %753
    %755 = vrot.lane.b32.xlu0 %v697, 1
    %v756 = vpop.permute.xlu0 %755
    %v757 = vsel %vm280, %v754, %v756
    %v758 = vsel %vm280, %v752, %v754
    %v759 = vsel %vm280, %v750, %v752
    %v760 = vsel %vm280, %v756, %v750
    %v761 = vmul.f32 %v760, %v288
    %v762 = vmul.f32 %v759, %v292
    %v763 = vmul.f32 %v758, %v296
    %v764 = vmul.f32 %v757, %v300
    %765 = vrot.lane.b32.xlu0 %v624, 127
    %v766 = vpop.permute.xlu0 %765
    %767 = vrot.lane.b32.xlu0 %v626, 127
    %v768 = vpop.permute.xlu0 %767
    %769 = vrot.lane.b32.xlu0 %v695, 127
    %v770 = vpop.permute.xlu0 %769
    %771 = vrot.lane.b32.xlu0 %v697, 127
    %v772 = vpop.permute.xlu0 %771
    %v773 = vsel %vm313, %v770, %v772
    %v774 = vsel %vm313, %v768, %v770
    %v775 = vsel %vm313, %v766, %v768
    %v776 = vsel %vm313, %v772, %v766
    %v777 = vmul.f32 %v775, %v321
    %v778 = vmul.f32 %v774, %v325
    %v779 = vmul.f32 %v773, %v329
    %v780 = vmul.f32 %v776, %v333
    %781 = vrot.lane.b32.xlu0 %v624, 113
    %v782 = vpop.permute.xlu0 %781
    %783 = vrot.lane.b32.xlu0 %v626, 113
    %v784 = vpop.permute.xlu0 %783
    %785 = vrot.lane.b32.xlu0 %v695, 113
    %v786 = vpop.permute.xlu0 %785
    %787 = vrot.lane.b32.xlu0 %v697, 113
    %v788 = vpop.permute.xlu0 %787
    %v789 = vsel %vm346, %v786, %v788
    %v790 = vsel %vm346, %v784, %v786
    %v791 = vsel %vm346, %v782, %v784
    %v792 = vsel %vm346, %v788, %v782
    %v793 = vmul.f32 %v791, %v354
    %v794 = vmul.f32 %v790, %v358
    %v795 = vmul.f32 %v789, %v362
    %v796 = vmul.f32 %v792, %v366
    %797 = vrot.lane.b32.xlu0 %v624, 112
    %v798 = vpop.permute.xlu0 %797
    %799 = vrot.lane.b32.xlu0 %v626, 112
    %v800 = vpop.permute.xlu0 %799
    %801 = vrot.lane.b32.xlu0 %v695, 112
    %v802 = vpop.permute.xlu0 %801
    %803 = vrot.lane.b32.xlu0 %v697, 112
    %v804 = vpop.permute.xlu0 %803
    %v805 = vsel %vm379, %v802, %v804
    %v806 = vsel %vm379, %v800, %v802
    %v807 = vsel %vm379, %v798, %v800
    %v808 = vsel %vm379, %v804, %v798
    %v809 = vmul.f32 %v807, %v387
    %v810 = vmul.f32 %v806, %v391
    %v811 = vmul.f32 %v805, %v395
    %v812 = vmul.f32 %v808, %v399
    %813 = vrot.lane.b32.xlu0 %v624, 111
    %v814 = vpop.permute.xlu0 %813
    %815 = vrot.lane.b32.xlu0 %v626, 111
    %v816 = vpop.permute.xlu0 %815
    %817 = vrot.lane.b32.xlu0 %v695, 111
    %v818 = vpop.permute.xlu0 %817
    %819 = vrot.lane.b32.xlu0 %v697, 111
    %v820 = vpop.permute.xlu0 %819
    %v821 = vsel %vm412, %v818, %v820
    %v822 = vsel %vm412, %v816, %v818
    %v823 = vsel %vm412, %v814, %v816
    %v824 = vsel %vm412, %v820, %v814
    %v825 = vmul.f32 %v823, %v420
    %v826 = vmul.f32 %v822, %v424
    %v827 = vmul.f32 %v821, %v428
    %v828 = vmul.f32 %v824, %v432
    %v833 = vrot.slane %v729, 6
    %v834 = vrot.slane %v730, 6
    %v835 = vrot.slane %v731, 6
    %v836 = vrot.slane %v732, 6
    %v845 = vrot.slane %v745, 4
    %v846 = vrot.slane %v746, 4
    %v847 = vrot.slane %v747, 4
    %v848 = vrot.slane %v748, 4
    %v857 = vrot.slane %v761, 2
    %v858 = vrot.slane %v762, 2
    %v859 = vrot.slane %v763, 2
    %v860 = vrot.slane %v764, 2
    %v869 = vrot.slane %v777, 6
    %v870 = vrot.slane %v778, 6
    %v871 = vrot.slane %v779, 6
    %v872 = vrot.slane %v780, 6
    %v881 = vrot.slane %v793, 4
    %v882 = vrot.slane %v794, 4
    %v883 = vrot.slane %v795, 4
    %v884 = vrot.slane %v796, 4
    %v893 = vrot.slane %v809, 2
    %v894 = vrot.slane %v810, 2
    %v895 = vrot.slane %v811, 2
    %v896 = vrot.slane %v812, 2
    %v901 = vsel %vm519, %v713, %v833
    %v902 = vsel %vm519, %v714, %v834
    %v903 = vsel %vm519, %v715, %v835
    %v904 = vsel %vm519, %v716, %v836
    %v905 = vsel %vm514, %v901, %v845
    %v906 = vsel %vm514, %v902, %v846
    %v907 = vsel %vm514, %v903, %v847
    %v908 = vsel %vm514, %v904, %v848
    %v909 = vsel %vm509, %v905, %v857
    %v910 = vsel %vm509, %v906, %v858
    %v911 = vsel %vm509, %v907, %v859
    %v912 = vsel %vm509, %v908, %v860
    %v913 = vsel %vm519, %v624, %v869
    %v914 = vsel %vm519, %v626, %v870
    %v915 = vsel %vm519, %v695, %v871
    %v916 = vsel %vm519, %v697, %v872
    %v917 = vsel %vm514, %v913, %v881
    %v918 = vsel %vm514, %v914, %v882
    %v919 = vsel %vm514, %v915, %v883
    %v920 = vsel %vm514, %v916, %v884
    %v921 = vsel %vm509, %v917, %v893
    %v922 = vsel %vm509, %v918, %v894
    %v923 = vsel %vm509, %v919, %v895
    %v924 = vsel %vm509, %v920, %v896
    %926 = vset.pattern.permute.xlu0 0
    %927 = vperm.xlu0 %926, %v700
    %v928 = vpop.permute.xlu0 %927
    %vm930 = vcmask 146432
    %v932 = vsel %vm930, %v699, 0
    %v935 = vsel %vm519, %v825, 0
    %v938 = vsel %vm519, %v826, 0
    %v941 = vsel %vm519, %v827, 0
    %v944 = vsel %vm519, %v828, 0
    %946 = vmatprep.subr.mxu0 0.0
    %947 = vmatpush1.msra.mxu0 0.0
    %948 = vmatprep.subr.mxu0 0.0
    %949 = vmatpush1.msra.mxu0 0.0
    %950 = vmatprep.subr.mxu0 0.0
    %951 = vmatpush1.msra.mxu0 0.0
    %952 = vmatprep.subr.mxu0 0.0
    %953 = vmatpush1.msra.mxu0 0.0
    %954 = vmatprep.subr.mxu0 0.0
    %955 = vmatpush1.msra.mxu0 0.0
    %956 = vmatprep.subr.mxu0 0.0
    %957 = vmatpush1.msra.mxu0 0.0
    %958 = vmatprep.subr.mxu0 0.0
    %959 = vmatpush1.msra.mxu0 0.0
    %960 = vmatprep.subr.mxu0 0.0
    %961 = vmatpush1.msra.mxu0 0.0
    %962 = vmatprep.subr.mxu0 0.0
    %963 = vmatpush1.msra.mxu0 0.0
    %964 = vmatprep.subr.mxu0 0.0
    %965 = vmatpush1.msra.mxu0 0.0
    %966 = vmatprep.subr.mxu0 0.0
    %967 = vmatpush1.msra.mxu0 0.0
    %968 = vmatprep.subr.mxu0 0.0
    %969 = vmatpush1.msra.mxu0 0.0
    %970 = vmatprep.subr.mxu0 0.0
    %971 = vmatpush1.msra.mxu0 0.0
    %972 = vmatprep.subr.mxu0 %v938
    %973 = vmatpush1.msra.mxu0 %v935
    %974 = vmatprep.subr.mxu0 %v922
    %975 = vmatpush1.msra.mxu0 %v921
    %976 = vmatprep.subr.mxu0 %v910
    %977 = vmatpush1.msra.mxu0 %v909
    %978 = vmatprep.subr.mxu0 0.0
    %979 = vmatpush2.msra.mxu0 0.0
    %980 = vmatprep.subr.mxu0 0.0
    %981 = vmatpush2.msra.mxu0 0.0
    %982 = vmatprep.subr.mxu0 0.0
    %983 = vmatpush2.msra.mxu0 0.0
    %984 = vmatprep.subr.mxu0 0.0
    %985 = vmatpush2.msra.mxu0 0.0
    %986 = vmatprep.subr.mxu0 0.0
    %987 = vmatpush2.msra.mxu0 0.0
    %988 = vmatprep.subr.mxu0 0.0
    %989 = vmatpush2.msra.mxu0 0.0
    %990 = vmatprep.subr.mxu0 0.0
    %991 = vmatpush2.msra.mxu0 0.0
    %992 = vmatprep.subr.mxu0 0.0
    %993 = vmatpush2.msra.mxu0 0.0
    %994 = vmatprep.subr.mxu0 0.0
    %995 = vmatpush2.msra.mxu0 0.0
    %996 = vmatprep.subr.mxu0 0.0
    %997 = vmatpush2.msra.mxu0 0.0
    %998 = vmatprep.subr.mxu0 0.0
    %999 = vmatpush2.msra.mxu0 0.0
    %1000 = vmatprep.subr.mxu0 0.0
    %1001 = vmatpush2.msra.mxu0 0.0
    %1002 = vmatprep.subr.mxu0 0.0
    %1003 = vmatpush2.msra.mxu0 0.0
    %1004 = vmatprep.subr.mxu0 0.0
    %1005 = vmatpush2.msra.mxu0 0.0
    %1006 = vmatprep.subr.mxu0 0.0
    %1007 = vmatpush2.msra.mxu0 0.0
    %1008 = vmatprep.subr.mxu0 0.0
    %1009 = vmatpush2.msra.mxu0 0.0
    %1010 = vmatprep.mubr.f32.mxu0 0.0
    %1011 = vmatmul.mubr.f32.gmra.mxu0 %v932
    %v1012 = vpop.f32.mrf.mxu0
    %v1013 = vadd.f32 %v928, %v1012
    %v1014 = vpop.f32.mrf.mxu0
    %v1015 = vadd.f32 %v928, %v1014
    %1016 = vdwg.mxu0
    %1017 = vmatprep.subr.mxu0 0.0
    %1018 = vmatpush1.msra.mxu0 0.0
    %1019 = vmatprep.subr.mxu0 0.0
    %1020 = vmatpush1.msra.mxu0 0.0
    %1021 = vmatprep.subr.mxu0 0.0
    %1022 = vmatpush1.msra.mxu0 0.0
    %1023 = vmatprep.subr.mxu0 0.0
    %1024 = vmatpush1.msra.mxu0 0.0
    %1025 = vmatprep.subr.mxu0 0.0
    %1026 = vmatpush1.msra.mxu0 0.0
    %1027 = vmatprep.subr.mxu0 0.0
    %1028 = vmatpush1.msra.mxu0 0.0
    %1029 = vmatprep.subr.mxu0 0.0
    %1030 = vmatpush1.msra.mxu0 0.0
    %1031 = vmatprep.subr.mxu0 0.0
    %1032 = vmatpush1.msra.mxu0 0.0
    %1033 = vmatprep.subr.mxu0 0.0
    %1034 = vmatpush1.msra.mxu0 0.0
    %1035 = vmatprep.subr.mxu0 0.0
    %1036 = vmatpush1.msra.mxu0 0.0
    %1037 = vmatprep.subr.mxu0 0.0
    %1038 = vmatpush1.msra.mxu0 0.0
    %1039 = vmatprep.subr.mxu0 0.0
    %1040 = vmatpush1.msra.mxu0 0.0
    %1041 = vmatprep.subr.mxu0 0.0
    %1042 = vmatpush1.msra.mxu0 0.0
    %1043 = vmatprep.subr.mxu0 %v944
    %1044 = vmatpush1.msra.mxu0 %v941
    %1045 = vmatprep.subr.mxu0 %v924
    %1046 = vmatpush1.msra.mxu0 %v923
    %1047 = vmatprep.subr.mxu0 %v912
    %1048 = vmatpush1.msra.mxu0 %v911
    %1049 = vmatprep.subr.mxu0 0.0
    %1050 = vmatpush2.msra.mxu0 0.0
    %1051 = vmatprep.subr.mxu0 0.0
    %1052 = vmatpush2.msra.mxu0 0.0
    %1053 = vmatprep.subr.mxu0 0.0
    %1054 = vmatpush2.msra.mxu0 0.0
    %1055 = vmatprep.subr.mxu0 0.0
    %1056 = vmatpush2.msra.mxu0 0.0
    %1057 = vmatprep.subr.mxu0 0.0
    %1058 = vmatpush2.msra.mxu0 0.0
    %1059 = vmatprep.subr.mxu0 0.0
    %1060 = vmatpush2.msra.mxu0 0.0
    %1061 = vmatprep.subr.mxu0 0.0
    %1062 = vmatpush2.msra.mxu0 0.0
    %1063 = vmatprep.subr.mxu0 0.0
    %1064 = vmatpush2.msra.mxu0 0.0
    %1065 = vmatprep.subr.mxu0 0.0
    %1066 = vmatpush2.msra.mxu0 0.0
    %1067 = vmatprep.subr.mxu0 0.0
    %1068 = vmatpush2.msra.mxu0 0.0
    %1069 = vmatprep.subr.mxu0 0.0
    %1070 = vmatpush2.msra.mxu0 0.0
    %1071 = vmatprep.subr.mxu0 0.0
    %1072 = vmatpush2.msra.mxu0 0.0
    %1073 = vmatprep.subr.mxu0 0.0
    %1074 = vmatpush2.msra.mxu0 0.0
    %1075 = vmatprep.subr.mxu0 0.0
    %1076 = vmatpush2.msra.mxu0 0.0
    %1077 = vmatprep.subr.mxu0 0.0
    %1078 = vmatpush2.msra.mxu0 0.0
    %1079 = vmatprep.subr.mxu0 0.0
    %1080 = vmatpush2.msra.mxu0 0.0
    %1081 = vmatprep.mubr.f32.mxu0 0.0
    %1082 = vmatmul.mubr.f32.gmra.mxu0 %v932
    %v1083 = vpop.f32.mrf.mxu0
    %v1084 = vadd.f32 %v928, %v1083
    %v1085 = vpop.f32.mrf.mxu0
    %v1086 = vadd.f32 %v928, %v1085
    %1087 = vdwg.mxu0
    %v1090 = vrot.slane %v624, 1
    %v1091 = vrot.slane %v626, 1
    %v1094 = vrot.slane %v695, 1
    %v1095 = vrot.slane %v697, 1
    %v1096 = vrot.slane %v624, 2
    %v1097 = vrot.slane %v626, 2
    %v1098 = vrot.slane %v1090, 2
    %v1099 = vrot.slane %v1091, 2
    %v1104 = vrot.slane %v1094, 1
    %v1105 = vrot.slane %v1095, 1
    %vm1110 = vcmask 1040384
    %v1111 = vsel %vm1110, %v1096, %v1094
    %v1112 = vsel %vm1110, %v1097, %v1095
    %v1113 = vsel %vm1110, %v1098, %v1104
    %v1114 = vsel %vm1110, %v1099, %v1105
    %v1115 = vld [vmem:[#allocation7] sm:$0xff]
    %v1116 = vld [vmem:[#allocation7 + $0x8] sm:$0xff]
    %v1117 = vld [vmem:[#allocation7 + $0x10] sm:$0xff]
    %v1118 = vld [vmem:[#allocation7 + $0x18] sm:$0xff]
    %v1119 = vld [vmem:[#allocation7 + $0x20] sm:$0xff]
    %v1120 = vld [vmem:[#allocation7 + $0x28] sm:$0xff]
    %v1121 = vld [vmem:[#allocation7 + $0x30] sm:$0xff]
    %v1122 = vld [vmem:[#allocation7 + $0x38] sm:$0xff]
    %v1123 = vld [vmem:[#allocation7 + $0x40] sm:$0xff]
    %v1124 = vld [vmem:[#allocation7 + $0x48] sm:$0xff]
    %v1125 = vld [vmem:[#allocation7 + $0x50] sm:$0xff]
    %v1126 = vld [vmem:[#allocation7 + $0x58] sm:$0xff]
    %v1127 = vld [vmem:[#allocation7 + $0x60] sm:$0xff]
    %v1128 = vld [vmem:[#allocation7 + $0x68] sm:$0xff]
    %v1129 = vld [vmem:[#allocation7 + $0x70] sm:$0xff]
    %v1130 = vld [vmem:[#allocation7 + $0x78] sm:$0xff]
    %v1131 = vld [vmem:[#allocation7 + $0x80] sm:$0xff]
    %v1132 = vld [vmem:[#allocation7 + $0x88] sm:$0xff]
    %v1133 = vld [vmem:[#allocation7 + $0x90] sm:$0xff]
    %v1134 = vld [vmem:[#allocation7 + $0x98] sm:$0xff]
    %v1135 = vld [vmem:[#allocation7 + $0xa0] sm:$0xff]
    %v1136 = vld [vmem:[#allocation7 + $0xa8] sm:$0xff]
    %v1137 = vld [vmem:[#allocation7 + $0xb0] sm:$0xff]
    %v1138 = vld [vmem:[#allocation7 + $0xb8] sm:$0xff]
    %v1139 = vld [vmem:[#allocation7 + $0xc0] sm:$0xff]
    %v1140 = vld [vmem:[#allocation7 + $0xc8] sm:$0xff]
    %v1141 = vld [vmem:[#allocation7 + $0xd0] sm:$0xff]
    %v1142 = vld [vmem:[#allocation7 + $0xd8] sm:$0xff]
    %v1143 = vld [vmem:[#allocation7 + $0xe0] sm:$0xff]
    %v1144 = vld [vmem:[#allocation7 + $0xe8] sm:$0xff]
    %v1145 = vld [vmem:[#allocation7 + $0xf0] sm:$0xff]
    %v1146 = vld [vmem:[#allocation7 + $0xf8] sm:$0xff]
    %v1147 = vld [vmem:[#allocation7 + $0x100] sm:$0xff]
    %v1148 = vld [vmem:[#allocation7 + $0x108] sm:$0xff]
    %v1149 = vld [vmem:[#allocation7 + $0x110] sm:$0xff]
    %v1150 = vld [vmem:[#allocation7 + $0x118] sm:$0xff]
    %v1151 = vld [vmem:[#allocation7 + $0x120] sm:$0xff]
    %v1152 = vld [vmem:[#allocation7 + $0x128] sm:$0xff]
    %v1153 = vld [vmem:[#allocation7 + $0x130] sm:$0xff]
    %v1154 = vld [vmem:[#allocation7 + $0x138] sm:$0xff]
    %v1155 = vld [vmem:[#allocation7 + $0x140] sm:$0xff]
    %v1156 = vld [vmem:[#allocation7 + $0x148] sm:$0xff]
    %v1157 = vld [vmem:[#allocation7 + $0x150] sm:$0xff]
    %v1158 = vld [vmem:[#allocation7 + $0x158] sm:$0xff]
    %v1159 = vld [vmem:[#allocation7 + $0x160] sm:$0xff]
    %v1160 = vld [vmem:[#allocation7 + $0x168] sm:$0xff]
    %v1161 = vld [vmem:[#allocation7 + $0x170] sm:$0xff]
    %v1162 = vld [vmem:[#allocation7 + $0x178] sm:$0xff]
    %v1163 = vld [vmem:[#allocation7 + $0x180] sm:$0xff]
    %v1164 = vld [vmem:[#allocation7 + $0x188] sm:$0xff]
    %v1165 = vld [vmem:[#allocation7 + $0x190] sm:$0xff]
    %v1166 = vld [vmem:[#allocation7 + $0x198] sm:$0xff]
    %v1167 = vld [vmem:[#allocation7 + $0x1a0] sm:$0xff]
    %v1168 = vld [vmem:[#allocation7 + $0x1a8] sm:$0xff]
    %v1169 = vld [vmem:[#allocation7 + $0x1b0] sm:$0xff]
    %v1170 = vld [vmem:[#allocation7 + $0x1b8] sm:$0xff]
    %v1171 = vld [vmem:[#allocation7 + $0x1c0] sm:$0xff]
    %v1172 = vld [vmem:[#allocation7 + $0x1c8] sm:$0xff]
    %v1173 = vld [vmem:[#allocation7 + $0x1d0] sm:$0xff]
    %v1174 = vld [vmem:[#allocation7 + $0x1d8] sm:$0xff]
    %v1175 = vld [vmem:[#allocation7 + $0x1e0] sm:$0xff]
    %v1176 = vld [vmem:[#allocation7 + $0x1e8] sm:$0xff]
    %v1177 = vld [vmem:[#allocation7 + $0x1f0] sm:$0xff]
    %v1178 = vld [vmem:[#allocation7 + $0x1f8] sm:$0xff]
    %v1179 = vld [vmem:[#allocation7 + $0x200] sm:$0xff]
    %v1180 = vld [vmem:[#allocation7 + $0x208] sm:$0xff]
    %v1181 = vld [vmem:[#allocation7 + $0x210] sm:$0xff]
    %v1182 = vld [vmem:[#allocation7 + $0x218] sm:$0xff]
    %v1183 = vld [vmem:[#allocation7 + $0x220] sm:$0xff]
    %v1184 = vld [vmem:[#allocation7 + $0x228] sm:$0xff]
    %v1185 = vld [vmem:[#allocation7 + $0x230] sm:$0xff]
    %v1186 = vld [vmem:[#allocation7 + $0x238] sm:$0xff]
    %v1187 = vld [vmem:[#allocation7 + $0x240] sm:$0xff]
    %v1188 = vld [vmem:[#allocation7 + $0x248] sm:$0xff]
    %v1189 = vld [vmem:[#allocation7 + $0x250] sm:$0xff]
    %v1190 = vld [vmem:[#allocation7 + $0x258] sm:$0xff]
    %v1191 = vld [vmem:[#allocation7 + $0x260] sm:$0xff]
    %v1192 = vld [vmem:[#allocation7 + $0x268] sm:$0xff]
    %v1193 = vld [vmem:[#allocation7 + $0x270] sm:$0xff]
    %v1194 = vld [vmem:[#allocation7 + $0x278] sm:$0xff]
    %v1195 = vld [vmem:[#allocation7 + $0x280] sm:$0xff]
    %v1196 = vld [vmem:[#allocation7 + $0x288] sm:$0xff]
    %v1197 = vld [vmem:[#allocation7 + $0x290] sm:$0xff]
    %v1198 = vld [vmem:[#allocation7 + $0x298] sm:$0xff]
    %v1199 = vld [vmem:[#allocation7 + $0x2a0] sm:$0xff]
    %v1200 = vld [vmem:[#allocation7 + $0x2a8] sm:$0xff]
    %v1201 = vld [vmem:[#allocation7 + $0x2b0] sm:$0xff]
    %v1202 = vld [vmem:[#allocation7 + $0x2b8] sm:$0xff]
    %v1203 = vld [vmem:[#allocation7 + $0x2c0] sm:$0xff]
    %v1204 = vld [vmem:[#allocation7 + $0x2c8] sm:$0xff]
    %v1205 = vld [vmem:[#allocation7 + $0x2d0] sm:$0xff]
    %v1206 = vld [vmem:[#allocation7 + $0x2d8] sm:$0xff]
    %v1207 = vld [vmem:[#allocation7 + $0x2e0] sm:$0xff]
    %v1208 = vld [vmem:[#allocation7 + $0x2e8] sm:$0xff]
    %v1209 = vld [vmem:[#allocation7 + $0x2f0] sm:$0xff]
    %v1210 = vld [vmem:[#allocation7 + $0x2f8] sm:$0xff]
    %v1211 = vld [vmem:[#allocation7 + $0x300] sm:$0xff]
    %v1212 = vld [vmem:[#allocation7 + $0x308] sm:$0xff]
    %v1213 = vld [vmem:[#allocation7 + $0x310] sm:$0xff]
    %v1214 = vld [vmem:[#allocation7 + $0x318] sm:$0xff]
    %v1215 = vld [vmem:[#allocation7 + $0x320] sm:$0xff]
    %v1216 = vld [vmem:[#allocation7 + $0x328] sm:$0xff]
    %v1217 = vld [vmem:[#allocation7 + $0x330] sm:$0xff]
    %v1218 = vld [vmem:[#allocation7 + $0x338] sm:$0xff]
    %v1219 = vld [vmem:[#allocation7 + $0x340] sm:$0xff]
    %v1220 = vld [vmem:[#allocation7 + $0x348] sm:$0xff]
    %v1221 = vld [vmem:[#allocation7 + $0x350] sm:$0xff]
    %v1222 = vld [vmem:[#allocation7 + $0x358] sm:$0xff]
    %v1223 = vld [vmem:[#allocation7 + $0x360] sm:$0xff]
    %v1224 = vld [vmem:[#allocation7 + $0x368] sm:$0xff]
    %v1225 = vld [vmem:[#allocation7 + $0x370] sm:$0xff]
    %v1226 = vld [vmem:[#allocation7 + $0x378] sm:$0xff]
    %v1227 = vld [vmem:[#allocation7 + $0x380] sm:$0xff]
    %v1228 = vld [vmem:[#allocation7 + $0x388] sm:$0xff]
    %v1229 = vld [vmem:[#allocation7 + $0x390] sm:$0xff]
    %v1230 = vld [vmem:[#allocation7 + $0x398] sm:$0xff]
    %v1231 = vld [vmem:[#allocation7 + $0x3a0] sm:$0xff]
    %v1232 = vld [vmem:[#allocation7 + $0x3a8] sm:$0xff]
    %v1233 = vld [vmem:[#allocation7 + $0x3b0] sm:$0xff]
    %v1234 = vld [vmem:[#allocation7 + $0x3b8] sm:$0xff]
    %v1235 = vld [vmem:[#allocation7 + $0x3c0] sm:$0xff]
    %v1236 = vld [vmem:[#allocation7 + $0x3c8] sm:$0xff]
    %v1237 = vld [vmem:[#allocation7 + $0x3d0] sm:$0xff]
    %v1238 = vld [vmem:[#allocation7 + $0x3d8] sm:$0xff]
    %v1239 = vld [vmem:[#allocation7 + $0x3e0] sm:$0xff]
    %v1240 = vld [vmem:[#allocation7 + $0x3e8] sm:$0xff]
    %v1241 = vld [vmem:[#allocation7 + $0x3f0] sm:$0xff]
    %v1242 = vld [vmem:[#allocation7 + $0x3f8] sm:$0xff]
    %v1243 = vld [vmem:[#allocation7 + $0x400] sm:$0xff]
    %v1244 = vld [vmem:[#allocation7 + $0x408] sm:$0xff]
    %v1245 = vld [vmem:[#allocation7 + $0x410] sm:$0xff]
    %v1246 = vld [vmem:[#allocation7 + $0x418] sm:$0xff]
    %v1247 = vld [vmem:[#allocation7 + $0x420] sm:$0xff]
    %v1248 = vld [vmem:[#allocation7 + $0x428] sm:$0xff]
    %v1249 = vld [vmem:[#allocation7 + $0x430] sm:$0xff]
    %v1250 = vld [vmem:[#allocation7 + $0x438] sm:$0xff]
    %v1251 = vld [vmem:[#allocation7 + $0x440] sm:$0xff]
    %v1252 = vld [vmem:[#allocation7 + $0x448] sm:$0xff]
    %v1253 = vld [vmem:[#allocation7 + $0x450] sm:$0xff]
    %v1254 = vld [vmem:[#allocation7 + $0x458] sm:$0xff]
    %v1255 = vld [vmem:[#allocation7 + $0x460] sm:$0xff]
    %v1256 = vld [vmem:[#allocation7 + $0x468] sm:$0xff]
    %v1257 = vld [vmem:[#allocation7 + $0x470] sm:$0xff]
    %v1258 = vld [vmem:[#allocation7 + $0x478] sm:$0xff]
    %v1259 = vld [vmem:[#allocation7 + $0x480] sm:$0xff]
    %v1260 = vld [vmem:[#allocation7 + $0x488] sm:$0xff]
    %v1261 = vld [vmem:[#allocation7 + $0x490] sm:$0xff]
    %v1262 = vld [vmem:[#allocation7 + $0x498] sm:$0xff]
    %v1263 = vld [vmem:[#allocation7 + $0x4a0] sm:$0xff]
    %v1264 = vld [vmem:[#allocation7 + $0x4a8] sm:$0xff]
    %v1265 = vld [vmem:[#allocation7 + $0x4b0] sm:$0xff]
    %v1266 = vld [vmem:[#allocation7 + $0x4b8] sm:$0xff]
    %v1267 = vld [vmem:[#allocation7 + $0x4c0] sm:$0xff]
    %v1268 = vld [vmem:[#allocation7 + $0x4c8] sm:$0xff]
    %v1269 = vld [vmem:[#allocation7 + $0x4d0] sm:$0xff]
    %v1270 = vld [vmem:[#allocation7 + $0x4d8] sm:$0xff]
    %v1271 = vld [vmem:[#allocation7 + $0x4e0] sm:$0xff]
    %v1272 = vld [vmem:[#allocation7 + $0x4e8] sm:$0xff]
    %v1273 = vld [vmem:[#allocation7 + $0x4f0] sm:$0xff]
    %v1274 = vld [vmem:[#allocation7 + $0x4f8] sm:$0xff]
    %v1275 = vld [vmem:[#allocation7 + $0x500] sm:$0xff]
    %v1276 = vld [vmem:[#allocation7 + $0x508] sm:$0xff]
    %v1277 = vld [vmem:[#allocation7 + $0x510] sm:$0xff]
    %v1278 = vld [vmem:[#allocation7 + $0x518] sm:$0xff]
    %v1279 = vld [vmem:[#allocation7 + $0x520] sm:$0xff]
    %v1280 = vld [vmem:[#allocation7 + $0x528] sm:$0xff]
    %v1281 = vld [vmem:[#allocation7 + $0x530] sm:$0xff]
    %v1282 = vld [vmem:[#allocation7 + $0x538] sm:$0xff]
    %v1283 = vld [vmem:[#allocation7 + $0x540] sm:$0xff]
    %v1284 = vld [vmem:[#allocation7 + $0x548] sm:$0xff]
    %v1285 = vld [vmem:[#allocation7 + $0x550] sm:$0xff]
    %v1286 = vld [vmem:[#allocation7 + $0x558] sm:$0xff]
    %v1287 = vld [vmem:[#allocation7 + $0x560] sm:$0xff]
    %v1288 = vld [vmem:[#allocation7 + $0x568] sm:$0xff]
    %v1289 = vld [vmem:[#allocation7 + $0x570] sm:$0xff]
    %v1290 = vld [vmem:[#allocation7 + $0x578] sm:$0xff]
    %v1291 = vld [vmem:[#allocation7 + $0x580] sm:$0xff]
    %v1292 = vld [vmem:[#allocation7 + $0x588] sm:$0xff]
    %v1293 = vld [vmem:[#allocation7 + $0x590] sm:$0xff]
    %v1294 = vld [vmem:[#allocation7 + $0x598] sm:$0xff]
    %v1295 = vld [vmem:[#allocation7 + $0x5a0] sm:$0xff]
    %v1296 = vld [vmem:[#allocation7 + $0x5a8] sm:$0xff]
    %v1297 = vld [vmem:[#allocation7 + $0x5b0] sm:$0xff]
    %v1298 = vld [vmem:[#allocation7 + $0x5b8] sm:$0xff]
    %v1299 = vld [vmem:[#allocation7 + $0x5c0] sm:$0xff]
    %v1300 = vld [vmem:[#allocation7 + $0x5c8] sm:$0xff]
    %v1301 = vld [vmem:[#allocation7 + $0x5d0] sm:$0xff]
    %v1302 = vld [vmem:[#allocation7 + $0x5d8] sm:$0xff]
    %v1303 = vld [vmem:[#allocation7 + $0x5e0] sm:$0xff]
    %v1304 = vld [vmem:[#allocation7 + $0x5e8] sm:$0xff]
    %v1305 = vld [vmem:[#allocation7 + $0x5f0] sm:$0xff]
    %v1306 = vld [vmem:[#allocation7 + $0x5f8] sm:$0xff]
    %v1307 = vld [vmem:[#allocation7 + $0x600] sm:$0xff]
    %v1308 = vld [vmem:[#allocation7 + $0x608] sm:$0xff]
    %v1309 = vld [vmem:[#allocation7 + $0x610] sm:$0xff]
    %v1310 = vld [vmem:[#allocation7 + $0x618] sm:$0xff]
    %v1311 = vld [vmem:[#allocation7 + $0x620] sm:$0xff]
    %v1312 = vld [vmem:[#allocation7 + $0x628] sm:$0xff]
    %v1313 = vld [vmem:[#allocation7 + $0x630] sm:$0xff]
    %v1314 = vld [vmem:[#allocation7 + $0x638] sm:$0xff]
    %v1315 = vld [vmem:[#allocation7 + $0x640] sm:$0xff]
    %v1316 = vld [vmem:[#allocation7 + $0x648] sm:$0xff]
    %v1317 = vld [vmem:[#allocation7 + $0x650] sm:$0xff]
    %v1318 = vld [vmem:[#allocation7 + $0x658] sm:$0xff]
    %v1319 = vld [vmem:[#allocation7 + $0x660] sm:$0xff]
    %v1320 = vld [vmem:[#allocation7 + $0x668] sm:$0xff]
    %v1321 = vld [vmem:[#allocation7 + $0x670] sm:$0xff]
    %v1322 = vld [vmem:[#allocation7 + $0x678] sm:$0xff]
    %v1323 = vld [vmem:[#allocation7 + $0x680] sm:$0xff]
    %v1324 = vld [vmem:[#allocation7 + $0x688] sm:$0xff]
    %v1325 = vld [vmem:[#allocation7 + $0x690] sm:$0xff]
    %v1326 = vld [vmem:[#allocation7 + $0x698] sm:$0xff]
    %v1327 = vld [vmem:[#allocation7 + $0x6a0] sm:$0xff]
    %v1328 = vld [vmem:[#allocation7 + $0x6a8] sm:$0xff]
    %v1329 = vld [vmem:[#allocation7 + $0x6b0] sm:$0xff]
    %v1330 = vld [vmem:[#allocation7 + $0x6b8] sm:$0xff]
    %v1331 = vld [vmem:[#allocation7 + $0x6c0] sm:$0xff]
    %v1332 = vld [vmem:[#allocation7 + $0x6c8] sm:$0xff]
    %v1333 = vld [vmem:[#allocation7 + $0x6d0] sm:$0xff]
    %v1334 = vld [vmem:[#allocation7 + $0x6d8] sm:$0xff]
    %v1335 = vld [vmem:[#allocation7 + $0x6e0] sm:$0xff]
    %v1336 = vld [vmem:[#allocation7 + $0x6e8] sm:$0xff]
    %v1337 = vld [vmem:[#allocation7 + $0x6f0] sm:$0xff]
    %v1338 = vld [vmem:[#allocation7 + $0x6f8] sm:$0xff]
    %v1339 = vld [vmem:[#allocation7 + $0x700] sm:$0xff]
    %v1340 = vld [vmem:[#allocation7 + $0x708] sm:$0xff]
    %v1341 = vld [vmem:[#allocation7 + $0x710] sm:$0xff]
    %v1342 = vld [vmem:[#allocation7 + $0x718] sm:$0xff]
    %v1343 = vld [vmem:[#allocation7 + $0x720] sm:$0xff]
    %v1344 = vld [vmem:[#allocation7 + $0x728] sm:$0xff]
    %v1345 = vld [vmem:[#allocation7 + $0x730] sm:$0xff]
    %v1346 = vld [vmem:[#allocation7 + $0x738] sm:$0xff]
    %v1347 = vld [vmem:[#allocation7 + $0x740] sm:$0xff]
    %v1348 = vld [vmem:[#allocation7 + $0x748] sm:$0xff]
    %v1349 = vld [vmem:[#allocation7 + $0x750] sm:$0xff]
    %v1350 = vld [vmem:[#allocation7 + $0x758] sm:$0xff]
    %v1351 = vld [vmem:[#allocation7 + $0x760] sm:$0xff]
    %v1352 = vld [vmem:[#allocation7 + $0x768] sm:$0xff]
    %v1353 = vld [vmem:[#allocation7 + $0x770] sm:$0xff]
    %v1354 = vld [vmem:[#allocation7 + $0x778] sm:$0xff]
    %v1355 = vld [vmem:[#allocation7 + $0x780] sm:$0xff]
    %v1356 = vld [vmem:[#allocation7 + $0x788] sm:$0xff]
    %v1357 = vld [vmem:[#allocation7 + $0x790] sm:$0xff]
    %v1358 = vld [vmem:[#allocation7 + $0x798] sm:$0xff]
    %v1359 = vld [vmem:[#allocation7 + $0x7a0] sm:$0xff]
    %v1360 = vld [vmem:[#allocation7 + $0x7a8] sm:$0xff]
    %v1361 = vld [vmem:[#allocation7 + $0x7b0] sm:$0xff]
    %v1362 = vld [vmem:[#allocation7 + $0x7b8] sm:$0xff]
    %v1363 = vld [vmem:[#allocation7 + $0x7c0] sm:$0xff]
    %v1364 = vld [vmem:[#allocation7 + $0x7c8] sm:$0xff]
    %v1365 = vld [vmem:[#allocation7 + $0x7d0] sm:$0xff]
    %v1366 = vld [vmem:[#allocation7 + $0x7d8] sm:$0xff]
    %v1367 = vld [vmem:[#allocation7 + $0x7e0] sm:$0xff]
    %v1368 = vld [vmem:[#allocation7 + $0x7e8] sm:$0xff]
    %v1369 = vld [vmem:[#allocation7 + $0x7f0] sm:$0xff]
    %v1370 = vld [vmem:[#allocation7 + $0x7f8] sm:$0xff]
    %v1371 = vld [vmem:[#allocation7 + $0x800] sm:$0xff]
    %v1372 = vld [vmem:[#allocation7 + $0x808] sm:$0xff]
    %v1373 = vld [vmem:[#allocation7 + $0x810] sm:$0xff]
    %v1374 = vld [vmem:[#allocation7 + $0x818] sm:$0xff]
    %v1375 = vld [vmem:[#allocation7 + $0x820] sm:$0xff]
    %v1376 = vld [vmem:[#allocation7 + $0x828] sm:$0xff]
    %v1377 = vld [vmem:[#allocation7 + $0x830] sm:$0xff]
    %v1378 = vld [vmem:[#allocation7 + $0x838] sm:$0xff]
    %v1379 = vld [vmem:[#allocation7 + $0x840] sm:$0xff]
    %v1380 = vld [vmem:[#allocation7 + $0x848] sm:$0xff]
    %v1381 = vld [vmem:[#allocation7 + $0x850] sm:$0xff]
    %v1382 = vld [vmem:[#allocation7 + $0x858] sm:$0xff]
    %v1383 = vld [vmem:[#allocation7 + $0x860] sm:$0xff]
    %v1384 = vld [vmem:[#allocation7 + $0x868] sm:$0xff]
    %v1385 = vld [vmem:[#allocation7 + $0x870] sm:$0xff]
    %v1386 = vld [vmem:[#allocation7 + $0x878] sm:$0xff]
    %v1387 = vld [vmem:[#allocation7 + $0x880] sm:$0xff]
    %v1388 = vld [vmem:[#allocation7 + $0x888] sm:$0xff]
    %v1389 = vld [vmem:[#allocation7 + $0x890] sm:$0xff]
    %v1390 = vld [vmem:[#allocation7 + $0x898] sm:$0xff]
    %v1391 = vld [vmem:[#allocation7 + $0x8a0] sm:$0xff]
    %v1392 = vld [vmem:[#allocation7 + $0x8a8] sm:$0xff]
    %v1393 = vld [vmem:[#allocation7 + $0x8b0] sm:$0xff]
    %v1394 = vld [vmem:[#allocation7 + $0x8b8] sm:$0xff]
    %v1395 = vld [vmem:[#allocation7 + $0x8c0] sm:$0xff]
    %v1396 = vld [vmem:[#allocation7 + $0x8c8] sm:$0xff]
    %v1397 = vld [vmem:[#allocation7 + $0x8d0] sm:$0xff]
    %v1398 = vld [vmem:[#allocation7 + $0x8d8] sm:$0xff]
    %v1399 = vld [vmem:[#allocation7 + $0x8e0] sm:$0xff]
    %v1400 = vld [vmem:[#allocation7 + $0x8e8] sm:$0xff]
    %v1401 = vld [vmem:[#allocation7 + $0x8f0] sm:$0xff]
    %v1402 = vld [vmem:[#allocation7 + $0x8f8] sm:$0xff]
    %v1403 = vld [vmem:[#allocation7 + $0x900] sm:$0xff]
    %v1404 = vld [vmem:[#allocation7 + $0x908] sm:$0xff]
    %v1405 = vld [vmem:[#allocation7 + $0x910] sm:$0xff]
    %v1406 = vld [vmem:[#allocation7 + $0x918] sm:$0xff]
    %v1407 = vld [vmem:[#allocation7 + $0x920] sm:$0xff]
    %v1408 = vld [vmem:[#allocation7 + $0x928] sm:$0xff]
    %v1409 = vld [vmem:[#allocation7 + $0x930] sm:$0xff]
    %v1410 = vld [vmem:[#allocation7 + $0x938] sm:$0xff]
    %v1411 = vld [vmem:[#allocation7 + $0x940] sm:$0xff]
    %v1412 = vld [vmem:[#allocation7 + $0x948] sm:$0xff]
    %v1413 = vld [vmem:[#allocation7 + $0x950] sm:$0xff]
    %v1414 = vld [vmem:[#allocation7 + $0x958] sm:$0xff]
    %v1415 = vld [vmem:[#allocation7 + $0x960] sm:$0xff]
    %v1416 = vld [vmem:[#allocation7 + $0x968] sm:$0xff]
    %v1417 = vld [vmem:[#allocation7 + $0x970] sm:$0xff]
    %v1418 = vld [vmem:[#allocation7 + $0x978] sm:$0xff]
    %v1419 = vld [vmem:[#allocation7 + $0x980] sm:$0xff]
    %v1420 = vld [vmem:[#allocation7 + $0x988] sm:$0xff]
    %v1421 = vld [vmem:[#allocation7 + $0x990] sm:$0xff]
    %v1422 = vld [vmem:[#allocation7 + $0x998] sm:$0xff]
    %v1423 = vld [vmem:[#allocation7 + $0x9a0] sm:$0xff]
    %v1424 = vld [vmem:[#allocation7 + $0x9a8] sm:$0xff]
    %v1425 = vld [vmem:[#allocation7 + $0x9b0] sm:$0xff]
    %v1426 = vld [vmem:[#allocation7 + $0x9b8] sm:$0xff]
    %v1427 = vld [vmem:[#allocation7 + $0x9c0] sm:$0xff]
    %v1428 = vld [vmem:[#allocation7 + $0x9c8] sm:$0xff]
    %v1429 = vld [vmem:[#allocation7 + $0x9d0] sm:$0xff]
    %v1430 = vld [vmem:[#allocation7 + $0x9d8] sm:$0xff]
    %v1431 = vld [vmem:[#allocation7 + $0x9e0] sm:$0xff]
    %v1432 = vld [vmem:[#allocation7 + $0x9e8] sm:$0xff]
    %v1433 = vld [vmem:[#allocation7 + $0x9f0] sm:$0xff]
    %v1434 = vld [vmem:[#allocation7 + $0x9f8] sm:$0xff]
    %v1435 = vld [vmem:[#allocation7 + $0xa00] sm:$0xff]
    %v1436 = vld [vmem:[#allocation7 + $0xa08] sm:$0xff]
    %v1437 = vld [vmem:[#allocation7 + $0xa10] sm:$0xff]
    %v1438 = vld [vmem:[#allocation7 + $0xa18] sm:$0xff]
    %v1439 = vld [vmem:[#allocation7 + $0xa20] sm:$0xff]
    %v1440 = vld [vmem:[#allocation7 + $0xa28] sm:$0xff]
    %v1441 = vld [vmem:[#allocation7 + $0xa30] sm:$0xff]
    %v1442 = vld [vmem:[#allocation7 + $0xa38] sm:$0xff]
    %v1443 = vld [vmem:[#allocation7 + $0xa40] sm:$0xff]
    %v1444 = vld [vmem:[#allocation7 + $0xa48] sm:$0xff]
    %v1445 = vld [vmem:[#allocation7 + $0xa50] sm:$0xff]
    %v1446 = vld [vmem:[#allocation7 + $0xa58] sm:$0xff]
    %v1447 = vld [vmem:[#allocation7 + $0xa60] sm:$0xff]
    %v1448 = vld [vmem:[#allocation7 + $0xa68] sm:$0xff]
    %v1449 = vld [vmem:[#allocation7 + $0xa70] sm:$0xff]
    %v1450 = vld [vmem:[#allocation7 + $0xa78] sm:$0xff]
    %v1451 = vld [vmem:[#allocation7 + $0xa80] sm:$0xff]
    %v1452 = vld [vmem:[#allocation7 + $0xa88] sm:$0xff]
    %v1453 = vld [vmem:[#allocation7 + $0xa90] sm:$0xff]
    %v1454 = vld [vmem:[#allocation7 + $0xa98] sm:$0xff]
    %v1455 = vld [vmem:[#allocation7 + $0xaa0] sm:$0xff]
    %v1456 = vld [vmem:[#allocation7 + $0xaa8] sm:$0xff]
    %v1457 = vld [vmem:[#allocation7 + $0xab0] sm:$0xff]
    %v1458 = vld [vmem:[#allocation7 + $0xab8] sm:$0xff]
    %v1459 = vld [vmem:[#allocation7 + $0xac0] sm:$0xff]
    %v1460 = vld [vmem:[#allocation7 + $0xac8] sm:$0xff]
    %v1461 = vld [vmem:[#allocation7 + $0xad0] sm:$0xff]
    %v1462 = vld [vmem:[#allocation7 + $0xad8] sm:$0xff]
    %v1463 = vld [vmem:[#allocation7 + $0xae0] sm:$0xff]
    %v1464 = vld [vmem:[#allocation7 + $0xae8] sm:$0xff]
    %v1465 = vld [vmem:[#allocation7 + $0xaf0] sm:$0xff]
    %v1466 = vld [vmem:[#allocation7 + $0xaf8] sm:$0xff]
    %v1467 = vld [vmem:[#allocation7 + $0xb00] sm:$0xff]
    %v1468 = vld [vmem:[#allocation7 + $0xb08] sm:$0xff]
    %v1469 = vld [vmem:[#allocation7 + $0xb10] sm:$0xff]
    %v1470 = vld [vmem:[#allocation7 + $0xb18] sm:$0xff]
    %v1471 = vld [vmem:[#allocation7 + $0xb20] sm:$0xff]
    %v1472 = vld [vmem:[#allocation7 + $0xb28] sm:$0xff]
    %v1473 = vld [vmem:[#allocation7 + $0xb30] sm:$0xff]
    %v1474 = vld [vmem:[#allocation7 + $0xb38] sm:$0xff]
    %v1475 = vld [vmem:[#allocation7 + $0xb40] sm:$0xff]
    %v1476 = vld [vmem:[#allocation7 + $0xb48] sm:$0xff]
    %v1477 = vld [vmem:[#allocation7 + $0xb50] sm:$0xff]
    %v1478 = vld [vmem:[#allocation7 + $0xb58] sm:$0xff]
    %v1479 = vld [vmem:[#allocation7 + $0xb60] sm:$0xff]
    %v1480 = vld [vmem:[#allocation7 + $0xb68] sm:$0xff]
    %v1481 = vld [vmem:[#allocation7 + $0xb70] sm:$0xff]
    %v1482 = vld [vmem:[#allocation7 + $0xb78] sm:$0xff]
    %v1483 = vld [vmem:[#allocation7 + $0xb80] sm:$0xff]
    %v1484 = vld [vmem:[#allocation7 + $0xb88] sm:$0xff]
    %v1485 = vld [vmem:[#allocation7 + $0xb90] sm:$0xff]
    %v1486 = vld [vmem:[#allocation7 + $0xb98] sm:$0xff]
    %v1487 = vld [vmem:[#allocation7 + $0xba0] sm:$0xff]
    %v1488 = vld [vmem:[#allocation7 + $0xba8] sm:$0xff]
    %v1489 = vld [vmem:[#allocation7 + $0xbb0] sm:$0xff]
    %v1490 = vld [vmem:[#allocation7 + $0xbb8] sm:$0xff]
    %v1491 = vld [vmem:[#allocation7 + $0xbc0] sm:$0xff]
    %v1492 = vld [vmem:[#allocation7 + $0xbc8] sm:$0xff]
    %v1493 = vld [vmem:[#allocation7 + $0xbd0] sm:$0xff]
    %v1494 = vld [vmem:[#allocation7 + $0xbd8] sm:$0xff]
    %v1495 = vld [vmem:[#allocation7 + $0xbe0] sm:$0xff]
    %v1496 = vld [vmem:[#allocation7 + $0xbe8] sm:$0xff]
    %v1497 = vld [vmem:[#allocation7 + $0xbf0] sm:$0xff]
    %v1498 = vld [vmem:[#allocation7 + $0xbf8] sm:$0xff]
    %v1499 = vld [vmem:[#allocation7 + $0xc00] sm:$0xff]
    %v1500 = vld [vmem:[#allocation7 + $0xc08] sm:$0xff]
    %v1501 = vld [vmem:[#allocation7 + $0xc10] sm:$0xff]
    %v1502 = vld [vmem:[#allocation7 + $0xc18] sm:$0xff]
    %v1503 = vld [vmem:[#allocation7 + $0xc20] sm:$0xff]
    %v1504 = vld [vmem:[#allocation7 + $0xc28] sm:$0xff]
    %v1505 = vld [vmem:[#allocation7 + $0xc30] sm:$0xff]
    %v1506 = vld [vmem:[#allocation7 + $0xc38] sm:$0xff]
    %v1507 = vld [vmem:[#allocation7 + $0xc40] sm:$0xff]
    %v1508 = vld [vmem:[#allocation7 + $0xc48] sm:$0xff]
    %v1509 = vld [vmem:[#allocation7 + $0xc50] sm:$0xff]
    %v1510 = vld [vmem:[#allocation7 + $0xc58] sm:$0xff]
    %v1511 = vld [vmem:[#allocation7 + $0xc60] sm:$0xff]
    %v1512 = vld [vmem:[#allocation7 + $0xc68] sm:$0xff]
    %v1513 = vld [vmem:[#allocation7 + $0xc70] sm:$0xff]
    %v1514 = vld [vmem:[#allocation7 + $0xc78] sm:$0xff]
    %v1515 = vld [vmem:[#allocation7 + $0xc80] sm:$0xff]
    %v1516 = vld [vmem:[#allocation7 + $0xc88] sm:$0xff]
    %v1517 = vld [vmem:[#allocation7 + $0xc90] sm:$0xff]
    %v1518 = vld [vmem:[#allocation7 + $0xc98] sm:$0xff]
    %v1519 = vld [vmem:[#allocation7 + $0xca0] sm:$0xff]
    %v1520 = vld [vmem:[#allocation7 + $0xca8] sm:$0xff]
    %v1521 = vld [vmem:[#allocation7 + $0xcb0] sm:$0xff]
    %v1522 = vld [vmem:[#allocation7 + $0xcb8] sm:$0xff]
    %v1523 = vld [vmem:[#allocation7 + $0xcc0] sm:$0xff]
    %v1524 = vld [vmem:[#allocation7 + $0xcc8] sm:$0xff]
    %v1525 = vld [vmem:[#allocation7 + $0xcd0] sm:$0xff]
    %v1526 = vld [vmem:[#allocation7 + $0xcd8] sm:$0xff]
    %v1527 = vld [vmem:[#allocation7 + $0xce0] sm:$0xff]
    %v1528 = vld [vmem:[#allocation7 + $0xce8] sm:$0xff]
    %v1529 = vld [vmem:[#allocation7 + $0xcf0] sm:$0xff]
    %v1530 = vld [vmem:[#allocation7 + $0xcf8] sm:$0xff]
    %v1531 = vld [vmem:[#allocation7 + $0xd00] sm:$0xff]
    %v1532 = vld [vmem:[#allocation7 + $0xd08] sm:$0xff]
    %v1533 = vld [vmem:[#allocation7 + $0xd10] sm:$0xff]
    %v1534 = vld [vmem:[#allocation7 + $0xd18] sm:$0xff]
    %v1535 = vld [vmem:[#allocation7 + $0xd20] sm:$0xff]
    %v1536 = vld [vmem:[#allocation7 + $0xd28] sm:$0xff]
    %v1537 = vld [vmem:[#allocation7 + $0xd30] sm:$0xff]
    %v1538 = vld [vmem:[#allocation7 + $0xd38] sm:$0xff]
    %v1539 = vld [vmem:[#allocation7 + $0xd40] sm:$0xff]
    %v1540 = vld [vmem:[#allocation7 + $0xd48] sm:$0xff]
    %v1541 = vld [vmem:[#allocation7 + $0xd50] sm:$0xff]
    %v1542 = vld [vmem:[#allocation7 + $0xd58] sm:$0xff]
    %v1543 = vld [vmem:[#allocation7 + $0xd60] sm:$0xff]
    %v1544 = vld [vmem:[#allocation7 + $0xd68] sm:$0xff]
    %v1545 = vld [vmem:[#allocation7 + $0xd70] sm:$0xff]
    %v1546 = vld [vmem:[#allocation7 + $0xd78] sm:$0xff]
    %v1547 = vld [vmem:[#allocation7 + $0xd80] sm:$0xff]
    %v1548 = vld [vmem:[#allocation7 + $0xd88] sm:$0xff]
    %v1549 = vld [vmem:[#allocation7 + $0xd90] sm:$0xff]
    %v1550 = vld [vmem:[#allocation7 + $0xd98] sm:$0xff]
    %v1551 = vld [vmem:[#allocation7 + $0xda0] sm:$0xff]
    %v1552 = vld [vmem:[#allocation7 + $0xda8] sm:$0xff]
    %v1553 = vld [vmem:[#allocation7 + $0xdb0] sm:$0xff]
    %v1554 = vld [vmem:[#allocation7 + $0xdb8] sm:$0xff]
    %v1555 = vld [vmem:[#allocation7 + $0xdc0] sm:$0xff]
    %v1556 = vld [vmem:[#allocation7 + $0xdc8] sm:$0xff]
    %v1557 = vld [vmem:[#allocation7 + $0xdd0] sm:$0xff]
    %v1558 = vld [vmem:[#allocation7 + $0xdd8] sm:$0xff]
    %v1559 = vld [vmem:[#allocation7 + $0xde0] sm:$0xff]
    %v1560 = vld [vmem:[#allocation7 + $0xde8] sm:$0xff]
    %v1561 = vld [vmem:[#allocation7 + $0xdf0] sm:$0xff]
    %v1562 = vld [vmem:[#allocation7 + $0xdf8] sm:$0xff]
    %v1563 = vld [vmem:[#allocation7 + $0xe00] sm:$0xff]
    %v1564 = vld [vmem:[#allocation7 + $0xe08] sm:$0xff]
    %v1565 = vld [vmem:[#allocation7 + $0xe10] sm:$0xff]
    %v1566 = vld [vmem:[#allocation7 + $0xe18] sm:$0xff]
    %v1567 = vld [vmem:[#allocation7 + $0xe20] sm:$0xff]
    %v1568 = vld [vmem:[#allocation7 + $0xe28] sm:$0xff]
    %v1569 = vld [vmem:[#allocation7 + $0xe30] sm:$0xff]
    %v1570 = vld [vmem:[#allocation7 + $0xe38] sm:$0xff]
    %v1571 = vld [vmem:[#allocation7 + $0xe40] sm:$0xff]
    %v1572 = vld [vmem:[#allocation7 + $0xe48] sm:$0xff]
    %v1573 = vld [vmem:[#allocation7 + $0xe50] sm:$0xff]
    %v1574 = vld [vmem:[#allocation7 + $0xe58] sm:$0xff]
    %v1575 = vld [vmem:[#allocation7 + $0xe60] sm:$0xff]
    %v1576 = vld [vmem:[#allocation7 + $0xe68] sm:$0xff]
    %v1577 = vld [vmem:[#allocation7 + $0xe70] sm:$0xff]
    %v1578 = vld [vmem:[#allocation7 + $0xe78] sm:$0xff]
    %v1579 = vld [vmem:[#allocation7 + $0xe80] sm:$0xff]
    %v1580 = vld [vmem:[#allocation7 + $0xe88] sm:$0xff]
    %v1581 = vld [vmem:[#allocation7 + $0xe90] sm:$0xff]
    %v1582 = vld [vmem:[#allocation7 + $0xe98] sm:$0xff]
    %v1583 = vld [vmem:[#allocation7 + $0xea0] sm:$0xff]
    %v1584 = vld [vmem:[#allocation7 + $0xea8] sm:$0xff]
    %v1585 = vld [vmem:[#allocation7 + $0xeb0] sm:$0xff]
    %v1586 = vld [vmem:[#allocation7 + $0xeb8] sm:$0xff]
    %v1587 = vld [vmem:[#allocation7 + $0xec0] sm:$0xff]
    %v1588 = vld [vmem:[#allocation7 + $0xec8] sm:$0xff]
    %v1589 = vld [vmem:[#allocation7 + $0xed0] sm:$0xff]
    %v1590 = vld [vmem:[#allocation7 + $0xed8] sm:$0xff]
    %v1591 = vld [vmem:[#allocation7 + $0xee0] sm:$0xff]
    %v1592 = vld [vmem:[#allocation7 + $0xee8] sm:$0xff]
    %v1593 = vld [vmem:[#allocation7 + $0xef0] sm:$0xff]
    %v1594 = vld [vmem:[#allocation7 + $0xef8] sm:$0xff]
    %v1595 = vld [vmem:[#allocation7 + $0xf00] sm:$0xff]
    %v1596 = vld [vmem:[#allocation7 + $0xf08] sm:$0xff]
    %v1597 = vld [vmem:[#allocation7 + $0xf10] sm:$0xff]
    %v1598 = vld [vmem:[#allocation7 + $0xf18] sm:$0xff]
    %v1599 = vld [vmem:[#allocation7 + $0xf20] sm:$0xff]
    %v1600 = vld [vmem:[#allocation7 + $0xf28] sm:$0xff]
    %v1601 = vld [vmem:[#allocation7 + $0xf30] sm:$0xff]
    %v1602 = vld [vmem:[#allocation7 + $0xf38] sm:$0xff]
    %v1603 = vld [vmem:[#allocation7 + $0xf40] sm:$0xff]
    %v1604 = vld [vmem:[#allocation7 + $0xf48] sm:$0xff]
    %v1605 = vld [vmem:[#allocation7 + $0xf50] sm:$0xff]
    %v1606 = vld [vmem:[#allocation7 + $0xf58] sm:$0xff]
    %v1607 = vld [vmem:[#allocation7 + $0xf60] sm:$0xff]
    %v1608 = vld [vmem:[#allocation7 + $0xf68] sm:$0xff]
    %v1609 = vld [vmem:[#allocation7 + $0xf70] sm:$0xff]
    %v1610 = vld [vmem:[#allocation7 + $0xf78] sm:$0xff]
    %v1611 = vld [vmem:[#allocation7 + $0xf80] sm:$0xff]
    %v1612 = vld [vmem:[#allocation7 + $0xf88] sm:$0xff]
    %v1613 = vld [vmem:[#allocation7 + $0xf90] sm:$0xff]
    %v1614 = vld [vmem:[#allocation7 + $0xf98] sm:$0xff]
    %v1615 = vld [vmem:[#allocation7 + $0xfa0] sm:$0xff]
    %v1616 = vld [vmem:[#allocation7 + $0xfa8] sm:$0xff]
    %v1617 = vld [vmem:[#allocation7 + $0xfb0] sm:$0xff]
    %v1618 = vld [vmem:[#allocation7 + $0xfb8] sm:$0xff]
    %v1619 = vld [vmem:[#allocation7 + $0xfc0] sm:$0xff]
    %v1620 = vld [vmem:[#allocation7 + $0xfc8] sm:$0xff]
    %v1621 = vld [vmem:[#allocation7 + $0xfd0] sm:$0xff]
    %v1622 = vld [vmem:[#allocation7 + $0xfd8] sm:$0xff]
    %v1623 = vld [vmem:[#allocation7 + $0xfe0] sm:$0xff]
    %v1624 = vld [vmem:[#allocation7 + $0xfe8] sm:$0xff]
    %v1625 = vld [vmem:[#allocation7 + $0xff0] sm:$0xff]
    %v1626 = vld [vmem:[#allocation7 + $0xff8] sm:$0xff]
    %v1627 = vld [vmem:[#allocation9] sm:$0xff]
    %v1629 = vlaneseq
    %v1630 = vshrl.u32 %v1629, 7
    %v1631 = vsub.s32 0, %v1630
    %v1632 = vrot.slane %v1627, %v1631
    %v1633 = vlaneseq
    %v1634 = vshrl.u32 %v1633, 7
    %v1635 = vsub.s32 1, %v1634
    %v1636 = vrot.slane %v1627, %v1635
    %v1637 = vlaneseq
    %v1638 = vshrl.u32 %v1637, 7
    %v1639 = vsub.s32 2, %v1638
    %v1640 = vrot.slane %v1627, %v1639
    %v1641 = vlaneseq
    %v1642 = vshrl.u32 %v1641, 7
    %v1643 = vsub.s32 3, %v1642
    %v1644 = vrot.slane %v1627, %v1643
    %v1645 = vlaneseq
    %v1646 = vshrl.u32 %v1645, 7
    %v1647 = vsub.s32 4, %v1646
    %v1648 = vrot.slane %v1627, %v1647
    %v1649 = vlaneseq
    %v1650 = vshrl.u32 %v1649, 7
    %v1651 = vsub.s32 5, %v1650
    %v1652 = vrot.slane %v1627, %v1651
    %v1653 = vlaneseq
    %v1654 = vshrl.u32 %v1653, 7
    %v1655 = vsub.s32 6, %v1654
    %v1656 = vrot.slane %v1627, %v1655
    %v1657 = vlaneseq
    %v1658 = vshrl.u32 %v1657, 7
    %v1659 = vsub.s32 7, %v1658
    %v1660 = vrot.slane %v1627, %v1659
    %1669 = vmatprep.subr.mxu0 %v1236
    %1670 = vmatpush1.msra.mxu0 %v1235
    %1671 = vmatprep.subr.mxu0 %v1228
    %1672 = vmatpush1.msra.mxu0 %v1227
    %1673 = vmatprep.subr.mxu0 %v1220
    %1674 = vmatpush1.msra.mxu0 %v1219
    %1675 = vmatprep.subr.mxu0 %v1212
    %1676 = vmatpush1.msra.mxu0 %v1211
    %1677 = vmatprep.subr.mxu0 %v1204
    %1678 = vmatpush1.msra.mxu0 %v1203
    %1679 = vmatprep.subr.mxu0 %v1196
    %1680 = vmatpush1.msra.mxu0 %v1195
    %1681 = vmatprep.subr.mxu0 %v1188
    %1682 = vmatpush1.msra.mxu0 %v1187
    %1683 = vmatprep.subr.mxu0 %v1180
    %1684 = vmatpush1.msra.mxu0 %v1179
    %1685 = vmatprep.subr.mxu0 %v1172
    %1686 = vmatpush1.msra.mxu0 %v1171
    %1687 = vmatprep.subr.mxu0 %v1164
    %1688 = vmatpush1.msra.mxu0 %v1163
    %1689 = vmatprep.subr.mxu0 %v1156
    %1690 = vmatpush1.msra.mxu0 %v1155
    %1691 = vmatprep.subr.mxu0 %v1148
    %1692 = vmatpush1.msra.mxu0 %v1147
    %1693 = vmatprep.subr.mxu0 %v1140
    %1694 = vmatpush1.msra.mxu0 %v1139
    %1695 = vmatprep.subr.mxu0 %v1132
    %1696 = vmatpush1.msra.mxu0 %v1131
    %1697 = vmatprep.subr.mxu0 %v1124
    %1698 = vmatpush1.msra.mxu0 %v1123
    %1699 = vmatprep.subr.mxu0 %v1116
    %1700 = vmatpush1.msra.mxu0 %v1115
    %1701 = vmatprep.subr.mxu0 %v1364
    %1702 = vmatpush2.msra.mxu0 %v1363
    %1703 = vmatprep.subr.mxu0 %v1356
    %1704 = vmatpush2.msra.mxu0 %v1355
    %1705 = vmatprep.subr.mxu0 %v1348
    %1706 = vmatpush2.msra.mxu0 %v1347
    %1707 = vmatprep.subr.mxu0 %v1340
    %1708 = vmatpush2.msra.mxu0 %v1339
    %1709 = vmatprep.subr.mxu0 %v1332
    %1710 = vmatpush2.msra.mxu0 %v1331
    %1711 = vmatprep.subr.mxu0 %v1324
    %1712 = vmatpush2.msra.mxu0 %v1323
    %1713 = vmatprep.subr.mxu0 %v1316
    %1714 = vmatpush2.msra.mxu0 %v1315
    %1715 = vmatprep.subr.mxu0 %v1308
    %1716 = vmatpush2.msra.mxu0 %v1307
    %1717 = vmatprep.subr.mxu0 %v1300
    %1718 = vmatpush2.msra.mxu0 %v1299
    %1719 = vmatprep.subr.mxu0 %v1292
    %1720 = vmatpush2.msra.mxu0 %v1291
    %1721 = vmatprep.subr.mxu0 %v1284
    %1722 = vmatpush2.msra.mxu0 %v1283
    %1723 = vmatprep.subr.mxu0 %v1276
    %1724 = vmatpush2.msra.mxu0 %v1275
    %1725 = vmatprep.subr.mxu0 %v1268
    %1726 = vmatpush2.msra.mxu0 %v1267
    %1727 = vmatprep.subr.mxu0 %v1260
    %1728 = vmatpush2.msra.mxu0 %v1259
    %1729 = vmatprep.subr.mxu0 %v1252
    %1730 = vmatpush2.msra.mxu0 %v1251
    %1731 = vmatprep.subr.mxu0 %v1244
    %1732 = vmatpush2.msra.mxu0 %v1243
    %1733 = vmatprep.mubr.f32.mxu0 %v1112
    %1734 = vmatmul.mubr.f32.gmra.mxu0 %v1111
    %v1735 = vpop.f32.mrf.mxu0
    %v1736 = vadd.f32 %v1632, %v1735
    %v1737 = vpop.f32.mrf.mxu0
    %v1738 = vadd.f32 %v1636, %v1737
    %1739 = vdwg.mxu0
    %1740 = vmatprep.subr.mxu0 %v1492
    %1741 = vmatpush1.msra.mxu0 %v1491
    %1742 = vmatprep.subr.mxu0 %v1484
    %1743 = vmatpush1.msra.mxu0 %v1483
    %1744 = vmatprep.subr.mxu0 %v1476
    %1745 = vmatpush1.msra.mxu0 %v1475
    %1746 = vmatprep.subr.mxu0 %v1468
    %1747 = vmatpush1.msra.mxu0 %v1467
    %1748 = vmatprep.subr.mxu0 %v1460
    %1749 = vmatpush1.msra.mxu0 %v1459
    %1750 = vmatprep.subr.mxu0 %v1452
    %1751 = vmatpush1.msra.mxu0 %v1451
    %1752 = vmatprep.subr.mxu0 %v1444
    %1753 = vmatpush1.msra.mxu0 %v1443
    %1754 = vmatprep.subr.mxu0 %v1436
    %1755 = vmatpush1.msra.mxu0 %v1435
    %1756 = vmatprep.subr.mxu0 %v1428
    %1757 = vmatpush1.msra.mxu0 %v1427
    %1758 = vmatprep.subr.mxu0 %v1420
    %1759 = vmatpush1.msra.mxu0 %v1419
    %1760 = vmatprep.subr.mxu0 %v1412
    %1761 = vmatpush1.msra.mxu0 %v1411
    %1762 = vmatprep.subr.mxu0 %v1404
    %1763 = vmatpush1.msra.mxu0 %v1403
    %1764 = vmatprep.subr.mxu0 %v1396
    %1765 = vmatpush1.msra.mxu0 %v1395
    %1766 = vmatprep.subr.mxu0 %v1388
    %1767 = vmatpush1.msra.mxu0 %v1387
    %1768 = vmatprep.subr.mxu0 %v1380
    %1769 = vmatpush1.msra.mxu0 %v1379
    %1770 = vmatprep.subr.mxu0 %v1372
    %1771 = vmatpush1.msra.mxu0 %v1371
    %1772 = vmatprep.subr.mxu0 %v1620
    %1773 = vmatpush2.msra.mxu0 %v1619
    %1774 = vmatprep.subr.mxu0 %v1612
    %1775 = vmatpush2.msra.mxu0 %v1611
    %1776 = vmatprep.subr.mxu0 %v1604
    %1777 = vmatpush2.msra.mxu0 %v1603
    %1778 = vmatprep.subr.mxu0 %v1596
    %1779 = vmatpush2.msra.mxu0 %v1595
    %1780 = vmatprep.subr.mxu0 %v1588
    %1781 = vmatpush2.msra.mxu0 %v1587
    %1782 = vmatprep.subr.mxu0 %v1580
    %1783 = vmatpush2.msra.mxu0 %v1579
    %1784 = vmatprep.subr.mxu0 %v1572
    %1785 = vmatpush2.msra.mxu0 %v1571
    %1786 = vmatprep.subr.mxu0 %v1564
    %1787 = vmatpush2.msra.mxu0 %v1563
    %1788 = vmatprep.subr.mxu0 %v1556
    %1789 = vmatpush2.msra.mxu0 %v1555
    %1790 = vmatprep.subr.mxu0 %v1548
    %1791 = vmatpush2.msra.mxu0 %v1547
    %1792 = vmatprep.subr.mxu0 %v1540
    %1793 = vmatpush2.msra.mxu0 %v1539
    %1794 = vmatprep.subr.mxu0 %v1532
    %1795 = vmatpush2.msra.mxu0 %v1531
    %1796 = vmatprep.subr.mxu0 %v1524
    %1797 = vmatpush2.msra.mxu0 %v1523
    %1798 = vmatprep.subr.mxu0 %v1516
    %1799 = vmatpush2.msra.mxu0 %v1515
    %1800 = vmatprep.subr.mxu0 %v1508
    %1801 = vmatpush2.msra.mxu0 %v1507
    %1802 = vmatprep.subr.mxu0 %v1500
    %1803 = vmatpush2.msra.mxu0 %v1499
    %1804 = vmatprep.mubr.f32.mxu0 %v1114
    %1805 = vmatmul.mubr.f32.gmra.mxu0 %v1113
    %v1806 = vpop.f32.mrf.mxu0
    %v1807 = vadd.f32 %v1736, %v1806
    %v1808 = vpop.f32.mrf.mxu0
    %v1809 = vadd.f32 %v1738, %v1808
    %1810 = vdwg.mxu0
    %1811 = vmatprep.subr.mxu0 %v1238
    %1812 = vmatpush1.msra.mxu0 %v1237
    %1813 = vmatprep.subr.mxu0 %v1230
    %1814 = vmatpush1.msra.mxu0 %v1229
    %1815 = vmatprep.subr.mxu0 %v1222
    %1816 = vmatpush1.msra.mxu0 %v1221
    %1817 = vmatprep.subr.mxu0 %v1214
    %1818 = vmatpush1.msra.mxu0 %v1213
    %1819 = vmatprep.subr.mxu0 %v1206
    %1820 = vmatpush1.msra.mxu0 %v1205
    %1821 = vmatprep.subr.mxu0 %v1198
    %1822 = vmatpush1.msra.mxu0 %v1197
    %1823 = vmatprep.subr.mxu0 %v1190
    %1824 = vmatpush1.msra.mxu0 %v1189
    %1825 = vmatprep.subr.mxu0 %v1182
    %1826 = vmatpush1.msra.mxu0 %v1181
    %1827 = vmatprep.subr.mxu0 %v1174
    %1828 = vmatpush1.msra.mxu0 %v1173
    %1829 = vmatprep.subr.mxu0 %v1166
    %1830 = vmatpush1.msra.mxu0 %v1165
    %1831 = vmatprep.subr.mxu0 %v1158
    %1832 = vmatpush1.msra.mxu0 %v1157
    %1833 = vmatprep.subr.mxu0 %v1150
    %1834 = vmatpush1.msra.mxu0 %v1149
    %1835 = vmatprep.subr.mxu0 %v1142
    %1836 = vmatpush1.msra.mxu0 %v1141
    %1837 = vmatprep.subr.mxu0 %v1134
    %1838 = vmatpush1.msra.mxu0 %v1133
    %1839 = vmatprep.subr.mxu0 %v1126
    %1840 = vmatpush1.msra.mxu0 %v1125
    %1841 = vmatprep.subr.mxu0 %v1118
    %1842 = vmatpush1.msra.mxu0 %v1117
    %1843 = vmatprep.subr.mxu0 %v1366
    %1844 = vmatpush2.msra.mxu0 %v1365
    %1845 = vmatprep.subr.mxu0 %v1358
    %1846 = vmatpush2.msra.mxu0 %v1357
    %1847 = vmatprep.subr.mxu0 %v1350
    %1848 = vmatpush2.msra.mxu0 %v1349
    %1849 = vmatprep.subr.mxu0 %v1342
    %1850 = vmatpush2.msra.mxu0 %v1341
    %1851 = vmatprep.subr.mxu0 %v1334
    %1852 = vmatpush2.msra.mxu0 %v1333
    %1853 = vmatprep.subr.mxu0 %v1326
    %1854 = vmatpush2.msra.mxu0 %v1325
    %1855 = vmatprep.subr.mxu0 %v1318
    %1856 = vmatpush2.msra.mxu0 %v1317
    %1857 = vmatprep.subr.mxu0 %v1310
    %1858 = vmatpush2.msra.mxu0 %v1309
    %1859 = vmatprep.subr.mxu0 %v1302
    %1860 = vmatpush2.msra.mxu0 %v1301
    %1861 = vmatprep.subr.mxu0 %v1294
    %1862 = vmatpush2.msra.mxu0 %v1293
    %1863 = vmatprep.subr.mxu0 %v1286
    %1864 = vmatpush2.msra.mxu0 %v1285
    %1865 = vmatprep.subr.mxu0 %v1278
    %1866 = vmatpush2.msra.mxu0 %v1277
    %1867 = vmatprep.subr.mxu0 %v1270
    %1868 = vmatpush2.msra.mxu0 %v1269
    %1869 = vmatprep.subr.mxu0 %v1262
    %1870 = vmatpush2.msra.mxu0 %v1261
    %1871 = vmatprep.subr.mxu0 %v1254
    %1872 = vmatpush2.msra.mxu0 %v1253
    %1873 = vmatprep.subr.mxu0 %v1246
    %1874 = vmatpush2.msra.mxu0 %v1245
    %1875 = vmatprep.mubr.f32.mxu0 %v1112
    %1876 = vmatmul.mubr.f32.gmra.mxu0 %v1111
    %v1877 = vpop.f32.mrf.mxu0
    %v1878 = vadd.f32 %v1640, %v1877
    %v1879 = vpop.f32.mrf.mxu0
    %v1880 = vadd.f32 %v1644, %v1879
    %1881 = vdwg.mxu0
    %1882 = vmatprep.subr.mxu0 %v1494
    %1883 = vmatpush1.msra.mxu0 %v1493
    %1884 = vmatprep.subr.mxu0 %v1486
    %1885 = vmatpush1.msra.mxu0 %v1485
    %1886 = vmatprep.subr.mxu0 %v1478
    %1887 = vmatpush1.msra.mxu0 %v1477
    %1888 = vmatprep.subr.mxu0 %v1470
    %1889 = vmatpush1.msra.mxu0 %v1469
    %1890 = vmatprep.subr.mxu0 %v1462
    %1891 = vmatpush1.msra.mxu0 %v1461
    %1892 = vmatprep.subr.mxu0 %v1454
    %1893 = vmatpush1.msra.mxu0 %v1453
    %1894 = vmatprep.subr.mxu0 %v1446
    %1895 = vmatpush1.msra.mxu0 %v1445
    %1896 = vmatprep.subr.mxu0 %v1438
    %1897 = vmatpush1.msra.mxu0 %v1437
    %1898 = vmatprep.subr.mxu0 %v1430
    %1899 = vmatpush1.msra.mxu0 %v1429
    %1900 = vmatprep.subr.mxu0 %v1422
    %1901 = vmatpush1.msra.mxu0 %v1421
    %1902 = vmatprep.subr.mxu0 %v1414
    %1903 = vmatpush1.msra.mxu0 %v1413
    %1904 = vmatprep.subr.mxu0 %v1406
    %1905 = vmatpush1.msra.mxu0 %v1405
    %1906 = vmatprep.subr.mxu0 %v1398
    %1907 = vmatpush1.msra.mxu0 %v1397
    %1908 = vmatprep.subr.mxu0 %v1390
    %1909 = vmatpush1.msra.mxu0 %v1389
    %1910 = vmatprep.subr.mxu0 %v1382
    %1911 = vmatpush1.msra.mxu0 %v1381
    %1912 = vmatprep.subr.mxu0 %v1374
    %1913 = vmatpush1.msra.mxu0 %v1373
    %1914 = vmatprep.subr.mxu0 %v1622
    %1915 = vmatpush2.msra.mxu0 %v1621
    %1916 = vmatprep.subr.mxu0 %v1614
    %1917 = vmatpush2.msra.mxu0 %v1613
    %1918 = vmatprep.subr.mxu0 %v1606
    %1919 = vmatpush2.msra.mxu0 %v1605
    %1920 = vmatprep.subr.mxu0 %v1598
    %1921 = vmatpush2.msra.mxu0 %v1597
    %1922 = vmatprep.subr.mxu0 %v1590
    %1923 = vmatpush2.msra.mxu0 %v1589
    %1924 = vmatprep.subr.mxu0 %v1582
    %1925 = vmatpush2.msra.mxu0 %v1581
    %1926 = vmatprep.subr.mxu0 %v1574
    %1927 = vmatpush2.msra.mxu0 %v1573
    %1928 = vmatprep.subr.mxu0 %v1566
    %1929 = vmatpush2.msra.mxu0 %v1565
    %1930 = vmatprep.subr.mxu0 %v1558
    %1931 = vmatpush2.msra.mxu0 %v1557
    %1932 = vmatprep.subr.mxu0 %v1550
    %1933 = vmatpush2.msra.mxu0 %v1549
    %1934 = vmatprep.subr.mxu0 %v1542
    %1935 = vmatpush2.msra.mxu0 %v1541
    %1936 = vmatprep.subr.mxu0 %v1534
    %1937 = vmatpush2.msra.mxu0 %v1533
    %1938 = vmatprep.subr.mxu0 %v1526
    %1939 = vmatpush2.msra.mxu0 %v1525
    %1940 = vmatprep.subr.mxu0 %v1518
    %1941 = vmatpush2.msra.mxu0 %v1517
    %1942 = vmatprep.subr.mxu0 %v1510
    %1943 = vmatpush2.msra.mxu0 %v1509
    %1944 = vmatprep.subr.mxu0 %v1502
    %1945 = vmatpush2.msra.mxu0 %v1501
    %1946 = vmatprep.mubr.f32.mxu0 %v1114
    %1947 = vmatmul.mubr.f32.gmra.mxu0 %v1113
    %v1948 = vpop.f32.mrf.mxu0
    %v1949 = vadd.f32 %v1878, %v1948
    %v1950 = vpop.f32.mrf.mxu0
    %v1951 = vadd.f32 %v1880, %v1950
    %1952 = vdwg.mxu0
    %1953 = vmatprep.subr.mxu0 %v1240
    %1954 = vmatpush1.msra.mxu0 %v1239
    %1955 = vmatprep.subr.mxu0 %v1232
    %1956 = vmatpush1.msra.mxu0 %v1231
    %1957 = vmatprep.subr.mxu0 %v1224
    %1958 = vmatpush1.msra.mxu0 %v1223
    %1959 = vmatprep.subr.mxu0 %v1216
    %1960 = vmatpush1.msra.mxu0 %v1215
    %1961 = vmatprep.subr.mxu0 %v1208
    %1962 = vmatpush1.msra.mxu0 %v1207
    %1963 = vmatprep.subr.mxu0 %v1200
    %1964 = vmatpush1.msra.mxu0 %v1199
    %1965 = vmatprep.subr.mxu0 %v1192
    %1966 = vmatpush1.msra.mxu0 %v1191
    %1967 = vmatprep.subr.mxu0 %v1184
    %1968 = vmatpush1.msra.mxu0 %v1183
    %1969 = vmatprep.subr.mxu0 %v1176
    %1970 = vmatpush1.msra.mxu0 %v1175
    %1971 = vmatprep.subr.mxu0 %v1168
    %1972 = vmatpush1.msra.mxu0 %v1167
    %1973 = vmatprep.subr.mxu0 %v1160
    %1974 = vmatpush1.msra.mxu0 %v1159
    %1975 = vmatprep.subr.mxu0 %v1152
    %1976 = vmatpush1.msra.mxu0 %v1151
    %1977 = vmatprep.subr.mxu0 %v1144
    %1978 = vmatpush1.msra.mxu0 %v1143
    %1979 = vmatprep.subr.mxu0 %v1136
    %1980 = vmatpush1.msra.mxu0 %v1135
    %1981 = vmatprep.subr.mxu0 %v1128
    %1982 = vmatpush1.msra.mxu0 %v1127
    %1983 = vmatprep.subr.mxu0 %v1120
    %1984 = vmatpush1.msra.mxu0 %v1119
    %1985 = vmatprep.subr.mxu0 %v1368
    %1986 = vmatpush2.msra.mxu0 %v1367
    %1987 = vmatprep.subr.mxu0 %v1360
    %1988 = vmatpush2.msra.mxu0 %v1359
    %1989 = vmatprep.subr.mxu0 %v1352
    %1990 = vmatpush2.msra.mxu0 %v1351
    %1991 = vmatprep.subr.mxu0 %v1344
    %1992 = vmatpush2.msra.mxu0 %v1343
    %1993 = vmatprep.subr.mxu0 %v1336
    %1994 = vmatpush2.msra.mxu0 %v1335
    %1995 = vmatprep.subr.mxu0 %v1328
    %1996 = vmatpush2.msra.mxu0 %v1327
    %1997 = vmatprep.subr.mxu0 %v1320
    %1998 = vmatpush2.msra.mxu0 %v1319
    %1999 = vmatprep.subr.mxu0 %v1312
    %2000 = vmatpush2.msra.mxu0 %v1311
    %2001 = vmatprep.subr.mxu0 %v1304
    %2002 = vmatpush2.msra.mxu0 %v1303
    %2003 = vmatprep.subr.mxu0 %v1296
    %2004 = vmatpush2.msra.mxu0 %v1295
    %2005 = vmatprep.subr.mxu0 %v1288
    %2006 = vmatpush2.msra.mxu0 %v1287
    %2007 = vmatprep.subr.mxu0 %v1280
    %2008 = vmatpush2.msra.mxu0 %v1279
    %2009 = vmatprep.subr.mxu0 %v1272
    %2010 = vmatpush2.msra.mxu0 %v1271
    %2011 = vmatprep.subr.mxu0 %v1264
    %2012 = vmatpush2.msra.mxu0 %v1263
    %2013 = vmatprep.subr.mxu0 %v1256
    %2014 = vmatpush2.msra.mxu0 %v1255
    %2015 = vmatprep.subr.mxu0 %v1248
    %2016 = vmatpush2.msra.mxu0 %v1247
    %2017 = vmatprep.mubr.f32.mxu0 %v1112
    %2018 = vmatmul.mubr.f32.gmra.mxu0 %v1111
    %v2019 = vpop.f32.mrf.mxu0
    %v2020 = vadd.f32 %v1648, %v2019
    %v2021 = vpop.f32.mrf.mxu0
    %v2022 = vadd.f32 %v1652, %v2021
    %2023 = vdwg.mxu0
    %2024 = vmatprep.subr.mxu0 %v1496
    %2025 = vmatpush1.msra.mxu0 %v1495
    %2026 = vmatprep.subr.mxu0 %v1488
    %2027 = vmatpush1.msra.mxu0 %v1487
    %2028 = vmatprep.subr.mxu0 %v1480
    %2029 = vmatpush1.msra.mxu0 %v1479
    %2030 = vmatprep.subr.mxu0 %v1472
    %2031 = vmatpush1.msra.mxu0 %v1471
    %2032 = vmatprep.subr.mxu0 %v1464
    %2033 = vmatpush1.msra.mxu0 %v1463
    %2034 = vmatprep.subr.mxu0 %v1456
    %2035 = vmatpush1.msra.mxu0 %v1455
    %2036 = vmatprep.subr.mxu0 %v1448
    %2037 = vmatpush1.msra.mxu0 %v1447
    %2038 = vmatprep.subr.mxu0 %v1440
    %2039 = vmatpush1.msra.mxu0 %v1439
    %2040 = vmatprep.subr.mxu0 %v1432
    %2041 = vmatpush1.msra.mxu0 %v1431
    %2042 = vmatprep.subr.mxu0 %v1424
    %2043 = vmatpush1.msra.mxu0 %v1423
    %2044 = vmatprep.subr.mxu0 %v1416
    %2045 = vmatpush1.msra.mxu0 %v1415
    %2046 = vmatprep.subr.mxu0 %v1408
    %2047 = vmatpush1.msra.mxu0 %v1407
    %2048 = vmatprep.subr.mxu0 %v1400
    %2049 = vmatpush1.msra.mxu0 %v1399
    %2050 = vmatprep.subr.mxu0 %v1392
    %2051 = vmatpush1.msra.mxu0 %v1391
    %2052 = vmatprep.subr.mxu0 %v1384
    %2053 = vmatpush1.msra.mxu0 %v1383
    %2054 = vmatprep.subr.mxu0 %v1376
    %2055 = vmatpush1.msra.mxu0 %v1375
    %2056 = vmatprep.subr.mxu0 %v1624
    %2057 = vmatpush2.msra.mxu0 %v1623
    %2058 = vmatprep.subr.mxu0 %v1616
    %2059 = vmatpush2.msra.mxu0 %v1615
    %2060 = vmatprep.subr.mxu0 %v1608
    %2061 = vmatpush2.msra.mxu0 %v1607
    %2062 = vmatprep.subr.mxu0 %v1600
    %2063 = vmatpush2.msra.mxu0 %v1599
    %2064 = vmatprep.subr.mxu0 %v1592
    %2065 = vmatpush2.msra.mxu0 %v1591
    %2066 = vmatprep.subr.mxu0 %v1584
    %2067 = vmatpush2.msra.mxu0 %v1583
    %2068 = vmatprep.subr.mxu0 %v1576
    %2069 = vmatpush2.msra.mxu0 %v1575
    %2070 = vmatprep.subr.mxu0 %v1568
    %2071 = vmatpush2.msra.mxu0 %v1567
    %2072 = vmatprep.subr.mxu0 %v1560
    %2073 = vmatpush2.msra.mxu0 %v1559
    %2074 = vmatprep.subr.mxu0 %v1552
    %2075 = vmatpush2.msra.mxu0 %v1551
    %2076 = vmatprep.subr.mxu0 %v1544
    %2077 = vmatpush2.msra.mxu0 %v1543
    %2078 = vmatprep.subr.mxu0 %v1536
    %2079 = vmatpush2.msra.mxu0 %v1535
    %2080 = vmatprep.subr.mxu0 %v1528
    %2081 = vmatpush2.msra.mxu0 %v1527
    %2082 = vmatprep.subr.mxu0 %v1520
    %2083 = vmatpush2.msra.mxu0 %v1519
    %2084 = vmatprep.subr.mxu0 %v1512
    %2085 = vmatpush2.msra.mxu0 %v1511
    %2086 = vmatprep.subr.mxu0 %v1504
    %2087 = vmatpush2.msra.mxu0 %v1503
    %2088 = vmatprep.mubr.f32.mxu0 %v1114
    %2089 = vmatmul.mubr.f32.gmra.mxu0 %v1113
    %v2090 = vpop.f32.mrf.mxu0
    %v2091 = vadd.f32 %v2020, %v2090
    %v2092 = vpop.f32.mrf.mxu0
    %v2093 = vadd.f32 %v2022, %v2092
    %2094 = vdwg.mxu0
    %2095 = vmatprep.subr.mxu0 %v1242
    %2096 = vmatpush1.msra.mxu0 %v1241
    %2097 = vmatprep.subr.mxu0 %v1234
    %2098 = vmatpush1.msra.mxu0 %v1233
    %2099 = vmatprep.subr.mxu0 %v1226
    %2100 = vmatpush1.msra.mxu0 %v1225
    %2101 = vmatprep.subr.mxu0 %v1218
    %2102 = vmatpush1.msra.mxu0 %v1217
    %2103 = vmatprep.subr.mxu0 %v1210
    %2104 = vmatpush1.msra.mxu0 %v1209
    %2105 = vmatprep.subr.mxu0 %v1202
    %2106 = vmatpush1.msra.mxu0 %v1201
    %2107 = vmatprep.subr.mxu0 %v1194
    %2108 = vmatpush1.msra.mxu0 %v1193
    %2109 = vmatprep.subr.mxu0 %v1186
    %2110 = vmatpush1.msra.mxu0 %v1185
    %2111 = vmatprep.subr.mxu0 %v1178
    %2112 = vmatpush1.msra.mxu0 %v1177
    %2113 = vmatprep.subr.mxu0 %v1170
    %2114 = vmatpush1.msra.mxu0 %v1169
    %2115 = vmatprep.subr.mxu0 %v1162
    %2116 = vmatpush1.msra.mxu0 %v1161
    %2117 = vmatprep.subr.mxu0 %v1154
    %2118 = vmatpush1.msra.mxu0 %v1153
    %2119 = vmatprep.subr.mxu0 %v1146
    %2120 = vmatpush1.msra.mxu0 %v1145
    %2121 = vmatprep.subr.mxu0 %v1138
    %2122 = vmatpush1.msra.mxu0 %v1137
    %2123 = vmatprep.subr.mxu0 %v1130
    %2124 = vmatpush1.msra.mxu0 %v1129
    %2125 = vmatprep.subr.mxu0 %v1122
    %2126 = vmatpush1.msra.mxu0 %v1121
    %2127 = vmatprep.subr.mxu0 %v1370
    %2128 = vmatpush2.msra.mxu0 %v1369
    %2129 = vmatprep.subr.mxu0 %v1362
    %2130 = vmatpush2.msra.mxu0 %v1361
    %2131 = vmatprep.subr.mxu0 %v1354
    %2132 = vmatpush2.msra.mxu0 %v1353
    %2133 = vmatprep.subr.mxu0 %v1346
    %2134 = vmatpush2.msra.mxu0 %v1345
    %2135 = vmatprep.subr.mxu0 %v1338
    %2136 = vmatpush2.msra.mxu0 %v1337
    %2137 = vmatprep.subr.mxu0 %v1330
    %2138 = vmatpush2.msra.mxu0 %v1329
    %2139 = vmatprep.subr.mxu0 %v1322
    %2140 = vmatpush2.msra.mxu0 %v1321
    %2141 = vmatprep.subr.mxu0 %v1314
    %2142 = vmatpush2.msra.mxu0 %v1313
    %2143 = vmatprep.subr.mxu0 %v1306
    %2144 = vmatpush2.msra.mxu0 %v1305
    %2145 = vmatprep.subr.mxu0 %v1298
    %2146 = vmatpush2.msra.mxu0 %v1297
    %2147 = vmatprep.subr.mxu0 %v1290
    %2148 = vmatpush2.msra.mxu0 %v1289
    %2149 = vmatprep.subr.mxu0 %v1282
    %2150 = vmatpush2.msra.mxu0 %v1281
    %2151 = vmatprep.subr.mxu0 %v1274
    %2152 = vmatpush2.msra.mxu0 %v1273
    %2153 = vmatprep.subr.mxu0 %v1266
    %2154 = vmatpush2.msra.mxu0 %v1265
    %2155 = vmatprep.subr.mxu0 %v1258
    %2156 = vmatpush2.msra.mxu0 %v1257
    %2157 = vmatprep.subr.mxu0 %v1250
    %2158 = vmatpush2.msra.mxu0 %v1249
    %2159 = vmatprep.mubr.f32.mxu0 %v1112
    %2160 = vmatmul.mubr.f32.gmra.mxu0 %v1111
    %v2161 = vpop.f32.mrf.mxu0
    %v2162 = vadd.f32 %v1656, %v2161
    %v2163 = vpop.f32.mrf.mxu0
    %v2164 = vadd.f32 %v1660, %v2163
    %2165 = vdwg.mxu0
    %2166 = vmatprep.subr.mxu0 %v1498
    %2167 = vmatpush1.msra.mxu0 %v1497
    %2168 = vmatprep.subr.mxu0 %v1490
    %2169 = vmatpush1.msra.mxu0 %v1489
    %2170 = vmatprep.subr.mxu0 %v1482
    %2171 = vmatpush1.msra.mxu0 %v1481
    %2172 = vmatprep.subr.mxu0 %v1474
    %2173 = vmatpush1.msra.mxu0 %v1473
    %2174 = vmatprep.subr.mxu0 %v1466
    %2175 = vmatpush1.msra.mxu0 %v1465
    %2176 = vmatprep.subr.mxu0 %v1458
    %2177 = vmatpush1.msra.mxu0 %v1457
    %2178 = vmatprep.subr.mxu0 %v1450
    %2179 = vmatpush1.msra.mxu0 %v1449
    %2180 = vmatprep.subr.mxu0 %v1442
    %2181 = vmatpush1.msra.mxu0 %v1441
    %2182 = vmatprep.subr.mxu0 %v1434
    %2183 = vmatpush1.msra.mxu0 %v1433
    %2184 = vmatprep.subr.mxu0 %v1426
    %2185 = vmatpush1.msra.mxu0 %v1425
    %2186 = vmatprep.subr.mxu0 %v1418
    %2187 = vmatpush1.msra.mxu0 %v1417
    %2188 = vmatprep.subr.mxu0 %v1410
    %2189 = vmatpush1.msra.mxu0 %v1409
    %2190 = vmatprep.subr.mxu0 %v1402
    %2191 = vmatpush1.msra.mxu0 %v1401
    %2192 = vmatprep.subr.mxu0 %v1394
    %2193 = vmatpush1.msra.mxu0 %v1393
    %2194 = vmatprep.subr.mxu0 %v1386
    %2195 = vmatpush1.msra.mxu0 %v1385
    %2196 = vmatprep.subr.mxu0 %v1378
    %2197 = vmatpush1.msra.mxu0 %v1377
    %2198 = vmatprep.subr.mxu0 %v1626
    %2199 = vmatpush2.msra.mxu0 %v1625
    %2200 = vmatprep.subr.mxu0 %v1618
    %2201 = vmatpush2.msra.mxu0 %v1617
    %2202 = vmatprep.subr.mxu0 %v1610
    %2203 = vmatpush2.msra.mxu0 %v1609
    %2204 = vmatprep.subr.mxu0 %v1602
    %2205 = vmatpush2.msra.mxu0 %v1601
    %2206 = vmatprep.subr.mxu0 %v1594
    %2207 = vmatpush2.msra.mxu0 %v1593
    %2208 = vmatprep.subr.mxu0 %v1586
    %2209 = vmatpush2.msra.mxu0 %v1585
    %2210 = vmatprep.subr.mxu0 %v1578
    %2211 = vmatpush2.msra.mxu0 %v1577
    %2212 = vmatprep.subr.mxu0 %v1570
    %2213 = vmatpush2.msra.mxu0 %v1569
    %2214 = vmatprep.subr.mxu0 %v1562
    %2215 = vmatpush2.msra.mxu0 %v1561
    %2216 = vmatprep.subr.mxu0 %v1554
    %2217 = vmatpush2.msra.mxu0 %v1553
    %2218 = vmatprep.subr.mxu0 %v1546
    %2219 = vmatpush2.msra.mxu0 %v1545
    %2220 = vmatprep.subr.mxu0 %v1538
    %2221 = vmatpush2.msra.mxu0 %v1537
    %2222 = vmatprep.subr.mxu0 %v1530
    %2223 = vmatpush2.msra.mxu0 %v1529
    %2224 = vmatprep.subr.mxu0 %v1522
    %2225 = vmatpush2.msra.mxu0 %v1521
    %2226 = vmatprep.subr.mxu0 %v1514
    %2227 = vmatpush2.msra.mxu0 %v1513
    %2228 = vmatprep.subr.mxu0 %v1506
    %2229 = vmatpush2.msra.mxu0 %v1505
    %2230 = vmatprep.mubr.f32.mxu0 %v1114
    %2231 = vmatmul.mubr.f32.gmra.mxu0 %v1113
    %v2232 = vpop.f32.mrf.mxu0
    %v2233 = vadd.f32 %v2162, %v2232
    %v2234 = vpop.f32.mrf.mxu0
    %v2235 = vadd.f32 %v2164, %v2234
    %2236 = vdwg.mxu0
    %v2237 = vmul.f32 %v1807, %v1807
    %v2238 = vmul.f32 %v1809, %v1809
    %v2239 = vmul.f32 %v1949, %v1949
    %v2240 = vmul.f32 %v1951, %v1951
    %v2241 = vmul.f32 %v2091, %v2091
    %v2242 = vmul.f32 %v2093, %v2093
    %v2243 = vmul.f32 %v2233, %v2233
    %v2244 = vmul.f32 %v2235, %v2235
    %v2245 = vadd.f32 %v2237, %v2241
    %v2246 = vadd.f32 %v2238, %v2242
    %v2247 = vadd.f32 %v2239, %v2243
    %v2248 = vadd.f32 %v2240, %v2244
    %v2249 = vrsqrt.pop %v2245
    %v2250 = vmul.f32 %v2245, %v2249
    %vm2251 = vcmp.eq.f32.partialorder %v2245, inf
    %v2252 = vsel %vm2251, %v2245, %v2250
    %vm2253 = vcmp.eq.f32.partialorder %v2245, 0.0
    %v2254 = vand.u32 %v2245, 2147483648
    %v2255 = vsel %vm2253, %v2254, %v2252
    %v2256 = vrsqrt.pop %v2246
    %v2257 = vmul.f32 %v2246, %v2256
    %vm2258 = vcmp.eq.f32.partialorder %v2246, inf
    %v2259 = vsel %vm2258, %v2246, %v2257
    %vm2260 = vcmp.eq.f32.partialorder %v2246, 0.0
    %v2261 = vand.u32 %v2246, 2147483648
    %v2262 = vsel %vm2260, %v2261, %v2259
    %v2263 = vrsqrt.pop %v2247
    %v2264 = vmul.f32 %v2247, %v2263
    %vm2265 = vcmp.eq.f32.partialorder %v2247, inf
    %v2266 = vsel %vm2265, %v2247, %v2264
    %vm2267 = vcmp.eq.f32.partialorder %v2247, 0.0
    %v2268 = vand.u32 %v2247, 2147483648
    %v2269 = vsel %vm2267, %v2268, %v2266
    %v2270 = vrsqrt.pop %v2248
    %v2271 = vmul.f32 %v2248, %v2270
    %vm2272 = vcmp.eq.f32.partialorder %v2248, inf
    %v2273 = vsel %vm2272, %v2248, %v2271
    %vm2274 = vcmp.eq.f32.partialorder %v2248, 0.0
    %v2275 = vand.u32 %v2248, 2147483648
    %v2276 = vsel %vm2274, %v2275, %v2273
    %v2279 = vrot.slane %v2255, 1
    %v2280 = vrot.slane %v2262, 1
    %v2285 = vrot.slane %v2269, 1
    %v2286 = vrot.slane %v2276, 1
    %v2287 = vrot.slane %v2269, 7
    %v2288 = vrot.slane %v2276, 7
    %v2289 = vrot.slane %v2285, 7
    %v2290 = vrot.slane %v2286, 7
    %v2295 = vsel %vm1110, %v2255, %v2287
    %v2296 = vsel %vm1110, %v2262, %v2288
    %v2297 = vsel %vm1110, %v2279, %v2289
    %v2298 = vsel %vm1110, %v2280, %v2290
    %v2299 = vrot.slane %v624, 4
    %v2300 = vrot.slane %v626, 4
    %v2301 = vrot.slane %v1090, 4
    %v2302 = vrot.slane %v1091, 4
    %v2307 = vrot.slane %v695, 3
    %v2308 = vrot.slane %v697, 3
    %v2309 = vrot.slane %v1094, 3
    %v2310 = vrot.slane %v1095, 3
    %v2315 = vsel %vm1110, %v2299, %v2307
    %v2316 = vsel %vm1110, %v2300, %v2308
    %v2317 = vsel %vm1110, %v2301, %v2309
    %v2318 = vsel %vm1110, %v2302, %v2310
    %v2319 = vld [vmem:[#allocation10] sm:$0xff]
    %v2320 = vld [vmem:[#allocation10 + $0x8] sm:$0xff]
    %v2321 = vld [vmem:[#allocation10 + $0x10] sm:$0xff]
    %v2322 = vld [vmem:[#allocation10 + $0x18] sm:$0xff]
    %v2323 = vld [vmem:[#allocation10 + $0x20] sm:$0xff]
    %v2324 = vld [vmem:[#allocation10 + $0x28] sm:$0xff]
    %v2325 = vld [vmem:[#allocation10 + $0x30] sm:$0xff]
    %v2326 = vld [vmem:[#allocation10 + $0x38] sm:$0xff]
    %v2327 = vld [vmem:[#allocation10 + $0x40] sm:$0xff]
    %v2328 = vld [vmem:[#allocation10 + $0x48] sm:$0xff]
    %v2329 = vld [vmem:[#allocation10 + $0x50] sm:$0xff]
    %v2330 = vld [vmem:[#allocation10 + $0x58] sm:$0xff]
    %v2331 = vld [vmem:[#allocation10 + $0x60] sm:$0xff]
    %v2332 = vld [vmem:[#allocation10 + $0x68] sm:$0xff]
    %v2333 = vld [vmem:[#allocation10 + $0x70] sm:$0xff]
    %v2334 = vld [vmem:[#allocation10 + $0x78] sm:$0xff]
    %v2335 = vld [vmem:[#allocation10 + $0x80] sm:$0xff]
    %v2336 = vld [vmem:[#allocation10 + $0x88] sm:$0xff]
    %v2337 = vld [vmem:[#allocation10 + $0x90] sm:$0xff]
    %v2338 = vld [vmem:[#allocation10 + $0x98] sm:$0xff]
    %v2339 = vld [vmem:[#allocation10 + $0xa0] sm:$0xff]
    %v2340 = vld [vmem:[#allocation10 + $0xa8] sm:$0xff]
    %v2341 = vld [vmem:[#allocation10 + $0xb0] sm:$0xff]
    %v2342 = vld [vmem:[#allocation10 + $0xb8] sm:$0xff]
    %v2343 = vld [vmem:[#allocation10 + $0xc0] sm:$0xff]
    %v2344 = vld [vmem:[#allocation10 + $0xc8] sm:$0xff]
    %v2345 = vld [vmem:[#allocation10 + $0xd0] sm:$0xff]
    %v2346 = vld [vmem:[#allocation10 + $0xd8] sm:$0xff]
    %v2347 = vld [vmem:[#allocation10 + $0xe0] sm:$0xff]
    %v2348 = vld [vmem:[#allocation10 + $0xe8] sm:$0xff]
    %v2349 = vld [vmem:[#allocation10 + $0xf0] sm:$0xff]
    %v2350 = vld [vmem:[#allocation10 + $0xf8] sm:$0xff]
    %v2351 = vld [vmem:[#allocation10 + $0x100] sm:$0xff]
    %v2352 = vld [vmem:[#allocation10 + $0x108] sm:$0xff]
    %v2353 = vld [vmem:[#allocation10 + $0x110] sm:$0xff]
    %v2354 = vld [vmem:[#allocation10 + $0x118] sm:$0xff]
    %v2355 = vld [vmem:[#allocation10 + $0x120] sm:$0xff]
    %v2356 = vld [vmem:[#allocation10 + $0x128] sm:$0xff]
    %v2357 = vld [vmem:[#allocation10 + $0x130] sm:$0xff]
    %v2358 = vld [vmem:[#allocation10 + $0x138] sm:$0xff]
    %v2359 = vld [vmem:[#allocation10 + $0x140] sm:$0xff]
    %v2360 = vld [vmem:[#allocation10 + $0x148] sm:$0xff]
    %v2361 = vld [vmem:[#allocation10 + $0x150] sm:$0xff]
    %v2362 = vld [vmem:[#allocation10 + $0x158] sm:$0xff]
    %v2363 = vld [vmem:[#allocation10 + $0x160] sm:$0xff]
    %v2364 = vld [vmem:[#allocation10 + $0x168] sm:$0xff]
    %v2365 = vld [vmem:[#allocation10 + $0x170] sm:$0xff]
    %v2366 = vld [vmem:[#allocation10 + $0x178] sm:$0xff]
    %v2367 = vld [vmem:[#allocation10 + $0x180] sm:$0xff]
    %v2368 = vld [vmem:[#allocation10 + $0x188] sm:$0xff]
    %v2369 = vld [vmem:[#allocation10 + $0x190] sm:$0xff]
    %v2370 = vld [vmem:[#allocation10 + $0x198] sm:$0xff]
    %v2371 = vld [vmem:[#allocation10 + $0x1a0] sm:$0xff]
    %v2372 = vld [vmem:[#allocation10 + $0x1a8] sm:$0xff]
    %v2373 = vld [vmem:[#allocation10 + $0x1b0] sm:$0xff]
    %v2374 = vld [vmem:[#allocation10 + $0x1b8] sm:$0xff]
    %v2375 = vld [vmem:[#allocation10 + $0x1c0] sm:$0xff]
    %v2376 = vld [vmem:[#allocation10 + $0x1c8] sm:$0xff]
    %v2377 = vld [vmem:[#allocation10 + $0x1d0] sm:$0xff]
    %v2378 = vld [vmem:[#allocation10 + $0x1d8] sm:$0xff]
    %v2379 = vld [vmem:[#allocation10 + $0x1e0] sm:$0xff]
    %v2380 = vld [vmem:[#allocation10 + $0x1e8] sm:$0xff]
    %v2381 = vld [vmem:[#allocation10 + $0x1f0] sm:$0xff]
    %v2382 = vld [vmem:[#allocation10 + $0x1f8] sm:$0xff]
    %v2383 = vld [vmem:[#allocation10 + $0x200] sm:$0xff]
    %v2384 = vld [vmem:[#allocation10 + $0x208] sm:$0xff]
    %v2385 = vld [vmem:[#allocation10 + $0x210] sm:$0xff]
    %v2386 = vld [vmem:[#allocation10 + $0x218] sm:$0xff]
    %v2387 = vld [vmem:[#allocation10 + $0x220] sm:$0xff]
    %v2388 = vld [vmem:[#allocation10 + $0x228] sm:$0xff]
    %v2389 = vld [vmem:[#allocation10 + $0x230] sm:$0xff]
    %v2390 = vld [vmem:[#allocation10 + $0x238] sm:$0xff]
    %v2391 = vld [vmem:[#allocation10 + $0x240] sm:$0xff]
    %v2392 = vld [vmem:[#allocation10 + $0x248] sm:$0xff]
    %v2393 = vld [vmem:[#allocation10 + $0x250] sm:$0xff]
    %v2394 = vld [vmem:[#allocation10 + $0x258] sm:$0xff]
    %v2395 = vld [vmem:[#allocation10 + $0x260] sm:$0xff]
    %v2396 = vld [vmem:[#allocation10 + $0x268] sm:$0xff]
    %v2397 = vld [vmem:[#allocation10 + $0x270] sm:$0xff]
    %v2398 = vld [vmem:[#allocation10 + $0x278] sm:$0xff]
    %v2399 = vld [vmem:[#allocation10 + $0x280] sm:$0xff]
    %v2400 = vld [vmem:[#allocation10 + $0x288] sm:$0xff]
    %v2401 = vld [vmem:[#allocation10 + $0x290] sm:$0xff]
    %v2402 = vld [vmem:[#allocation10 + $0x298] sm:$0xff]
    %v2403 = vld [vmem:[#allocation10 + $0x2a0] sm:$0xff]
    %v2404 = vld [vmem:[#allocation10 + $0x2a8] sm:$0xff]
    %v2405 = vld [vmem:[#allocation10 + $0x2b0] sm:$0xff]
    %v2406 = vld [vmem:[#allocation10 + $0x2b8] sm:$0xff]
    %v2407 = vld [vmem:[#allocation10 + $0x2c0] sm:$0xff]
    %v2408 = vld [vmem:[#allocation10 + $0x2c8] sm:$0xff]
    %v2409 = vld [vmem:[#allocation10 + $0x2d0] sm:$0xff]
    %v2410 = vld [vmem:[#allocation10 + $0x2d8] sm:$0xff]
    %v2411 = vld [vmem:[#allocation10 + $0x2e0] sm:$0xff]
    %v2412 = vld [vmem:[#allocation10 + $0x2e8] sm:$0xff]
    %v2413 = vld [vmem:[#allocation10 + $0x2f0] sm:$0xff]
    %v2414 = vld [vmem:[#allocation10 + $0x2f8] sm:$0xff]
    %v2415 = vld [vmem:[#allocation10 + $0x300] sm:$0xff]
    %v2416 = vld [vmem:[#allocation10 + $0x308] sm:$0xff]
    %v2417 = vld [vmem:[#allocation10 + $0x310] sm:$0xff]
    %v2418 = vld [vmem:[#allocation10 + $0x318] sm:$0xff]
    %v2419 = vld [vmem:[#allocation10 + $0x320] sm:$0xff]
    %v2420 = vld [vmem:[#allocation10 + $0x328] sm:$0xff]
    %v2421 = vld [vmem:[#allocation10 + $0x330] sm:$0xff]
    %v2422 = vld [vmem:[#allocation10 + $0x338] sm:$0xff]
    %v2423 = vld [vmem:[#allocation10 + $0x340] sm:$0xff]
    %v2424 = vld [vmem:[#allocation10 + $0x348] sm:$0xff]
    %v2425 = vld [vmem:[#allocation10 + $0x350] sm:$0xff]
    %v2426 = vld [vmem:[#allocation10 + $0x358] sm:$0xff]
    %v2427 = vld [vmem:[#allocation10 + $0x360] sm:$0xff]
    %v2428 = vld [vmem:[#allocation10 + $0x368] sm:$0xff]
    %v2429 = vld [vmem:[#allocation10 + $0x370] sm:$0xff]
    %v2430 = vld [vmem:[#allocation10 + $0x378] sm:$0xff]
    %v2431 = vld [vmem:[#allocation10 + $0x380] sm:$0xff]
    %v2432 = vld [vmem:[#allocation10 + $0x388] sm:$0xff]
    %v2433 = vld [vmem:[#allocation10 + $0x390] sm:$0xff]
    %v2434 = vld [vmem:[#allocation10 + $0x398] sm:$0xff]
    %v2435 = vld [vmem:[#allocation10 + $0x3a0] sm:$0xff]
    %v2436 = vld [vmem:[#allocation10 + $0x3a8] sm:$0xff]
    %v2437 = vld [vmem:[#allocation10 + $0x3b0] sm:$0xff]
    %v2438 = vld [vmem:[#allocation10 + $0x3b8] sm:$0xff]
    %v2439 = vld [vmem:[#allocation10 + $0x3c0] sm:$0xff]
    %v2440 = vld [vmem:[#allocation10 + $0x3c8] sm:$0xff]
    %v2441 = vld [vmem:[#allocation10 + $0x3d0] sm:$0xff]
    %v2442 = vld [vmem:[#allocation10 + $0x3d8] sm:$0xff]
    %v2443 = vld [vmem:[#allocation10 + $0x3e0] sm:$0xff]
    %v2444 = vld [vmem:[#allocation10 + $0x3e8] sm:$0xff]
    %v2445 = vld [vmem:[#allocation10 + $0x3f0] sm:$0xff]
    %v2446 = vld [vmem:[#allocation10 + $0x3f8] sm:$0xff]
    %v2447 = vld [vmem:[#allocation10 + $0x400] sm:$0xff]
    %v2448 = vld [vmem:[#allocation10 + $0x408] sm:$0xff]
    %v2449 = vld [vmem:[#allocation10 + $0x410] sm:$0xff]
    %v2450 = vld [vmem:[#allocation10 + $0x418] sm:$0xff]
    %v2451 = vld [vmem:[#allocation10 + $0x420] sm:$0xff]
    %v2452 = vld [vmem:[#allocation10 + $0x428] sm:$0xff]
    %v2453 = vld [vmem:[#allocation10 + $0x430] sm:$0xff]
    %v2454 = vld [vmem:[#allocation10 + $0x438] sm:$0xff]
    %v2455 = vld [vmem:[#allocation10 + $0x440] sm:$0xff]
    %v2456 = vld [vmem:[#allocation10 + $0x448] sm:$0xff]
    %v2457 = vld [vmem:[#allocation10 + $0x450] sm:$0xff]
    %v2458 = vld [vmem:[#allocation10 + $0x458] sm:$0xff]
    %v2459 = vld [vmem:[#allocation10 + $0x460] sm:$0xff]
    %v2460 = vld [vmem:[#allocation10 + $0x468] sm:$0xff]
    %v2461 = vld [vmem:[#allocation10 + $0x470] sm:$0xff]
    %v2462 = vld [vmem:[#allocation10 + $0x478] sm:$0xff]
    %v2463 = vld [vmem:[#allocation10 + $0x480] sm:$0xff]
    %v2464 = vld [vmem:[#allocation10 + $0x488] sm:$0xff]
    %v2465 = vld [vmem:[#allocation10 + $0x490] sm:$0xff]
    %v2466 = vld [vmem:[#allocation10 + $0x498] sm:$0xff]
    %v2467 = vld [vmem:[#allocation10 + $0x4a0] sm:$0xff]
    %v2468 = vld [vmem:[#allocation10 + $0x4a8] sm:$0xff]
    %v2469 = vld [vmem:[#allocation10 + $0x4b0] sm:$0xff]
    %v2470 = vld [vmem:[#allocation10 + $0x4b8] sm:$0xff]
    %v2471 = vld [vmem:[#allocation10 + $0x4c0] sm:$0xff]
    %v2472 = vld [vmem:[#allocation10 + $0x4c8] sm:$0xff]
    %v2473 = vld [vmem:[#allocation10 + $0x4d0] sm:$0xff]
    %v2474 = vld [vmem:[#allocation10 + $0x4d8] sm:$0xff]
    %v2475 = vld [vmem:[#allocation10 + $0x4e0] sm:$0xff]
    %v2476 = vld [vmem:[#allocation10 + $0x4e8] sm:$0xff]
    %v2477 = vld [vmem:[#allocation10 + $0x4f0] sm:$0xff]
    %v2478 = vld [vmem:[#allocation10 + $0x4f8] sm:$0xff]
    %v2479 = vld [vmem:[#allocation10 + $0x500] sm:$0xff]
    %v2480 = vld [vmem:[#allocation10 + $0x508] sm:$0xff]
    %v2481 = vld [vmem:[#allocation10 + $0x510] sm:$0xff]
    %v2482 = vld [vmem:[#allocation10 + $0x518] sm:$0xff]
    %v2483 = vld [vmem:[#allocation10 + $0x520] sm:$0xff]
    %v2484 = vld [vmem:[#allocation10 + $0x528] sm:$0xff]
    %v2485 = vld [vmem:[#allocation10 + $0x530] sm:$0xff]
    %v2486 = vld [vmem:[#allocation10 + $0x538] sm:$0xff]
    %v2487 = vld [vmem:[#allocation10 + $0x540] sm:$0xff]
    %v2488 = vld [vmem:[#allocation10 + $0x548] sm:$0xff]
    %v2489 = vld [vmem:[#allocation10 + $0x550] sm:$0xff]
    %v2490 = vld [vmem:[#allocation10 + $0x558] sm:$0xff]
    %v2491 = vld [vmem:[#allocation10 + $0x560] sm:$0xff]
    %v2492 = vld [vmem:[#allocation10 + $0x568] sm:$0xff]
    %v2493 = vld [vmem:[#allocation10 + $0x570] sm:$0xff]
    %v2494 = vld [vmem:[#allocation10 + $0x578] sm:$0xff]
    %v2495 = vld [vmem:[#allocation10 + $0x580] sm:$0xff]
    %v2496 = vld [vmem:[#allocation10 + $0x588] sm:$0xff]
    %v2497 = vld [vmem:[#allocation10 + $0x590] sm:$0xff]
    %v2498 = vld [vmem:[#allocation10 + $0x598] sm:$0xff]
    %v2499 = vld [vmem:[#allocation10 + $0x5a0] sm:$0xff]
    %v2500 = vld [vmem:[#allocation10 + $0x5a8] sm:$0xff]
    %v2501 = vld [vmem:[#allocation10 + $0x5b0] sm:$0xff]
    %v2502 = vld [vmem:[#allocation10 + $0x5b8] sm:$0xff]
    %v2503 = vld [vmem:[#allocation10 + $0x5c0] sm:$0xff]
    %v2504 = vld [vmem:[#allocation10 + $0x5c8] sm:$0xff]
    %v2505 = vld [vmem:[#allocation10 + $0x5d0] sm:$0xff]
    %v2506 = vld [vmem:[#allocation10 + $0x5d8] sm:$0xff]
    %v2507 = vld [vmem:[#allocation10 + $0x5e0] sm:$0xff]
    %v2508 = vld [vmem:[#allocation10 + $0x5e8] sm:$0xff]
    %v2509 = vld [vmem:[#allocation10 + $0x5f0] sm:$0xff]
    %v2510 = vld [vmem:[#allocation10 + $0x5f8] sm:$0xff]
    %v2511 = vld [vmem:[#allocation10 + $0x600] sm:$0xff]
    %v2512 = vld [vmem:[#allocation10 + $0x608] sm:$0xff]
    %v2513 = vld [vmem:[#allocation10 + $0x610] sm:$0xff]
    %v2514 = vld [vmem:[#allocation10 + $0x618] sm:$0xff]
    %v2515 = vld [vmem:[#allocation10 + $0x620] sm:$0xff]
    %v2516 = vld [vmem:[#allocation10 + $0x628] sm:$0xff]
    %v2517 = vld [vmem:[#allocation10 + $0x630] sm:$0xff]
    %v2518 = vld [vmem:[#allocation10 + $0x638] sm:$0xff]
    %v2519 = vld [vmem:[#allocation10 + $0x640] sm:$0xff]
    %v2520 = vld [vmem:[#allocation10 + $0x648] sm:$0xff]
    %v2521 = vld [vmem:[#allocation10 + $0x650] sm:$0xff]
    %v2522 = vld [vmem:[#allocation10 + $0x658] sm:$0xff]
    %v2523 = vld [vmem:[#allocation10 + $0x660] sm:$0xff]
    %v2524 = vld [vmem:[#allocation10 + $0x668] sm:$0xff]
    %v2525 = vld [vmem:[#allocation10 + $0x670] sm:$0xff]
    %v2526 = vld [vmem:[#allocation10 + $0x678] sm:$0xff]
    %v2527 = vld [vmem:[#allocation10 + $0x680] sm:$0xff]
    %v2528 = vld [vmem:[#allocation10 + $0x688] sm:$0xff]
    %v2529 = vld [vmem:[#allocation10 + $0x690] sm:$0xff]
    %v2530 = vld [vmem:[#allocation10 + $0x698] sm:$0xff]
    %v2531 = vld [vmem:[#allocation10 + $0x6a0] sm:$0xff]
    %v2532 = vld [vmem:[#allocation10 + $0x6a8] sm:$0xff]
    %v2533 = vld [vmem:[#allocation10 + $0x6b0] sm:$0xff]
    %v2534 = vld [vmem:[#allocation10 + $0x6b8] sm:$0xff]
    %v2535 = vld [vmem:[#allocation10 + $0x6c0] sm:$0xff]
    %v2536 = vld [vmem:[#allocation10 + $0x6c8] sm:$0xff]
    %v2537 = vld [vmem:[#allocation10 + $0x6d0] sm:$0xff]
    %v2538 = vld [vmem:[#allocation10 + $0x6d8] sm:$0xff]
    %v2539 = vld [vmem:[#allocation10 + $0x6e0] sm:$0xff]
    %v2540 = vld [vmem:[#allocation10 + $0x6e8] sm:$0xff]
    %v2541 = vld [vmem:[#allocation10 + $0x6f0] sm:$0xff]
    %v2542 = vld [vmem:[#allocation10 + $0x6f8] sm:$0xff]
    %v2543 = vld [vmem:[#allocation10 + $0x700] sm:$0xff]
    %v2544 = vld [vmem:[#allocation10 + $0x708] sm:$0xff]
    %v2545 = vld [vmem:[#allocation10 + $0x710] sm:$0xff]
    %v2546 = vld [vmem:[#allocation10 + $0x718] sm:$0xff]
    %v2547 = vld [vmem:[#allocation10 + $0x720] sm:$0xff]
    %v2548 = vld [vmem:[#allocation10 + $0x728] sm:$0xff]
    %v2549 = vld [vmem:[#allocation10 + $0x730] sm:$0xff]
    %v2550 = vld [vmem:[#allocation10 + $0x738] sm:$0xff]
    %v2551 = vld [vmem:[#allocation10 + $0x740] sm:$0xff]
    %v2552 = vld [vmem:[#allocation10 + $0x748] sm:$0xff]
    %v2553 = vld [vmem:[#allocation10 + $0x750] sm:$0xff]
    %v2554 = vld [vmem:[#allocation10 + $0x758] sm:$0xff]
    %v2555 = vld [vmem:[#allocation10 + $0x760] sm:$0xff]
    %v2556 = vld [vmem:[#allocation10 + $0x768] sm:$0xff]
    %v2557 = vld [vmem:[#allocation10 + $0x770] sm:$0xff]
    %v2558 = vld [vmem:[#allocation10 + $0x778] sm:$0xff]
    %v2559 = vld [vmem:[#allocation10 + $0x780] sm:$0xff]
    %v2560 = vld [vmem:[#allocation10 + $0x788] sm:$0xff]
    %v2561 = vld [vmem:[#allocation10 + $0x790] sm:$0xff]
    %v2562 = vld [vmem:[#allocation10 + $0x798] sm:$0xff]
    %v2563 = vld [vmem:[#allocation10 + $0x7a0] sm:$0xff]
    %v2564 = vld [vmem:[#allocation10 + $0x7a8] sm:$0xff]
    %v2565 = vld [vmem:[#allocation10 + $0x7b0] sm:$0xff]
    %v2566 = vld [vmem:[#allocation10 + $0x7b8] sm:$0xff]
    %v2567 = vld [vmem:[#allocation10 + $0x7c0] sm:$0xff]
    %v2568 = vld [vmem:[#allocation10 + $0x7c8] sm:$0xff]
    %v2569 = vld [vmem:[#allocation10 + $0x7d0] sm:$0xff]
    %v2570 = vld [vmem:[#allocation10 + $0x7d8] sm:$0xff]
    %v2571 = vld [vmem:[#allocation10 + $0x7e0] sm:$0xff]
    %v2572 = vld [vmem:[#allocation10 + $0x7e8] sm:$0xff]
    %v2573 = vld [vmem:[#allocation10 + $0x7f0] sm:$0xff]
    %v2574 = vld [vmem:[#allocation10 + $0x7f8] sm:$0xff]
    %v2575 = vld [vmem:[#allocation12] sm:$0xf]
    %v2577 = vlaneseq
    %v2578 = vshrl.u32 %v2577, 7
    %v2579 = vsub.s32 0, %v2578
    %v2580 = vrot.slane %v2575, %v2579
    %v2581 = vlaneseq
    %v2582 = vshrl.u32 %v2581, 7
    %v2583 = vsub.s32 1, %v2582
    %v2584 = vrot.slane %v2575, %v2583
    %v2585 = vlaneseq
    %v2586 = vshrl.u32 %v2585, 7
    %v2587 = vsub.s32 2, %v2586
    %v2588 = vrot.slane %v2575, %v2587
    %v2589 = vlaneseq
    %v2590 = vshrl.u32 %v2589, 7
    %v2591 = vsub.s32 3, %v2590
    %v2592 = vrot.slane %v2575, %v2591
    %2597 = vmatprep.subr.mxu0 %v2380
    %2598 = vmatpush1.msra.mxu0 %v2379
    %2599 = vmatprep.subr.mxu0 %v2376
    %2600 = vmatpush1.msra.mxu0 %v2375
    %2601 = vmatprep.subr.mxu0 %v2372
    %2602 = vmatpush1.msra.mxu0 %v2371
    %2603 = vmatprep.subr.mxu0 %v2368
    %2604 = vmatpush1.msra.mxu0 %v2367
    %2605 = vmatprep.subr.mxu0 %v2364
    %2606 = vmatpush1.msra.mxu0 %v2363
    %2607 = vmatprep.subr.mxu0 %v2360
    %2608 = vmatpush1.msra.mxu0 %v2359
    %2609 = vmatprep.subr.mxu0 %v2356
    %2610 = vmatpush1.msra.mxu0 %v2355
    %2611 = vmatprep.subr.mxu0 %v2352
    %2612 = vmatpush1.msra.mxu0 %v2351
    %2613 = vmatprep.subr.mxu0 %v2348
    %2614 = vmatpush1.msra.mxu0 %v2347
    %2615 = vmatprep.subr.mxu0 %v2344
    %2616 = vmatpush1.msra.mxu0 %v2343
    %2617 = vmatprep.subr.mxu0 %v2340
    %2618 = vmatpush1.msra.mxu0 %v2339
    %2619 = vmatprep.subr.mxu0 %v2336
    %2620 = vmatpush1.msra.mxu0 %v2335
    %2621 = vmatprep.subr.mxu0 %v2332
    %2622 = vmatpush1.msra.mxu0 %v2331
    %2623 = vmatprep.subr.mxu0 %v2328
    %2624 = vmatpush1.msra.mxu0 %v2327
    %2625 = vmatprep.subr.mxu0 %v2324
    %2626 = vmatpush1.msra.mxu0 %v2323
    %2627 = vmatprep.subr.mxu0 %v2320
    %2628 = vmatpush1.msra.mxu0 %v2319
    %2629 = vmatprep.subr.mxu0 %v2444
    %2630 = vmatpush2.msra.mxu0 %v2443
    %2631 = vmatprep.subr.mxu0 %v2440
    %2632 = vmatpush2.msra.mxu0 %v2439
    %2633 = vmatprep.subr.mxu0 %v2436
    %2634 = vmatpush2.msra.mxu0 %v2435
    %2635 = vmatprep.subr.mxu0 %v2432
    %2636 = vmatpush2.msra.mxu0 %v2431
    %2637 = vmatprep.subr.mxu0 %v2428
    %2638 = vmatpush2.msra.mxu0 %v2427
    %2639 = vmatprep.subr.mxu0 %v2424
    %2640 = vmatpush2.msra.mxu0 %v2423
    %2641 = vmatprep.subr.mxu0 %v2420
    %2642 = vmatpush2.msra.mxu0 %v2419
    %2643 = vmatprep.subr.mxu0 %v2416
    %2644 = vmatpush2.msra.mxu0 %v2415
    %2645 = vmatprep.subr.mxu0 %v2412
    %2646 = vmatpush2.msra.mxu0 %v2411
    %2647 = vmatprep.subr.mxu0 %v2408
    %2648 = vmatpush2.msra.mxu0 %v2407
    %2649 = vmatprep.subr.mxu0 %v2404
    %2650 = vmatpush2.msra.mxu0 %v2403
    %2651 = vmatprep.subr.mxu0 %v2400
    %2652 = vmatpush2.msra.mxu0 %v2399
    %2653 = vmatprep.subr.mxu0 %v2396
    %2654 = vmatpush2.msra.mxu0 %v2395
    %2655 = vmatprep.subr.mxu0 %v2392
    %2656 = vmatpush2.msra.mxu0 %v2391
    %2657 = vmatprep.subr.mxu0 %v2388
    %2658 = vmatpush2.msra.mxu0 %v2387
    %2659 = vmatprep.subr.mxu0 %v2384
    %2660 = vmatpush2.msra.mxu0 %v2383
    %2661 = vmatprep.mubr.f32.mxu0 %v2316
    %2662 = vmatmul.mubr.f32.gmra.mxu0 %v2315
    %v2663 = vpop.f32.mrf.mxu0
    %v2664 = vadd.f32 %v2580, %v2663
    %v2665 = vpop.f32.mrf.mxu0
    %v2666 = vadd.f32 %v2584, %v2665
    %2667 = vdwg.mxu0
    %2668 = vmatprep.subr.mxu0 %v2508
    %2669 = vmatpush1.msra.mxu0 %v2507
    %2670 = vmatprep.subr.mxu0 %v2504
    %2671 = vmatpush1.msra.mxu0 %v2503
    %2672 = vmatprep.subr.mxu0 %v2500
    %2673 = vmatpush1.msra.mxu0 %v2499
    %2674 = vmatprep.subr.mxu0 %v2496
    %2675 = vmatpush1.msra.mxu0 %v2495
    %2676 = vmatprep.subr.mxu0 %v2492
    %2677 = vmatpush1.msra.mxu0 %v2491
    %2678 = vmatprep.subr.mxu0 %v2488
    %2679 = vmatpush1.msra.mxu0 %v2487
    %2680 = vmatprep.subr.mxu0 %v2484
    %2681 = vmatpush1.msra.mxu0 %v2483
    %2682 = vmatprep.subr.mxu0 %v2480
    %2683 = vmatpush1.msra.mxu0 %v2479
    %2684 = vmatprep.subr.mxu0 %v2476
    %2685 = vmatpush1.msra.mxu0 %v2475
    %2686 = vmatprep.subr.mxu0 %v2472
    %2687 = vmatpush1.msra.mxu0 %v2471
    %2688 = vmatprep.subr.mxu0 %v2468
    %2689 = vmatpush1.msra.mxu0 %v2467
    %2690 = vmatprep.subr.mxu0 %v2464
    %2691 = vmatpush1.msra.mxu0 %v2463
    %2692 = vmatprep.subr.mxu0 %v2460
    %2693 = vmatpush1.msra.mxu0 %v2459
    %2694 = vmatprep.subr.mxu0 %v2456
    %2695 = vmatpush1.msra.mxu0 %v2455
    %2696 = vmatprep.subr.mxu0 %v2452
    %2697 = vmatpush1.msra.mxu0 %v2451
    %2698 = vmatprep.subr.mxu0 %v2448
    %2699 = vmatpush1.msra.mxu0 %v2447
    %2700 = vmatprep.subr.mxu0 %v2572
    %2701 = vmatpush2.msra.mxu0 %v2571
    %2702 = vmatprep.subr.mxu0 %v2568
    %2703 = vmatpush2.msra.mxu0 %v2567
    %2704 = vmatprep.subr.mxu0 %v2564
    %2705 = vmatpush2.msra.mxu0 %v2563
    %2706 = vmatprep.subr.mxu0 %v2560
    %2707 = vmatpush2.msra.mxu0 %v2559
    %2708 = vmatprep.subr.mxu0 %v2556
    %2709 = vmatpush2.msra.mxu0 %v2555
    %2710 = vmatprep.subr.mxu0 %v2552
    %2711 = vmatpush2.msra.mxu0 %v2551
    %2712 = vmatprep.subr.mxu0 %v2548
    %2713 = vmatpush2.msra.mxu0 %v2547
    %2714 = vmatprep.subr.mxu0 %v2544
    %2715 = vmatpush2.msra.mxu0 %v2543
    %2716 = vmatprep.subr.mxu0 %v2540
    %2717 = vmatpush2.msra.mxu0 %v2539
    %2718 = vmatprep.subr.mxu0 %v2536
    %2719 = vmatpush2.msra.mxu0 %v2535
    %2720 = vmatprep.subr.mxu0 %v2532
    %2721 = vmatpush2.msra.mxu0 %v2531
    %2722 = vmatprep.subr.mxu0 %v2528
    %2723 = vmatpush2.msra.mxu0 %v2527
    %2724 = vmatprep.subr.mxu0 %v2524
    %2725 = vmatpush2.msra.mxu0 %v2523
    %2726 = vmatprep.subr.mxu0 %v2520
    %2727 = vmatpush2.msra.mxu0 %v2519
    %2728 = vmatprep.subr.mxu0 %v2516
    %2729 = vmatpush2.msra.mxu0 %v2515
    %2730 = vmatprep.subr.mxu0 %v2512
    %2731 = vmatpush2.msra.mxu0 %v2511
    %2732 = vmatprep.mubr.f32.mxu0 %v2318
    %2733 = vmatmul.mubr.f32.gmra.mxu0 %v2317
    %v2734 = vpop.f32.mrf.mxu0
    %v2735 = vadd.f32 %v2664, %v2734
    %v2736 = vpop.f32.mrf.mxu0
    %v2737 = vadd.f32 %v2666, %v2736
    %2738 = vdwg.mxu0
    %2739 = vmatprep.subr.mxu0 %v2382
    %2740 = vmatpush1.msra.mxu0 %v2381
    %2741 = vmatprep.subr.mxu0 %v2378
    %2742 = vmatpush1.msra.mxu0 %v2377
    %2743 = vmatprep.subr.mxu0 %v2374
    %2744 = vmatpush1.msra.mxu0 %v2373
    %2745 = vmatprep.subr.mxu0 %v2370
    %2746 = vmatpush1.msra.mxu0 %v2369
    %2747 = vmatprep.subr.mxu0 %v2366
    %2748 = vmatpush1.msra.mxu0 %v2365
    %2749 = vmatprep.subr.mxu0 %v2362
    %2750 = vmatpush1.msra.mxu0 %v2361
    %2751 = vmatprep.subr.mxu0 %v2358
    %2752 = vmatpush1.msra.mxu0 %v2357
    %2753 = vmatprep.subr.mxu0 %v2354
    %2754 = vmatpush1.msra.mxu0 %v2353
    %2755 = vmatprep.subr.mxu0 %v2350
    %2756 = vmatpush1.msra.mxu0 %v2349
    %2757 = vmatprep.subr.mxu0 %v2346
    %2758 = vmatpush1.msra.mxu0 %v2345
    %2759 = vmatprep.subr.mxu0 %v2342
    %2760 = vmatpush1.msra.mxu0 %v2341
    %2761 = vmatprep.subr.mxu0 %v2338
    %2762 = vmatpush1.msra.mxu0 %v2337
    %2763 = vmatprep.subr.mxu0 %v2334
    %2764 = vmatpush1.msra.mxu0 %v2333
    %2765 = vmatprep.subr.mxu0 %v2330
    %2766 = vmatpush1.msra.mxu0 %v2329
    %2767 = vmatprep.subr.mxu0 %v2326
    %2768 = vmatpush1.msra.mxu0 %v2325
    %2769 = vmatprep.subr.mxu0 %v2322
    %2770 = vmatpush1.msra.mxu0 %v2321
    %2771 = vmatprep.subr.mxu0 %v2446
    %2772 = vmatpush2.msra.mxu0 %v2445
    %2773 = vmatprep.subr.mxu0 %v2442
    %2774 = vmatpush2.msra.mxu0 %v2441
    %2775 = vmatprep.subr.mxu0 %v2438
    %2776 = vmatpush2.msra.mxu0 %v2437
    %2777 = vmatprep.subr.mxu0 %v2434
    %2778 = vmatpush2.msra.mxu0 %v2433
    %2779 = vmatprep.subr.mxu0 %v2430
    %2780 = vmatpush2.msra.mxu0 %v2429
    %2781 = vmatprep.subr.mxu0 %v2426
    %2782 = vmatpush2.msra.mxu0 %v2425
    %2783 = vmatprep.subr.mxu0 %v2422
    %2784 = vmatpush2.msra.mxu0 %v2421
    %2785 = vmatprep.subr.mxu0 %v2418
    %2786 = vmatpush2.msra.mxu0 %v2417
    %2787 = vmatprep.subr.mxu0 %v2414
    %2788 = vmatpush2.msra.mxu0 %v2413
    %2789 = vmatprep.subr.mxu0 %v2410
    %2790 = vmatpush2.msra.mxu0 %v2409
    %2791 = vmatprep.subr.mxu0 %v2406
    %2792 = vmatpush2.msra.mxu0 %v2405
    %2793 = vmatprep.subr.mxu0 %v2402
    %2794 = vmatpush2.msra.mxu0 %v2401
    %2795 = vmatprep.subr.mxu0 %v2398
    %2796 = vmatpush2.msra.mxu0 %v2397
    %2797 = vmatprep.subr.mxu0 %v2394
    %2798 = vmatpush2.msra.mxu0 %v2393
    %2799 = vmatprep.subr.mxu0 %v2390
    %2800 = vmatpush2.msra.mxu0 %v2389
    %2801 = vmatprep.subr.mxu0 %v2386
    %2802 = vmatpush2.msra.mxu0 %v2385
    %2803 = vmatprep.mubr.f32.mxu0 %v2316
    %2804 = vmatmul.mubr.f32.gmra.mxu0 %v2315
    %v2805 = vpop.f32.mrf.mxu0
    %v2806 = vadd.f32 %v2588, %v2805
    %v2807 = vpop.f32.mrf.mxu0
    %v2808 = vadd.f32 %v2592, %v2807
    %2809 = vdwg.mxu0
    %2810 = vmatprep.subr.mxu0 %v2510
    %2811 = vmatpush1.msra.mxu0 %v2509
    %2812 = vmatprep.subr.mxu0 %v2506
    %2813 = vmatpush1.msra.mxu0 %v2505
    %2814 = vmatprep.subr.mxu0 %v2502
    %2815 = vmatpush1.msra.mxu0 %v2501
    %2816 = vmatprep.subr.mxu0 %v2498
    %2817 = vmatpush1.msra.mxu0 %v2497
    %2818 = vmatprep.subr.mxu0 %v2494
    %2819 = vmatpush1.msra.mxu0 %v2493
    %2820 = vmatprep.subr.mxu0 %v2490
    %2821 = vmatpush1.msra.mxu0 %v2489
    %2822 = vmatprep.subr.mxu0 %v2486
    %2823 = vmatpush1.msra.mxu0 %v2485
    %2824 = vmatprep.subr.mxu0 %v2482
    %2825 = vmatpush1.msra.mxu0 %v2481
    %2826 = vmatprep.subr.mxu0 %v2478
    %2827 = vmatpush1.msra.mxu0 %v2477
    %2828 = vmatprep.subr.mxu0 %v2474
    %2829 = vmatpush1.msra.mxu0 %v2473
    %2830 = vmatprep.subr.mxu0 %v2470
    %2831 = vmatpush1.msra.mxu0 %v2469
    %2832 = vmatprep.subr.mxu0 %v2466
    %2833 = vmatpush1.msra.mxu0 %v2465
    %2834 = vmatprep.subr.mxu0 %v2462
    %2835 = vmatpush1.msra.mxu0 %v2461
    %2836 = vmatprep.subr.mxu0 %v2458
    %2837 = vmatpush1.msra.mxu0 %v2457
    %2838 = vmatprep.subr.mxu0 %v2454
    %2839 = vmatpush1.msra.mxu0 %v2453
    %2840 = vmatprep.subr.mxu0 %v2450
    %2841 = vmatpush1.msra.mxu0 %v2449
    %2842 = vmatprep.subr.mxu0 %v2574
    %2843 = vmatpush2.msra.mxu0 %v2573
    %2844 = vmatprep.subr.mxu0 %v2570
    %2845 = vmatpush2.msra.mxu0 %v2569
    %2846 = vmatprep.subr.mxu0 %v2566
    %2847 = vmatpush2.msra.mxu0 %v2565
    %2848 = vmatprep.subr.mxu0 %v2562
    %2849 = vmatpush2.msra.mxu0 %v2561
    %2850 = vmatprep.subr.mxu0 %v2558
    %2851 = vmatpush2.msra.mxu0 %v2557
    %2852 = vmatprep.subr.mxu0 %v2554
    %2853 = vmatpush2.msra.mxu0 %v2553
    %2854 = vmatprep.subr.mxu0 %v2550
    %2855 = vmatpush2.msra.mxu0 %v2549
    %2856 = vmatprep.subr.mxu0 %v2546
    %2857 = vmatpush2.msra.mxu0 %v2545
    %2858 = vmatprep.subr.mxu0 %v2542
    %2859 = vmatpush2.msra.mxu0 %v2541
    %2860 = vmatprep.subr.mxu0 %v2538
    %2861 = vmatpush2.msra.mxu0 %v2537
    %2862 = vmatprep.subr.mxu0 %v2534
    %2863 = vmatpush2.msra.mxu0 %v2533
    %2864 = vmatprep.subr.mxu0 %v2530
    %2865 = vmatpush2.msra.mxu0 %v2529
    %2866 = vmatprep.subr.mxu0 %v2526
    %2867 = vmatpush2.msra.mxu0 %v2525
    %2868 = vmatprep.subr.mxu0 %v2522
    %2869 = vmatpush2.msra.mxu0 %v2521
    %2870 = vmatprep.subr.mxu0 %v2518
    %2871 = vmatpush2.msra.mxu0 %v2517
    %2872 = vmatprep.subr.mxu0 %v2514
    %2873 = vmatpush2.msra.mxu0 %v2513
    %2874 = vmatprep.mubr.f32.mxu0 %v2318
    %2875 = vmatmul.mubr.f32.gmra.mxu0 %v2317
    %v2876 = vpop.f32.mrf.mxu0
    %v2877 = vadd.f32 %v2806, %v2876
    %v2878 = vpop.f32.mrf.mxu0
    %v2879 = vadd.f32 %v2808, %v2878
    %2880 = vdwg.mxu0
    %v2883 = vrot.slane %v2735, 1
    %v2884 = vrot.slane %v2737, 1
    %v2889 = vrot.slane %v2877, 1
    %v2890 = vrot.slane %v2879, 1
    %v2891 = vrot.slane %v2877, 7
    %v2892 = vrot.slane %v2879, 7
    %v2893 = vrot.slane %v2889, 7
    %v2894 = vrot.slane %v2890, 7
    %v2899 = vsel %vm1110, %v2735, %v2891
    %v2900 = vsel %vm1110, %v2737, %v2892
    %v2901 = vsel %vm1110, %v2883, %v2893
    %v2902 = vsel %vm1110, %v2884, %v2894
    %v2907 = vrot.slane %v2295, 6
    %v2908 = vrot.slane %v2296, 6
    %v2909 = vrot.slane %v2297, 6
    %v2910 = vrot.slane %v2298, 6
    %v2919 = vrot.slane %v2899, 4
    %v2920 = vrot.slane %v2900, 4
    %v2921 = vrot.slane %v2901, 4
    %v2922 = vrot.slane %v2902, 4
    %v2927 = vsel %vm519, %v1013, %v2907
    %v2928 = vsel %vm519, %v1015, %v2908
    %v2929 = vsel %vm519, %v1084, %v2909
    %v2930 = vsel %vm519, %v1086, %v2910
    %v2931 = vsel %vm514, %v2927, %v2919
    %v2932 = vsel %vm514, %v2928, %v2920
    %v2933 = vsel %vm514, %v2929, %v2921
    %v2934 = vsel %vm514, %v2930, %v2922
    %v2935 = vld [vmem:[#allocation13] sm:$0x3f]
    %v2936 = vld [vmem:[%s11] sm:$0x3f]
    %2937 = vrot.lane.b32.xlu0 %v2931, 17
    %v2938 = vpop.permute.xlu0 %2937
    %2939 = vrot.lane.b32.xlu0 %v2932, 17
    %v2940 = vpop.permute.xlu0 %2939
    %2941 = vrot.lane.b32.xlu0 %v2933, 17
    %v2942 = vpop.permute.xlu0 %2941
    %2943 = vrot.lane.b32.xlu0 %v2934, 17
    %v2944 = vpop.permute.xlu0 %2943
    %v2945 = vsel %vm181, %v2942, %v2944
    %v2946 = vsel %vm181, %v2940, %v2942
    %v2947 = vsel %vm181, %v2938, %v2940
    %v2948 = vsel %vm181, %v2944, %v2938
    %v2949 = vmul.f32 %v2948, %v189
    %v2950 = vmul.f32 %v2947, %v193
    %v2951 = vmul.f32 %v2946, %v197
    %v2952 = vmul.f32 %v2945, %v201
    %2953 = vrot.lane.b32.xlu0 %v2931, 16
    %v2954 = vpop.permute.xlu0 %2953
    %2955 = vrot.lane.b32.xlu0 %v2932, 16
    %v2956 = vpop.permute.xlu0 %2955
    %2957 = vrot.lane.b32.xlu0 %v2933, 16
    %v2958 = vpop.permute.xlu0 %2957
    %2959 = vrot.lane.b32.xlu0 %v2934, 16
    %v2960 = vpop.permute.xlu0 %2959
    %v2961 = vsel %vm214, %v2958, %v2960
    %v2962 = vsel %vm214, %v2956, %v2958
    %v2963 = vsel %vm214, %v2954, %v2956
    %v2964 = vsel %vm214, %v2960, %v2954
    %v2965 = vmul.f32 %v2964, %v222
    %v2966 = vmul.f32 %v2963, %v226
    %v2967 = vmul.f32 %v2962, %v230
    %v2968 = vmul.f32 %v2961, %v234
    %2969 = vrot.lane.b32.xlu0 %v2931, 15
    %v2970 = vpop.permute.xlu0 %2969
    %2971 = vrot.lane.b32.xlu0 %v2932, 15
    %v2972 = vpop.permute.xlu0 %2971
    %2973 = vrot.lane.b32.xlu0 %v2933, 15
    %v2974 = vpop.permute.xlu0 %2973
    %2975 = vrot.lane.b32.xlu0 %v2934, 15
    %v2976 = vpop.permute.xlu0 %2975
    %v2977 = vsel %vm247, %v2974, %v2976
    %v2978 = vsel %vm247, %v2972, %v2974
    %v2979 = vsel %vm247, %v2970, %v2972
    %v2980 = vsel %vm247, %v2976, %v2970
    %v2981 = vmul.f32 %v2980, %v255
    %v2982 = vmul.f32 %v2979, %v259
    %v2983 = vmul.f32 %v2978, %v263
    %v2984 = vmul.f32 %v2977, %v267
    %2985 = vrot.lane.b32.xlu0 %v2931, 1
    %v2986 = vpop.permute.xlu0 %2985
    %2987 = vrot.lane.b32.xlu0 %v2932, 1
    %v2988 = vpop.permute.xlu0 %2987
    %2989 = vrot.lane.b32.xlu0 %v2933, 1
    %v2990 = vpop.permute.xlu0 %2989
    %2991 = vrot.lane.b32.xlu0 %v2934, 1
    %v2992 = vpop.permute.xlu0 %2991
    %v2993 = vsel %vm280, %v2990, %v2992
    %v2994 = vsel %vm280, %v2988, %v2990
    %v2995 = vsel %vm280, %v2986, %v2988
    %v2996 = vsel %vm280, %v2992, %v2986
    %v2997 = vmul.f32 %v2996, %v288
    %v2998 = vmul.f32 %v2995, %v292
    %v2999 = vmul.f32 %v2994, %v296
    %v3000 = vmul.f32 %v2993, %v300
    %3001 = vrot.lane.b32.xlu0 %v2931, 127
    %v3002 = vpop.permute.xlu0 %3001
    %3003 = vrot.lane.b32.xlu0 %v2932, 127
    %v3004 = vpop.permute.xlu0 %3003
    %3005 = vrot.lane.b32.xlu0 %v2933, 127
    %v3006 = vpop.permute.xlu0 %3005
    %3007 = vrot.lane.b32.xlu0 %v2934, 127
    %v3008 = vpop.permute.xlu0 %3007
    %v3009 = vsel %vm313, %v3006, %v3008
    %v3010 = vsel %vm313, %v3004, %v3006
    %v3011 = vsel %vm313, %v3002, %v3004
    %v3012 = vsel %vm313, %v3008, %v3002
    %v3013 = vmul.f32 %v3011, %v321
    %v3014 = vmul.f32 %v3010, %v325
    %v3015 = vmul.f32 %v3009, %v329
    %v3016 = vmul.f32 %v3012, %v333
    %3017 = vrot.lane.b32.xlu0 %v2931, 113
    %v3018 = vpop.permute.xlu0 %3017
    %3019 = vrot.lane.b32.xlu0 %v2932, 113
    %v3020 = vpop.permute.xlu0 %3019
    %3021 = vrot.lane.b32.xlu0 %v2933, 113
    %v3022 = vpop.permute.xlu0 %3021
    %3023 = vrot.lane.b32.xlu0 %v2934, 113
    %v3024 = vpop.permute.xlu0 %3023
    %v3025 = vsel %vm346, %v3022, %v3024
    %v3026 = vsel %vm346, %v3020, %v3022
    %v3027 = vsel %vm346, %v3018, %v3020
    %v3028 = vsel %vm346, %v3024, %v3018
    %v3029 = vmul.f32 %v3027, %v354
    %v3030 = vmul.f32 %v3026, %v358
    %v3031 = vmul.f32 %v3025, %v362
    %v3032 = vmul.f32 %v3028, %v366
    %3033 = vrot.lane.b32.xlu0 %v2931, 112
    %v3034 = vpop.permute.xlu0 %3033
    %3035 = vrot.lane.b32.xlu0 %v2932, 112
    %v3036 = vpop.permute.xlu0 %3035
    %3037 = vrot.lane.b32.xlu0 %v2933, 112
    %v3038 = vpop.permute.xlu0 %3037
    %3039 = vrot.lane.b32.xlu0 %v2934, 112
    %v3040 = vpop.permute.xlu0 %3039
    %v3041 = vsel %vm379, %v3038, %v3040
    %v3042 = vsel %vm379, %v3036, %v3038
    %v3043 = vsel %vm379, %v3034, %v3036
    %v3044 = vsel %vm379, %v3040, %v3034
    %v3045 = vmul.f32 %v3043, %v387
    %v3046 = vmul.f32 %v3042, %v391
    %v3047 = vmul.f32 %v3041, %v395
    %v3048 = vmul.f32 %v3044, %v399
    %3049 = vrot.lane.b32.xlu0 %v2931, 111
    %v3050 = vpop.permute.xlu0 %3049
    %3051 = vrot.lane.b32.xlu0 %v2932, 111
    %v3052 = vpop.permute.xlu0 %3051
    %3053 = vrot.lane.b32.xlu0 %v2933, 111
    %v3054 = vpop.permute.xlu0 %3053
    %3055 = vrot.lane.b32.xlu0 %v2934, 111
    %v3056 = vpop.permute.xlu0 %3055
    %v3057 = vsel %vm412, %v3054, %v3056
    %v3058 = vsel %vm412, %v3052, %v3054
    %v3059 = vsel %vm412, %v3050, %v3052
    %v3060 = vsel %vm412, %v3056, %v3050
    %v3061 = vmul.f32 %v3059, %v420
    %v3062 = vmul.f32 %v3058, %v424
    %v3063 = vmul.f32 %v3057, %v428
    %v3064 = vmul.f32 %v3060, %v432
    %v3069 = vrot.slane %v2965, 2
    %v3070 = vrot.slane %v2966, 2
    %v3071 = vrot.slane %v2967, 2
    %v3072 = vrot.slane %v2968, 2
    %v3081 = vrot.slane %v2981, 4
    %v3082 = vrot.slane %v2982, 4
    %v3083 = vrot.slane %v2983, 4
    %v3084 = vrot.slane %v2984, 4
    %v3093 = vrot.slane %v2997, 6
    %v3094 = vrot.slane %v2998, 6
    %v3095 = vrot.slane %v2999, 6
    %v3096 = vrot.slane %v3000, 6
    %v3105 = vrot.slane %v3013, 2
    %v3106 = vrot.slane %v3014, 2
    %v3107 = vrot.slane %v3015, 2
    %v3108 = vrot.slane %v3016, 2
    %v3117 = vrot.slane %v3029, 4
    %v3118 = vrot.slane %v3030, 4
    %v3119 = vrot.slane %v3031, 4
    %v3120 = vrot.slane %v3032, 4
    %v3129 = vrot.slane %v3045, 6
    %v3130 = vrot.slane %v3046, 6
    %v3131 = vrot.slane %v3047, 6
    %v3132 = vrot.slane %v3048, 6
    %v3137 = vsel %vm509, %v2949, %v3069
    %v3138 = vsel %vm509, %v2950, %v3070
    %v3139 = vsel %vm509, %v2951, %v3071
    %v3140 = vsel %vm509, %v2952, %v3072
    %v3141 = vsel %vm514, %v3069, %v3081
    %v3142 = vsel %vm514, %v3070, %v3082
    %v3143 = vsel %vm514, %v3071, %v3083
    %v3144 = vsel %vm514, %v3072, %v3084
    %v3145 = vsel %vm519, %v3081, %v3093
    %v3146 = vsel %vm519, %v3082, %v3094
    %v3147 = vsel %vm519, %v3083, %v3095
    %v3148 = vsel %vm519, %v3084, %v3096
    %v3149 = vsel %vm509, %v2931, %v3105
    %v3150 = vsel %vm509, %v2932, %v3106
    %v3151 = vsel %vm509, %v2933, %v3107
    %v3152 = vsel %vm509, %v2934, %v3108
    %v3153 = vsel %vm514, %v3105, %v3117
    %v3154 = vsel %vm514, %v3106, %v3118
    %v3155 = vsel %vm514, %v3107, %v3119
    %v3156 = vsel %vm514, %v3108, %v3120
    %v3157 = vsel %vm519, %v3117, %v3129
    %v3158 = vsel %vm519, %v3118, %v3130
    %v3159 = vsel %vm519, %v3119, %v3131
    %v3160 = vsel %vm519, %v3120, %v3132
    %3162 = vset.pattern.permute.xlu0 0
    %3163 = vperm.xlu0 %3162, %v2936
    %v3164 = vpop.permute.xlu0 %3163
    %v3167 = vsel %vm541, %v2935, 0
    %v3170 = vsel %vm509, %v3061, 0
    %v3173 = vsel %vm509, %v3062, 0
    %v3176 = vsel %vm509, %v3063, 0
    %v3179 = vsel %vm509, %v3064, 0
    %3181 = vmatprep.subr.mxu0 0.0
    %3182 = vmatpush1.msra.mxu0 0.0
    %3183 = vmatprep.subr.mxu0 0.0
    %3184 = vmatpush1.msra.mxu0 0.0
    %3185 = vmatprep.subr.mxu0 0.0
    %3186 = vmatpush1.msra.mxu0 0.0
    %3187 = vmatprep.subr.mxu0 0.0
    %3188 = vmatpush1.msra.mxu0 0.0
    %3189 = vmatprep.subr.mxu0 0.0
    %3190 = vmatpush1.msra.mxu0 0.0
    %3191 = vmatprep.subr.mxu0 0.0
    %3192 = vmatpush1.msra.mxu0 0.0
    %3193 = vmatprep.subr.mxu0 0.0
    %3194 = vmatpush1.msra.mxu0 0.0
    %3195 = vmatprep.subr.mxu0 0.0
    %3196 = vmatpush1.msra.mxu0 0.0
    %3197 = vmatprep.subr.mxu0 0.0
    %3198 = vmatpush1.msra.mxu0 0.0
    %3199 = vmatprep.subr.mxu0 %v3173
    %3200 = vmatpush1.msra.mxu0 %v3170
    %3201 = vmatprep.subr.mxu0 %v3158
    %3202 = vmatpush1.msra.mxu0 %v3157
    %3203 = vmatprep.subr.mxu0 %v3154
    %3204 = vmatpush1.msra.mxu0 %v3153
    %3205 = vmatprep.subr.mxu0 %v3150
    %3206 = vmatpush1.msra.mxu0 %v3149
    %3207 = vmatprep.subr.mxu0 %v3146
    %3208 = vmatpush1.msra.mxu0 %v3145
    %3209 = vmatprep.subr.mxu0 %v3142
    %3210 = vmatpush1.msra.mxu0 %v3141
    %3211 = vmatprep.subr.mxu0 %v3138
    %3212 = vmatpush1.msra.mxu0 %v3137
    %3213 = vmatprep.subr.mxu0 0.0
    %3214 = vmatpush2.msra.mxu0 0.0
    %3215 = vmatprep.subr.mxu0 0.0
    %3216 = vmatpush2.msra.mxu0 0.0
    %3217 = vmatprep.subr.mxu0 0.0
    %3218 = vmatpush2.msra.mxu0 0.0
    %3219 = vmatprep.subr.mxu0 0.0
    %3220 = vmatpush2.msra.mxu0 0.0
    %3221 = vmatprep.subr.mxu0 0.0
    %3222 = vmatpush2.msra.mxu0 0.0
    %3223 = vmatprep.subr.mxu0 0.0
    %3224 = vmatpush2.msra.mxu0 0.0
    %3225 = vmatprep.subr.mxu0 0.0
    %3226 = vmatpush2.msra.mxu0 0.0
    %3227 = vmatprep.subr.mxu0 0.0
    %3228 = vmatpush2.msra.mxu0 0.0
    %3229 = vmatprep.subr.mxu0 0.0
    %3230 = vmatpush2.msra.mxu0 0.0
    %3231 = vmatprep.subr.mxu0 0.0
    %3232 = vmatpush2.msra.mxu0 0.0
    %3233 = vmatprep.subr.mxu0 0.0
    %3234 = vmatpush2.msra.mxu0 0.0
    %3235 = vmatprep.subr.mxu0 0.0
    %3236 = vmatpush2.msra.mxu0 0.0
    %3237 = vmatprep.subr.mxu0 0.0
    %3238 = vmatpush2.msra.mxu0 0.0
    %3239 = vmatprep.subr.mxu0 0.0
    %3240 = vmatpush2.msra.mxu0 0.0
    %3241 = vmatprep.subr.mxu0 0.0
    %3242 = vmatpush2.msra.mxu0 0.0
    %3243 = vmatprep.subr.mxu0 0.0
    %3244 = vmatpush2.msra.mxu0 0.0
    %3245 = vmatprep.mubr.f32.mxu0 0.0
    %3246 = vmatmul.mubr.f32.gmra.mxu0 %v3167
    %v3247 = vpop.f32.mrf.mxu0
    %v3248 = vadd.f32 %v3164, %v3247
    %v3249 = vpop.f32.mrf.mxu0
    %v3250 = vadd.f32 %v3164, %v3249
    %3251 = vdwg.mxu0
    %3252 = vmatprep.subr.mxu0 0.0
    %3253 = vmatpush1.msra.mxu0 0.0
    %3254 = vmatprep.subr.mxu0 0.0
    %3255 = vmatpush1.msra.mxu0 0.0
    %3256 = vmatprep.subr.mxu0 0.0
    %3257 = vmatpush1.msra.mxu0 0.0
    %3258 = vmatprep.subr.mxu0 0.0
    %3259 = vmatpush1.msra.mxu0 0.0
    %3260 = vmatprep.subr.mxu0 0.0
    %3261 = vmatpush1.msra.mxu0 0.0
    %3262 = vmatprep.subr.mxu0 0.0
    %3263 = vmatpush1.msra.mxu0 0.0
    %3264 = vmatprep.subr.mxu0 0.0
    %3265 = vmatpush1.msra.mxu0 0.0
    %3266 = vmatprep.subr.mxu0 0.0
    %3267 = vmatpush1.msra.mxu0 0.0
    %3268 = vmatprep.subr.mxu0 0.0
    %3269 = vmatpush1.msra.mxu0 0.0
    %3270 = vmatprep.subr.mxu0 %v3179
    %3271 = vmatpush1.msra.mxu0 %v3176
    %3272 = vmatprep.subr.mxu0 %v3160
    %3273 = vmatpush1.msra.mxu0 %v3159
    %3274 = vmatprep.subr.mxu0 %v3156
    %3275 = vmatpush1.msra.mxu0 %v3155
    %3276 = vmatprep.subr.mxu0 %v3152
    %3277 = vmatpush1.msra.mxu0 %v3151
    %3278 = vmatprep.subr.mxu0 %v3148
    %3279 = vmatpush1.msra.mxu0 %v3147
    %3280 = vmatprep.subr.mxu0 %v3144
    %3281 = vmatpush1.msra.mxu0 %v3143
    %3282 = vmatprep.subr.mxu0 %v3140
    %3283 = vmatpush1.msra.mxu0 %v3139
    %3284 = vmatprep.subr.mxu0 0.0
    %3285 = vmatpush2.msra.mxu0 0.0
    %3286 = vmatprep.subr.mxu0 0.0
    %3287 = vmatpush2.msra.mxu0 0.0
    %3288 = vmatprep.subr.mxu0 0.0
    %3289 = vmatpush2.msra.mxu0 0.0
    %3290 = vmatprep.subr.mxu0 0.0
    %3291 = vmatpush2.msra.mxu0 0.0
    %3292 = vmatprep.subr.mxu0 0.0
    %3293 = vmatpush2.msra.mxu0 0.0
    %3294 = vmatprep.subr.mxu0 0.0
    %3295 = vmatpush2.msra.mxu0 0.0
    %3296 = vmatprep.subr.mxu0 0.0
    %3297 = vmatpush2.msra.mxu0 0.0
    %3298 = vmatprep.subr.mxu0 0.0
    %3299 = vmatpush2.msra.mxu0 0.0
    %3300 = vmatprep.subr.mxu0 0.0
    %3301 = vmatpush2.msra.mxu0 0.0
    %3302 = vmatprep.subr.mxu0 0.0
    %3303 = vmatpush2.msra.mxu0 0.0
    %3304 = vmatprep.subr.mxu0 0.0
    %3305 = vmatpush2.msra.mxu0 0.0
    %3306 = vmatprep.subr.mxu0 0.0
    %3307 = vmatpush2.msra.mxu0 0.0
    %3308 = vmatprep.subr.mxu0 0.0
    %3309 = vmatpush2.msra.mxu0 0.0
    %3310 = vmatprep.subr.mxu0 0.0
    %3311 = vmatpush2.msra.mxu0 0.0
    %3312 = vmatprep.subr.mxu0 0.0
    %3313 = vmatpush2.msra.mxu0 0.0
    %3314 = vmatprep.subr.mxu0 0.0
    %3315 = vmatpush2.msra.mxu0 0.0
    %3316 = vmatprep.mubr.f32.mxu0 0.0
    %3317 = vmatmul.mubr.f32.gmra.mxu0 %v3167
    %v3318 = vpop.f32.mrf.mxu0
    %v3319 = vadd.f32 %v3164, %v3318
    %v3320 = vpop.f32.mrf.mxu0
    %v3321 = vadd.f32 %v3164, %v3320
    %3322 = vdwg.mxu0
    %v3323 = vld [vmem:[#allocation15] sm:$0x3f]
    %v3324 = vld [vmem:[%s13] sm:$0x3f]
    %3325 = vrot.lane.b32.xlu0 %v3248, 17
    %v3326 = vpop.permute.xlu0 %3325
    %3327 = vrot.lane.b32.xlu0 %v3250, 17
    %v3328 = vpop.permute.xlu0 %3327
    %3329 = vrot.lane.b32.xlu0 %v3319, 17
    %v3330 = vpop.permute.xlu0 %3329
    %3331 = vrot.lane.b32.xlu0 %v3321, 17
    %v3332 = vpop.permute.xlu0 %3331
    %v3333 = vsel %vm181, %v3330, %v3332
    %v3334 = vsel %vm181, %v3328, %v3330
    %v3335 = vsel %vm181, %v3326, %v3328
    %v3336 = vsel %vm181, %v3332, %v3326
    %v3337 = vmul.f32 %v3336, %v189
    %v3338 = vmul.f32 %v3335, %v193
    %v3339 = vmul.f32 %v3334, %v197
    %v3340 = vmul.f32 %v3333, %v201
    %3341 = vrot.lane.b32.xlu0 %v3248, 16
    %v3342 = vpop.permute.xlu0 %3341
    %3343 = vrot.lane.b32.xlu0 %v3250, 16
    %v3344 = vpop.permute.xlu0 %3343
    %3345 = vrot.lane.b32.xlu0 %v3319, 16
    %v3346 = vpop.permute.xlu0 %3345
    %3347 = vrot.lane.b32.xlu0 %v3321, 16
    %v3348 = vpop.permute.xlu0 %3347
    %v3349 = vsel %vm214, %v3346, %v3348
    %v3350 = vsel %vm214, %v3344, %v3346
    %v3351 = vsel %vm214, %v3342, %v3344
    %v3352 = vsel %vm214, %v3348, %v3342
    %v3353 = vmul.f32 %v3352, %v222
    %v3354 = vmul.f32 %v3351, %v226
    %v3355 = vmul.f32 %v3350, %v230
    %v3356 = vmul.f32 %v3349, %v234
    %3357 = vrot.lane.b32.xlu0 %v3248, 15
    %v3358 = vpop.permute.xlu0 %3357
    %3359 = vrot.lane.b32.xlu0 %v3250, 15
    %v3360 = vpop.permute.xlu0 %3359
    %3361 = vrot.lane.b32.xlu0 %v3319, 15
    %v3362 = vpop.permute.xlu0 %3361
    %3363 = vrot.lane.b32.xlu0 %v3321, 15
    %v3364 = vpop.permute.xlu0 %3363
    %v3365 = vsel %vm247, %v3362, %v3364
    %v3366 = vsel %vm247, %v3360, %v3362
    %v3367 = vsel %vm247, %v3358, %v3360
    %v3368 = vsel %vm247, %v3364, %v3358
    %v3369 = vmul.f32 %v3368, %v255
    %v3370 = vmul.f32 %v3367, %v259
    %v3371 = vmul.f32 %v3366, %v263
    %v3372 = vmul.f32 %v3365, %v267
    %3373 = vrot.lane.b32.xlu0 %v3248, 1
    %v3374 = vpop.permute.xlu0 %3373
    %3375 = vrot.lane.b32.xlu0 %v3250, 1
    %v3376 = vpop.permute.xlu0 %3375
    %3377 = vrot.lane.b32.xlu0 %v3319, 1
    %v3378 = vpop.permute.xlu0 %3377
    %3379 = vrot.lane.b32.xlu0 %v3321, 1
    %v3380 = vpop.permute.xlu0 %3379
    %v3381 = vsel %vm280, %v3378, %v3380
    %v3382 = vsel %vm280, %v3376, %v3378
    %v3383 = vsel %vm280, %v3374, %v3376
    %v3384 = vsel %vm280, %v3380, %v3374
    %v3385 = vmul.f32 %v3384, %v288
    %v3386 = vmul.f32 %v3383, %v292
    %v3387 = vmul.f32 %v3382, %v296
    %v3388 = vmul.f32 %v3381, %v300
    %3389 = vrot.lane.b32.xlu0 %v3248, 127
    %v3390 = vpop.permute.xlu0 %3389
    %3391 = vrot.lane.b32.xlu0 %v3250, 127
    %v3392 = vpop.permute.xlu0 %3391
    %3393 = vrot.lane.b32.xlu0 %v3319, 127
    %v3394 = vpop.permute.xlu0 %3393
    %3395 = vrot.lane.b32.xlu0 %v3321, 127
    %v3396 = vpop.permute.xlu0 %3395
    %v3397 = vsel %vm313, %v3394, %v3396
    %v3398 = vsel %vm313, %v3392, %v3394
    %v3399 = vsel %vm313, %v3390, %v3392
    %v3400 = vsel %vm313, %v3396, %v3390
    %v3401 = vmul.f32 %v3399, %v321
    %v3402 = vmul.f32 %v3398, %v325
    %v3403 = vmul.f32 %v3397, %v329
    %v3404 = vmul.f32 %v3400, %v333
    %3405 = vrot.lane.b32.xlu0 %v3248, 113
    %v3406 = vpop.permute.xlu0 %3405
    %3407 = vrot.lane.b32.xlu0 %v3250, 113
    %v3408 = vpop.permute.xlu0 %3407
    %3409 = vrot.lane.b32.xlu0 %v3319, 113
    %v3410 = vpop.permute.xlu0 %3409
    %3411 = vrot.lane.b32.xlu0 %v3321, 113
    %v3412 = vpop.permute.xlu0 %3411
    %v3413 = vsel %vm346, %v3410, %v3412
    %v3414 = vsel %vm346, %v3408, %v3410
    %v3415 = vsel %vm346, %v3406, %v3408
    %v3416 = vsel %vm346, %v3412, %v3406
    %v3417 = vmul.f32 %v3415, %v354
    %v3418 = vmul.f32 %v3414, %v358
    %v3419 = vmul.f32 %v3413, %v362
    %v3420 = vmul.f32 %v3416, %v366
    %3421 = vrot.lane.b32.xlu0 %v3248, 112
    %v3422 = vpop.permute.xlu0 %3421
    %3423 = vrot.lane.b32.xlu0 %v3250, 112
    %v3424 = vpop.permute.xlu0 %3423
    %3425 = vrot.lane.b32.xlu0 %v3319, 112
    %v3426 = vpop.permute.xlu0 %3425
    %3427 = vrot.lane.b32.xlu0 %v3321, 112
    %v3428 = vpop.permute.xlu0 %3427
    %v3429 = vsel %vm379, %v3426, %v3428
    %v3430 = vsel %vm379, %v3424, %v3426
    %v3431 = vsel %vm379, %v3422, %v3424
    %v3432 = vsel %vm379, %v3428, %v3422
    %v3433 = vmul.f32 %v3431, %v387
    %v3434 = vmul.f32 %v3430, %v391
    %v3435 = vmul.f32 %v3429, %v395
    %v3436 = vmul.f32 %v3432, %v399
    %3437 = vrot.lane.b32.xlu0 %v3248, 111
    %v3438 = vpop.permute.xlu0 %3437
    %3439 = vrot.lane.b32.xlu0 %v3250, 111
    %v3440 = vpop.permute.xlu0 %3439
    %3441 = vrot.lane.b32.xlu0 %v3319, 111
    %v3442 = vpop.permute.xlu0 %3441
    %3443 = vrot.lane.b32.xlu0 %v3321, 111
    %v3444 = vpop.permute.xlu0 %3443
    %v3445 = vsel %vm412, %v3442, %v3444
    %v3446 = vsel %vm412, %v3440, %v3442
    %v3447 = vsel %vm412, %v3438, %v3440
    %v3448 = vsel %vm412, %v3444, %v3438
    %v3449 = vmul.f32 %v3447, %v420
    %v3450 = vmul.f32 %v3446, %v424
    %v3451 = vmul.f32 %v3445, %v428
    %v3452 = vmul.f32 %v3448, %v432
    %v3457 = vrot.slane %v3353, 2
    %v3458 = vrot.slane %v3354, 2
    %v3459 = vrot.slane %v3355, 2
    %v3460 = vrot.slane %v3356, 2
    %v3469 = vrot.slane %v3369, 4
    %v3470 = vrot.slane %v3370, 4
    %v3471 = vrot.slane %v3371, 4
    %v3472 = vrot.slane %v3372, 4
    %v3481 = vrot.slane %v3385, 6
    %v3482 = vrot.slane %v3386, 6
    %v3483 = vrot.slane %v3387, 6
    %v3484 = vrot.slane %v3388, 6
    %v3493 = vrot.slane %v3401, 2
    %v3494 = vrot.slane %v3402, 2
    %v3495 = vrot.slane %v3403, 2
    %v3496 = vrot.slane %v3404, 2
    %v3505 = vrot.slane %v3417, 4
    %v3506 = vrot.slane %v3418, 4
    %v3507 = vrot.slane %v3419, 4
    %v3508 = vrot.slane %v3420, 4
    %v3517 = vrot.slane %v3433, 6
    %v3518 = vrot.slane %v3434, 6
    %v3519 = vrot.slane %v3435, 6
    %v3520 = vrot.slane %v3436, 6
    %v3525 = vsel %vm509, %v3337, %v3457
    %v3526 = vsel %vm509, %v3338, %v3458
    %v3527 = vsel %vm509, %v3339, %v3459
    %v3528 = vsel %vm509, %v3340, %v3460
    %v3529 = vsel %vm514, %v3457, %v3469
    %v3530 = vsel %vm514, %v3458, %v3470
    %v3531 = vsel %vm514, %v3459, %v3471
    %v3532 = vsel %vm514, %v3460, %v3472
    %v3533 = vsel %vm519, %v3469, %v3481
    %v3534 = vsel %vm519, %v3470, %v3482
    %v3535 = vsel %vm519, %v3471, %v3483
    %v3536 = vsel %vm519, %v3472, %v3484
    %v3537 = vsel %vm509, %v3248, %v3493
    %v3538 = vsel %vm509, %v3250, %v3494
    %v3539 = vsel %vm509, %v3319, %v3495
    %v3540 = vsel %vm509, %v3321, %v3496
    %v3541 = vsel %vm514, %v3493, %v3505
    %v3542 = vsel %vm514, %v3494, %v3506
    %v3543 = vsel %vm514, %v3495, %v3507
    %v3544 = vsel %vm514, %v3496, %v3508
    %v3545 = vsel %vm519, %v3505, %v3517
    %v3546 = vsel %vm519, %v3506, %v3518
    %v3547 = vsel %vm519, %v3507, %v3519
    %v3548 = vsel %vm519, %v3508, %v3520
    %3550 = vset.pattern.permute.xlu0 0
    %3551 = vperm.xlu0 %3550, %v3324
    %v3552 = vpop.permute.xlu0 %3551
    %v3555 = vsel %vm541, %v3323, 0
    %v3558 = vsel %vm509, %v3449, 0
    %v3561 = vsel %vm509, %v3450, 0
    %v3564 = vsel %vm509, %v3451, 0
    %v3567 = vsel %vm509, %v3452, 0
    %3569 = vmatprep.subr.mxu0 0.0
    %3570 = vmatpush1.msra.mxu0 0.0
    %3571 = vmatprep.subr.mxu0 0.0
    %3572 = vmatpush1.msra.mxu0 0.0
    %3573 = vmatprep.subr.mxu0 0.0
    %3574 = vmatpush1.msra.mxu0 0.0
    %3575 = vmatprep.subr.mxu0 0.0
    %3576 = vmatpush1.msra.mxu0 0.0
    %3577 = vmatprep.subr.mxu0 0.0
    %3578 = vmatpush1.msra.mxu0 0.0
    %3579 = vmatprep.subr.mxu0 0.0
    %3580 = vmatpush1.msra.mxu0 0.0
    %3581 = vmatprep.subr.mxu0 0.0
    %3582 = vmatpush1.msra.mxu0 0.0
    %3583 = vmatprep.subr.mxu0 0.0
    %3584 = vmatpush1.msra.mxu0 0.0
    %3585 = vmatprep.subr.mxu0 0.0
    %3586 = vmatpush1.msra.mxu0 0.0
    %3587 = vmatprep.subr.mxu0 %v3561
    %3588 = vmatpush1.msra.mxu0 %v3558
    %3589 = vmatprep.subr.mxu0 %v3546
    %3590 = vmatpush1.msra.mxu0 %v3545
    %3591 = vmatprep.subr.mxu0 %v3542
    %3592 = vmatpush1.msra.mxu0 %v3541
    %3593 = vmatprep.subr.mxu0 %v3538
    %3594 = vmatpush1.msra.mxu0 %v3537
    %3595 = vmatprep.subr.mxu0 %v3534
    %3596 = vmatpush1.msra.mxu0 %v3533
    %3597 = vmatprep.subr.mxu0 %v3530
    %3598 = vmatpush1.msra.mxu0 %v3529
    %3599 = vmatprep.subr.mxu0 %v3526
    %3600 = vmatpush1.msra.mxu0 %v3525
    %3601 = vmatprep.subr.mxu0 0.0
    %3602 = vmatpush2.msra.mxu0 0.0
    %3603 = vmatprep.subr.mxu0 0.0
    %3604 = vmatpush2.msra.mxu0 0.0
    %3605 = vmatprep.subr.mxu0 0.0
    %3606 = vmatpush2.msra.mxu0 0.0
    %3607 = vmatprep.subr.mxu0 0.0
    %3608 = vmatpush2.msra.mxu0 0.0
    %3609 = vmatprep.subr.mxu0 0.0
    %3610 = vmatpush2.msra.mxu0 0.0
    %3611 = vmatprep.subr.mxu0 0.0
    %3612 = vmatpush2.msra.mxu0 0.0
    %3613 = vmatprep.subr.mxu0 0.0
    %3614 = vmatpush2.msra.mxu0 0.0
    %3615 = vmatprep.subr.mxu0 0.0
    %3616 = vmatpush2.msra.mxu0 0.0
    %3617 = vmatprep.subr.mxu0 0.0
    %3618 = vmatpush2.msra.mxu0 0.0
    %3619 = vmatprep.subr.mxu0 0.0
    %3620 = vmatpush2.msra.mxu0 0.0
    %3621 = vmatprep.subr.mxu0 0.0
    %3622 = vmatpush2.msra.mxu0 0.0
    %3623 = vmatprep.subr.mxu0 0.0
    %3624 = vmatpush2.msra.mxu0 0.0
    %3625 = vmatprep.subr.mxu0 0.0
    %3626 = vmatpush2.msra.mxu0 0.0
    %3627 = vmatprep.subr.mxu0 0.0
    %3628 = vmatpush2.msra.mxu0 0.0
    %3629 = vmatprep.subr.mxu0 0.0
    %3630 = vmatpush2.msra.mxu0 0.0
    %3631 = vmatprep.subr.mxu0 0.0
    %3632 = vmatpush2.msra.mxu0 0.0
    %3633 = vmatprep.mubr.f32.mxu0 0.0
    %3634 = vmatmul.mubr.f32.gmra.mxu0 %v3555
    %v3635 = vpop.f32.mrf.mxu0
    %v3636 = vadd.f32 %v3552, %v3635
    %v3637 = vpop.f32.mrf.mxu0
    %v3638 = vadd.f32 %v3552, %v3637
    %3639 = vdwg.mxu0
    %3640 = vmatprep.subr.mxu0 0.0
    %3641 = vmatpush1.msra.mxu0 0.0
    %3642 = vmatprep.subr.mxu0 0.0
    %3643 = vmatpush1.msra.mxu0 0.0
    %3644 = vmatprep.subr.mxu0 0.0
    %3645 = vmatpush1.msra.mxu0 0.0
    %3646 = vmatprep.subr.mxu0 0.0
    %3647 = vmatpush1.msra.mxu0 0.0
    %3648 = vmatprep.subr.mxu0 0.0
    %3649 = vmatpush1.msra.mxu0 0.0
    %3650 = vmatprep.subr.mxu0 0.0
    %3651 = vmatpush1.msra.mxu0 0.0
    %3652 = vmatprep.subr.mxu0 0.0
    %3653 = vmatpush1.msra.mxu0 0.0
    %3654 = vmatprep.subr.mxu0 0.0
    %3655 = vmatpush1.msra.mxu0 0.0
    %3656 = vmatprep.subr.mxu0 0.0
    %3657 = vmatpush1.msra.mxu0 0.0
    %3658 = vmatprep.subr.mxu0 %v3567
    %3659 = vmatpush1.msra.mxu0 %v3564
    %3660 = vmatprep.subr.mxu0 %v3548
    %3661 = vmatpush1.msra.mxu0 %v3547
    %3662 = vmatprep.subr.mxu0 %v3544
    %3663 = vmatpush1.msra.mxu0 %v3543
    %3664 = vmatprep.subr.mxu0 %v3540
    %3665 = vmatpush1.msra.mxu0 %v3539
    %3666 = vmatprep.subr.mxu0 %v3536
    %3667 = vmatpush1.msra.mxu0 %v3535
    %3668 = vmatprep.subr.mxu0 %v3532
    %3669 = vmatpush1.msra.mxu0 %v3531
    %3670 = vmatprep.subr.mxu0 %v3528
    %3671 = vmatpush1.msra.mxu0 %v3527
    %3672 = vmatprep.subr.mxu0 0.0
    %3673 = vmatpush2.msra.mxu0 0.0
    %3674 = vmatprep.subr.mxu0 0.0
    %3675 = vmatpush2.msra.mxu0 0.0
    %3676 = vmatprep.subr.mxu0 0.0
    %3677 = vmatpush2.msra.mxu0 0.0
    %3678 = vmatprep.subr.mxu0 0.0
    %3679 = vmatpush2.msra.mxu0 0.0
    %3680 = vmatprep.subr.mxu0 0.0
    %3681 = vmatpush2.msra.mxu0 0.0
    %3682 = vmatprep.subr.mxu0 0.0
    %3683 = vmatpush2.msra.mxu0 0.0
    %3684 = vmatprep.subr.mxu0 0.0
    %3685 = vmatpush2.msra.mxu0 0.0
    %3686 = vmatprep.subr.mxu0 0.0
    %3687 = vmatpush2.msra.mxu0 0.0
    %3688 = vmatprep.subr.mxu0 0.0
    %3689 = vmatpush2.msra.mxu0 0.0
    %3690 = vmatprep.subr.mxu0 0.0
    %3691 = vmatpush2.msra.mxu0 0.0
    %3692 = vmatprep.subr.mxu0 0.0
    %3693 = vmatpush2.msra.mxu0 0.0
    %3694 = vmatprep.subr.mxu0 0.0
    %3695 = vmatpush2.msra.mxu0 0.0
    %3696 = vmatprep.subr.mxu0 0.0
    %3697 = vmatpush2.msra.mxu0 0.0
    %3698 = vmatprep.subr.mxu0 0.0
    %3699 = vmatpush2.msra.mxu0 0.0
    %3700 = vmatprep.subr.mxu0 0.0
    %3701 = vmatpush2.msra.mxu0 0.0
    %3702 = vmatprep.subr.mxu0 0.0
    %3703 = vmatpush2.msra.mxu0 0.0
    %3704 = vmatprep.mubr.f32.mxu0 0.0
    %3705 = vmatmul.mubr.f32.gmra.mxu0 %v3555
    %v3706 = vpop.f32.mrf.mxu0
    %v3707 = vadd.f32 %v3552, %v3706
    %v3708 = vpop.f32.mrf.mxu0
    %v3709 = vadd.f32 %v3552, %v3708
    %3710 = vdwg.mxu0
    %3711 = vst [vmem:[%s14] sm:$0x3f] %v3636
    %3712 = vst [vmem:[%s14 + $0x8] sm:$0x3f] %v3638
    %3713 = vst [vmem:[%s14 + $0x10] sm:$0x3f] %v3707
    %3714 = vst [vmem:[%s14 + $0x18] sm:$0x3f] %v3709
    // Predicated region
    $region94: #{net_forward.1} parent=1 // pred_check
      _
    $region95: #{net_forward.1} parent=1 // pred_check_branch
      %3716 = sbr.rel (0) target = $region97
    $region96: #{net_forward.1} parent=1 // pred_region
      _
    $region97: #{net_forward.1} parent=1 // pred_fallthru
      _
    // Predicated region
    $region98: #{net_forward.1} parent=1 // pred_check
      _
    $region99: #{net_forward.1} parent=1 // pred_check_branch
      %3718 = sbr.rel (0) target = $region101
    $region100: #{net_forward.1} parent=1 // pred_region
      _
    $region101: #{net_forward.1} parent=1 // pred_fallthru
      _
    %3719 = vsyncpa [#allocation3], 1
    %3720 = vsyncpa [#allocation5], 1
    %3721 = vsyncpa [#allocation8], 1
    %3722 = vsyncpa [#allocation11], 1
    %3723 = vsyncpa [#allocation14], 1

</llo_original>
